<compile_context>
chip_gen: v7x
topology: tpu7x:2x2x1
jax: 0.10.0
libtpu: 0.0.40
codegen_flags: <defaults>
</compile_context>

<pallas_src>
import functools

import numpy as np
import jax
import jax.numpy as jnp
from jax import lax
from jax.experimental import pallas as pl
from jax.experimental.pallas import tpu as pltpu

C = 24              # dim_in = dim_out inside ASPP
RAW_IN = 1000       # channels fed to conversion_layer
RAW_PAD = 1024      # zero-padded channel count (bf16 sublane / MXU-K friendly)
RATE = 1
DILATIONS = (4 * RATE, 8 * RATE, 12 * RATE, 16 * RATE)
PAD = max(DILATIONS)          # zero padding == dilation for each 3x3 branch
BN_EPS = 1e-5


# ----------------------------- Pallas kernel ------------------------------- #
def _aspp_kernel(H, W, PADL, NB, tap_plan,
                 x_ref, wmask_ref, wcv_ref, bcv_ref,
                 w1_ref, w2_ref, w3_ref, w4_ref, w5_ref,
                 t2_ref, t3_ref, t4_ref, t5_ref,
                 w6_ref, t6_ref,
                 wcm_ref, wcg_ref, tc_ref,
                 out_ref, featp_ref):
    HW = H * W

    # Zero the halo lanes of the padded-feature scratch.  Done every grid step
    # (a tiny 2*PADL*C bf16 store) rather than under pl.when(program_id==0) so
    # the kernel stays correct when the "parallel" batch axis is split across
    # TensorCores (each core has its own scratch and may never run step 0).
    featp_ref[:, :PADL] = jnp.zeros((C, PADL), jnp.bfloat16)
    featp_ref[:, PADL + HW:] = jnp.zeros((C, PADL), jnp.bfloat16)

    w_br = (w2_ref, w3_ref, w4_ref, w5_ref)
    t_br = (t2_ref, t3_ref, t4_ref, t5_ref)

    for n in range(NB):
        # conversion_layer: 1x1 conv (1024 -> 24) as a bf16 matmul, f32 accum.
        feat = jnp.dot(wcv_ref[...], x_ref[n],
                       preferred_element_type=jnp.float32) + bcv_ref[...]   # (C, HW) f32
        gmean = jnp.mean(feat, axis=1, keepdims=True)                       # (C, 1) f32
        feat_bf = feat.astype(jnp.bfloat16)
        featp_ref[:, PADL:PADL + HW] = feat_bf     # scratch-resident padded feat

        # branch1 (1x1 conv, BN scale folded into w1) + its conv_cat term.
        b = jnp.maximum(
            jnp.dot(w1_ref[...], feat_bf, preferred_element_type=jnp.float32), 0.0)
        pre = jnp.dot(wcm_ref[0], b, preferred_element_type=jnp.float32)

        # branches 2-5: dilated 3x3 convs as per-tap accumulating
        # (24,24)@(24,HW) bf16 matmuls -- no materialized im2col buffer.
        # Vertical out-of-bounds lands in the zero halo; horizontal wrap is
        # removed by the f32 lane mask applied to the f32 partial product.
        for bi in range(4):
            acc = None
            for (k, off, mrow) in tap_plan[bi]:
                tap = (feat_bf if off == 0
                       else featp_ref[:, PADL + off:PADL + off + HW])
                part = jnp.dot(w_br[bi][k], tap, preferred_element_type=jnp.float32)
                if mrow is not None:
                    part = part * wmask_ref[mrow:mrow + 1, :]
                acc = part if acc is None else acc + part
            b = jnp.maximum(acc + t_br[bi][...], 0.0)
            # progressive conv_cat: consume b right away, no (5C, HW) concat.
            pre = pre + jnp.dot(wcm_ref[bi + 1], b, preferred_element_type=jnp.float32)

        # branch6: global average pool -> 1x1 conv + BN + ReLU.  The bilinear
        # upsample of a 1x1 map (align_corners=True) is a broadcast, so it is
        # folded in as a per-image bias column through its conv_cat block.
        g = jnp.maximum(
            jnp.dot(w6_ref[...], gmean, preferred_element_type=jnp.float32)
            + t6_ref[...], 0.0)                                              # (C, 1)
        pre = pre + jnp.dot(wcg_ref[...], g, preferred_element_type=jnp.float32)

        out_ref[n] = jnp.maximum(pre + tc_ref[...], 0.0)


# ------------------------------- wrapper ----------------------------------- #
def _make_wmasks(H, W):
    """Row 2*i   : valid-lane mask for horizontal shift dw = -DILATIONS[i]
       Row 2*i+1 : valid-lane mask for horizontal shift dw = +DILATIONS[i]"""
    HW = H * W
    w_idx = np.arange(HW, dtype=np.int64) % W
    rows = []
    for d in DILATIONS:
        for dw in (-d, d):
            valid = (w_idx + dw >= 0) & (w_idx + dw < W)
            rows.append(valid.astype(np.float32))
    return jnp.asarray(np.stack(rows, axis=0))          # (2*len(DILATIONS), HW)


def _make_tap_plan(H, W):
    """Static per-branch tap list: (weight index k, lane offset, mask row|None).
    Taps whose receptive field is entirely out of bounds (d >= H / d >= W) are
    dropped at trace time -- their contribution is exactly zero."""
    plans = []
    for di, d in enumerate(DILATIONS):
        plan = []
        for kh in (-1, 0, 1):
            for kw in (-1, 0, 1):
                k = (kh + 1) * 3 + (kw + 1)
                if kh == 0 and kw == 0:
                    plan.append((k, 0, None))
                    continue
                if (kh != 0 and d >= H) or (kw != 0 and d >= W):
                    continue
                mrow = None if kw == 0 else 2 * di + (0 if kw < 0 else 1)
                plan.append((k, kh * d * W + kw * d, mrow))
        plans.append(tuple(plan))
    return tuple(plans)


def _pick_nb(B, HW):
    """Images per grid step: amortize per-step overhead at small H*W while
    keeping >= 2 grid steps (both v7x TensorCores busy) and a bounded x-block
    VMEM footprint (double-buffered)."""
    best = 1
    for nb in (2, 4, 8):
        if B % nb == 0 and B // nb >= 2 and nb * RAW_PAD * HW * 2 <= 4 * 1024 * 1024:
            best = nb
    return best


def _vmem_limit_bytes():
    # Generation-aware budget: ~75% of physical VMEM (v5e/v6e 128 MiB -> 96 MiB,
    # v7x 64 MiB -> 48 MiB).  Fall back to the everywhere-safe 48 MiB.
    try:
        cap = int(pltpu.get_tpu_info().vmem_capacity_bytes)
        if cap > 0:
            return min(cap * 3 // 4, 100 * 1024 * 1024)
    except Exception:
        pass
    return 48 * 1024 * 1024


def aspp_pallas(x_nchw, kparams):
    B, craw, H, W = x_nchw.shape
    assert craw == RAW_IN
    HW = H * W
    # zero halo covering PAD rows of W pixels plus PAD columns, lane-tile aligned
    PADL = ((PAD * (W + 1) + 127) // 128) * 128
    NB = _pick_nb(B, HW)

    # NCHW -> (B, Cin, H*W) is a pure reshape (no transpose); channels are
    # zero-padded 1000 -> 1024 for clean bf16 (16,128) tiles and MXU-K
    # alignment; bf16 halves the dominant HBM stream (f32 accumulation).
    x_flat = x_nchw.reshape(B, RAW_IN, HW).astype(jnp.bfloat16)
    x_flat = jnp.pad(x_flat, ((0, 0), (0, RAW_PAD - RAW_IN), (0, 0)))
    wmask = _make_wmasks(H, W)
    tap_plan = _make_tap_plan(H, W)

    args = (x_flat, wmask) + tuple(kparams)

    def _rep(a):                        # small operands: same block every step
        return pl.BlockSpec(a.shape, lambda b, nd=a.ndim: (0,) * nd)

    in_specs = ([pl.BlockSpec((NB, RAW_PAD, HW), lambda b: (b, 0, 0))]
                + [_rep(a) for a in args[1:]])

    # TODO(synk): for very large H*W on v7x (64 MiB VMEM), add a K-split
    #             "arbitrary" grid axis over the 1024 input channels and
    #             accumulate `feat` in scratch before running the branches.
    # TODO(synk): for B == 1 on v7x, a halo'd spatial split ("parallel" second
    #             grid axis over H*W) would keep both TensorCores busy.
    out_flat = pl.pallas_call(
        functools.partial(_aspp_kernel, H, W, PADL, NB, tap_plan),
        out_shape=jax.ShapeDtypeStruct((B, C, HW), jnp.float32),
        grid=(B // NB,),
        in_specs=in_specs,
        out_specs=pl.BlockSpec((NB, C, HW), lambda b: (b, 0, 0)),
        scratch_shapes=[pltpu.VMEM((C, HW + 2 * PADL), jnp.bfloat16)],
        compiler_params=pltpu.CompilerParams(
            dimension_semantics=("parallel",),       # megacore: shard batch
            vmem_limit_bytes=_vmem_limit_bytes()),
    )(*args)
    return out_flat.reshape(B, C, H, W)              # already NCHW


# ----------------------- parameters (deterministic) ------------------------ #
def make_params(key):
    keys = iter(jax.random.split(key, 16))
    nrm = lambda shape: jax.random.normal(next(keys), shape, jnp.float32) * 0.05
    P = {}
    P['w_conv'], P['b_conv'] = nrm((C, RAW_IN, 1, 1)), nrm((C,))   # conversion_layer
    P['w1'] = nrm((C, C, 1, 1))                                    # branch1 (no bias)
    P['w2'], P['b2'] = nrm((C, C, 3, 3)), nrm((C,))
    P['w3'], P['b3'] = nrm((C, C, 3, 3)), nrm((C,))
    P['w4'], P['b4'] = nrm((C, C, 3, 3)), nrm((C,))
    P['w5'], P['b5'] = nrm((C, C, 3, 3)), nrm((C,))
    P['w6'], P['b6'] = nrm((C, C, 1, 1)), nrm((C,))                # branch6
    P['wc'], P['bc'] = nrm((C, 6 * C, 1, 1)), nrm((C,))            # conv_cat
    return P


def kernel_params(P):
    """Fold PyTorch OIHW weights + biases + inference-mode BN into matmul form
    for the channels-in-sublanes layout.  The BN scale is folded directly into
    the conv weights, so the kernel's epilogue is just max(y + shift, 0)."""
    f32, bf16 = jnp.float32, jnp.bfloat16
    s = 1.0 / float(np.sqrt(1.0 + BN_EPS))   # BN: mean=0, var=1, gamma=1, beta=0

    def shift(b):                             # folded bias column (C, 1)
        return (s * b[:, None]).astype(f32)

    def w1x1(w):                              # (O, I, 1, 1) -> (O, I)
        return w[:, :, 0, 0]

    def w3x3(w):                              # (O, I, 3, 3) -> (9, O, I), k = kh*3+kw
        return jnp.transpose(w, (2, 3, 0, 1)).reshape(9, w.shape[0], w.shape[1])

    wcv = jnp.pad(w1x1(P['w_conv']), ((0, 0), (0, RAW_PAD - RAW_IN)))  # 1000->1024
    wc = w1x1(P['wc']) * s                                             # (C, 6C) BN-folded
    wcm = jnp.transpose(wc[:, :5 * C].reshape(C, 5, C), (1, 0, 2))     # (5, C, C)
    wcg = wc[:, 5 * C:]                                                # (C, C) pool block
    return (
        wcv.astype(bf16), P['b_conv'][:, None].astype(f32),
        (w1x1(P['w1']) * s).astype(bf16),
        (w3x3(P['w2']) * s).astype(bf16), (w3x3(P['w3']) * s).astype(bf16),
        (w3x3(P['w4']) * s).astype(bf16), (w3x3(P['w5']) * s).astype(bf16),
        shift(P['b2']), shift(P['b3']), shift(P['b4']), shift(P['b5']),
        (w1x1(P['w6']) * s).astype(f32), shift(P['b6']),
        wcm.astype(f32), wcg.astype(f32), shift(P['bc']),
    )


# --------------------------- pure-JAX reference ----------------------------- #
def _conv(x, w, b, pad, dil):
    y = lax.conv_general_dilated(
        x, w, window_strides=(1, 1),
        padding=[(pad, pad), (pad, pad)],
        rhs_dilation=(dil, dil),
        dimension_numbers=('NCHW', 'OIHW', 'NCHW'),
        precision=lax.Precision.HIGHEST)
    if b is not None:
        y = y + b[None, :, None, None]
    return y


def reference_aspp(x, P):
    s = 1.0 / jnp.sqrt(1.0 + BN_EPS)
    bnr = lambda y: jnp.maximum(y * s, 0.0)
    feat = _conv(x, P['w_conv'], P['b_conv'], 0, 1)
    b1 = bnr(_conv(feat, P['w1'], None, 0, 1))
    b2 = bnr(_conv(feat, P['w2'], P['b2'], DILATIONS[0], DILATIONS[0]))
    b3 = bnr(_conv(feat, P['w3'], P['b3'], DILATIONS[1], DILATIONS[1]))
    b4 = bnr(_conv(feat, P['w4'], P['b4'], DILATIONS[2], DILATIONS[2]))
    b5 = bnr(_conv(feat, P['w5'], P['b5'], DILATIONS[3], DILATIONS[3]))
    g = jnp.mean(feat, axis=(2, 3), keepdims=True)
    g = bnr(_conv(g, P['w6'], P['b6'], 0, 1))
    g = jnp.broadcast_to(g, (x.shape[0], C, x.shape[2], x.shape[3]))
    cat = jnp.concatenate([b1, b2, b3, b4, b5, g], axis=1)
    return bnr(_conv(cat, P['wc'], P['bc'], 0, 1))


# --------------------------------- main ------------------------------------ #
if __name__ == "__main__":
    key = jax.random.PRNGKey(0)
    kx, kp = jax.random.split(key)
    x = jax.random.normal(kx, (2, RAW_IN, 16, 16), jnp.float32)   # NCHW, like PyTorch
    P = make_params(kp)

    out = jax.jit(aspp_pallas)(x, kernel_params(P))
    out = jax.block_until_ready(out)

    ref = reference_aspp(x, P)
    err = float(jnp.max(jnp.abs(out - ref)))
    # bf16 conversion matmul (K=1000) plus bf16 branch-matmul operands (f32
    # accumulation) consume most of this tolerance; structural/halo bugs would
    # produce O(1) errors.
    if out.shape != ref.shape or not (err < 4e-2):
        raise RuntimeError(
            f"ASPP kernel mismatch: shape {out.shape} vs {ref.shape}, max|err|={err}")
    print("KERNEL_OK")
</pallas_src>

<mosaic_0001>
module attributes {stable_mosaic.version = 11 : i64} {
  func.func @_aspp_kernel(%arg0: i32, %arg1: memref<1x1024x256xbf16, #tpu.memory_space<vmem>>, %arg2: memref<8x256xf32, #tpu.memory_space<vmem>>, %arg3: memref<24x1024xbf16, #tpu.memory_space<vmem>>, %arg4: memref<24x1xf32, #tpu.memory_space<vmem>>, %arg5: memref<24x24xbf16, #tpu.memory_space<vmem>>, %arg6: memref<9x24x24xbf16, #tpu.memory_space<vmem>>, %arg7: memref<9x24x24xbf16, #tpu.memory_space<vmem>>, %arg8: memref<9x24x24xbf16, #tpu.memory_space<vmem>>, %arg9: memref<9x24x24xbf16, #tpu.memory_space<vmem>>, %arg10: memref<24x1xf32, #tpu.memory_space<vmem>>, %arg11: memref<24x1xf32, #tpu.memory_space<vmem>>, %arg12: memref<24x1xf32, #tpu.memory_space<vmem>>, %arg13: memref<24x1xf32, #tpu.memory_space<vmem>>, %arg14: memref<24x24xf32, #tpu.memory_space<vmem>>, %arg15: memref<24x1xf32, #tpu.memory_space<vmem>>, %arg16: memref<5x24x24xf32, #tpu.memory_space<vmem>>, %arg17: memref<24x24xf32, #tpu.memory_space<vmem>>, %arg18: memref<24x1xf32, #tpu.memory_space<vmem>>, %arg19: memref<1x24x256xf32, #tpu.memory_space<vmem>>, %arg20: memref<24x1024xbf16, #tpu.memory_space<vmem>>) attributes {dimension_semantics = [#tpu.dimension_semantics<parallel>], iteration_bounds = array<i64: 2>, scalar_prefetch = 0 : i64, scratch_operands = 1 : i64, tpu.core_type = #tpu.core_type<tc>, window_params = [{transform_indices = @transform_0, window_bounds = array<i64: 1, 1024, 256>}, {pipeline_mode = #tpu.pipeline_mode<synchronous>, transform_indices = @transform_1, window_bounds = array<i64: 8, 256>}, {pipeline_mode = #tpu.pipeline_mode<synchronous>, transform_indices = @transform_2, window_bounds = array<i64: 24, 1024>}, {pipeline_mode = #tpu.pipeline_mode<synchronous>, transform_indices = @transform_3, window_bounds = array<i64: 24, 1>}, {pipeline_mode = #tpu.pipeline_mode<synchronous>, transform_indices = @transform_4, window_bounds = array<i64: 24, 24>}, {pipeline_mode = #tpu.pipeline_mode<synchronous>, transform_indices = @transform_5, window_bounds = array<i64: 9, 24, 24>}, {pipeline_mode = #tpu.pipeline_mode<synchronous>, transform_indices = @transform_6, window_bounds = array<i64: 9, 24, 24>}, {pipeline_mode = #tpu.pipeline_mode<synchronous>, transform_indices = @transform_7, window_bounds = array<i64: 9, 24, 24>}, {pipeline_mode = #tpu.pipeline_mode<synchronous>, transform_indices = @transform_8, window_bounds = array<i64: 9, 24, 24>}, {pipeline_mode = #tpu.pipeline_mode<synchronous>, transform_indices = @transform_9, window_bounds = array<i64: 24, 1>}, {pipeline_mode = #tpu.pipeline_mode<synchronous>, transform_indices = @transform_10, window_bounds = array<i64: 24, 1>}, {pipeline_mode = #tpu.pipeline_mode<synchronous>, transform_indices = @transform_11, window_bounds = array<i64: 24, 1>}, {pipeline_mode = #tpu.pipeline_mode<synchronous>, transform_indices = @transform_12, window_bounds = array<i64: 24, 1>}, {pipeline_mode = #tpu.pipeline_mode<synchronous>, transform_indices = @transform_13, window_bounds = array<i64: 24, 24>}, {pipeline_mode = #tpu.pipeline_mode<synchronous>, transform_indices = @transform_14, window_bounds = array<i64: 24, 1>}, {pipeline_mode = #tpu.pipeline_mode<synchronous>, transform_indices = @transform_15, window_bounds = array<i64: 5, 24, 24>}, {pipeline_mode = #tpu.pipeline_mode<synchronous>, transform_indices = @transform_16, window_bounds = array<i64: 24, 24>}, {pipeline_mode = #tpu.pipeline_mode<synchronous>, transform_indices = @transform_17, window_bounds = array<i64: 24, 1>}, {transform_indices = @transform_18, window_bounds = array<i64: 1, 24, 256>}]} {
    %cst = arith.constant 0.000000e+00 : bf16
    %0 = vector.broadcast %cst : bf16 to vector<24x384xbf16>
    %c0 = arith.constant 0 : index
    %c0_0 = arith.constant 0 : index
    %1 = vector.load %arg20[%c0, %c0_0] : memref<24x1024xbf16, #tpu.memory_space<vmem>>, vector<24x384xbf16>
    tpu.vector_store %arg20[%c0, %c0_0], %0 {strides = array<i32>} : memref<24x1024xbf16, #tpu.memory_space<vmem>>, vector<24x384xbf16>,
    %cst_1 = arith.constant 0.000000e+00 : bf16
    %2 = vector.broadcast %cst_1 : bf16 to vector<24x384xbf16>
    %c0_2 = arith.constant 0 : index
    %c640 = arith.constant 640 : index
    %3 = vector.load %arg20[%c0_2, %c640] : memref<24x1024xbf16, #tpu.memory_space<vmem>>, vector<24x384xbf16>
    tpu.vector_store %arg20[%c0_2, %c640], %2 {strides = array<i32>} : memref<24x1024xbf16, #tpu.memory_space<vmem>>, vector<24x384xbf16>,
    %c0_3 = arith.constant 0 : index
    %c0_4 = arith.constant 0 : index
    %4 = vector.load %arg3[%c0_3, %c0_4] : memref<24x1024xbf16, #tpu.memory_space<vmem>>, vector<24x1024xbf16>
    %c0_5 = arith.constant 0 : index
    %c0_6 = arith.constant 0 : index
    %c0_7 = arith.constant 0 : index
    %5 = vector.load %arg1[%c0_5, %c0_6, %c0_7] : memref<1x1024x256xbf16, #tpu.memory_space<vmem>>, vector<1x1024x256xbf16>
    %6 = vector.shape_cast %5 : vector<1x1024x256xbf16> to vector<1024x256xbf16>
    %cst_8 = arith.constant dense<0.000000e+00> : vector<24x256xf32>
    %7 = tpu.matmul %4, %6, %cst_8 {dimension_numbers = #tpu.dot_dimension_numbers<[1], [0], [0], [1], [0, 0, 1, 1], [], []>} : vector<24x1024xbf16>, vector<1024x256xbf16>, vector<24x256xf32> -> vector<24x256xf32>
    %c0_9 = arith.constant 0 : index
    %c0_10 = arith.constant 0 : index
    %8 = vector.load %arg4[%c0_9, %c0_10] : memref<24x1xf32, #tpu.memory_space<vmem>>, vector<24x1xf32>
    %9 = vector.broadcast %8 : vector<24x1xf32> to vector<24x256xf32>
    %10 = arith.addf %7, %9 : vector<24x256xf32>
    %cst_11 = arith.constant dense<0.000000e+00> : vector<24xf32>
    %11 = vector.multi_reduction <add>, %10, %cst_11 [1] : vector<24x256xf32> to vector<24xf32>
    %12 = vector.shape_cast %11 : vector<24xf32> to vector<24x1xf32>
    %cst_12 = arith.constant 2.560000e+02 : f32
    %13 = vector.broadcast %cst_12 : f32 to vector<24x1xf32>
    %14 = arith.divf %12, %13 : vector<24x1xf32>
    %15 = arith.truncf %10 : vector<24x256xf32> to vector<24x256xbf16>
    %c0_13 = arith.constant 0 : index
    %c384 = arith.constant 384 : index
    %16 = vector.load %arg20[%c0_13, %c384] : memref<24x1024xbf16, #tpu.memory_space<vmem>>, vector<24x256xbf16>
    tpu.vector_store %arg20[%c0_13, %c384], %15 {strides = array<i32>} : memref<24x1024xbf16, #tpu.memory_space<vmem>>, vector<24x256xbf16>,
    %c0_14 = arith.constant 0 : index
    %c0_15 = arith.constant 0 : index
    %17 = vector.load %arg5[%c0_14, %c0_15] : memref<24x24xbf16, #tpu.memory_space<vmem>>, vector<24x24xbf16>
    %cst_16 = arith.constant dense<0.000000e+00> : vector<24x256xf32>
    %18 = tpu.matmul %17, %15, %cst_16 {dimension_numbers = #tpu.dot_dimension_numbers<[1], [0], [0], [1], [0, 0, 1, 1], [], []>} : vector<24x24xbf16>, vector<24x256xbf16>, vector<24x256xf32> -> vector<24x256xf32>
    %cst_17 = arith.constant 0.000000e+00 : f32
    %19 = vector.broadcast %cst_17 : f32 to vector<24x256xf32>
    %20 = arith.maximumf %18, %19 : vector<24x256xf32>
    %c0_18 = arith.constant 0 : index
    %c0_19 = arith.constant 0 : index
    %c0_20 = arith.constant 0 : index
    %21 = vector.load %arg16[%c0_18, %c0_19, %c0_20] : memref<5x24x24xf32, #tpu.memory_space<vmem>>, vector<1x24x24xf32>
    %22 = vector.shape_cast %21 : vector<1x24x24xf32> to vector<24x24xf32>
    %cst_21 = arith.constant dense<0.000000e+00> : vector<24x256xf32>
    %23 = tpu.matmul %22, %20, %cst_21 {dimension_numbers = #tpu.dot_dimension_numbers<[1], [0], [0], [1], [0, 0, 1, 1], [], []>} : vector<24x24xf32>, vector<24x256xf32>, vector<24x256xf32> -> vector<24x256xf32>
    %c0_22 = arith.constant 0 : index
    %c316 = arith.constant 316 : index
    %24 = vector.load %arg20[%c0_22, %c316] : memref<24x1024xbf16, #tpu.memory_space<vmem>>, vector<24x256xbf16>
    %c0_23 = arith.constant 0 : index
    %c0_24 = arith.constant 0 : index
    %c0_25 = arith.constant 0 : index
    %25 = vector.load %arg6[%c0_23, %c0_24, %c0_25] : memref<9x24x24xbf16, #tpu.memory_space<vmem>>, vector<1x24x24xbf16>
    %26 = vector.shape_cast %25 : vector<1x24x24xbf16> to vector<24x24xbf16>
    %cst_26 = arith.constant dense<0.000000e+00> : vector<24x256xf32>
    %27 = tpu.matmul %26, %24, %cst_26 {dimension_numbers = #tpu.dot_dimension_numbers<[1], [0], [0], [1], [0, 0, 1, 1], [], []>} : vector<24x24xbf16>, vector<24x256xbf16>, vector<24x256xf32> -> vector<24x256xf32>
    %c0_27 = arith.constant 0 : index
    %c0_28 = arith.constant 0 : index
    %28 = vector.load %arg2[%c0_27, %c0_28] : memref<8x256xf32, #tpu.memory_space<vmem>>, vector<1x256xf32>
    %29 = vector.broadcast %28 : vector<1x256xf32> to vector<24x256xf32>
    %30 = arith.mulf %27, %29 : vector<24x256xf32>
    %c0_29 = arith.constant 0 : index
    %c320 = arith.constant 320 : index
    %31 = vector.load %arg20[%c0_29, %c320] : memref<24x1024xbf16, #tpu.memory_space<vmem>>, vector<24x256xbf16>
    %c1 = arith.constant 1 : index
    %c0_30 = arith.constant 0 : index
    %c0_31 = arith.constant 0 : index
    %32 = vector.load %arg6[%c1, %c0_30, %c0_31] : memref<9x24x24xbf16, #tpu.memory_space<vmem>>, vector<1x24x24xbf16>
    %33 = vector.shape_cast %32 : vector<1x24x24xbf16> to vector<24x24xbf16>
    %cst_32 = arith.constant dense<0.000000e+00> : vector<24x256xf32>
    %34 = tpu.matmul %33, %31, %cst_32 {dimension_numbers = #tpu.dot_dimension_numbers<[1], [0], [0], [1], [0, 0, 1, 1], [], []>} : vector<24x24xbf16>, vector<24x256xbf16>, vector<24x256xf32> -> vector<24x256xf32>
    %35 = arith.addf %30, %34 : vector<24x256xf32>
    %c0_33 = arith.constant 0 : index
    %c324 = arith.constant 324 : index
    %36 = vector.load %arg20[%c0_33, %c324] : memref<24x1024xbf16, #tpu.memory_space<vmem>>, vector<24x256xbf16>
    %c2 = arith.constant 2 : index
    %c0_34 = arith.constant 0 : index
    %c0_35 = arith.constant 0 : index
    %37 = vector.load %arg6[%c2, %c0_34, %c0_35] : memref<9x24x24xbf16, #tpu.memory_space<vmem>>, vector<1x24x24xbf16>
    %38 = vector.shape_cast %37 : vector<1x24x24xbf16> to vector<24x24xbf16>
    %cst_36 = arith.constant dense<0.000000e+00> : vector<24x256xf32>
    %39 = tpu.matmul %38, %36, %cst_36 {dimension_numbers = #tpu.dot_dimension_numbers<[1], [0], [0], [1], [0, 0, 1, 1], [], []>} : vector<24x24xbf16>, vector<24x256xbf16>, vector<24x256xf32> -> vector<24x256xf32>
    %c1_37 = arith.constant 1 : index
    %c0_38 = arith.constant 0 : index
    %40 = vector.load %arg2[%c1_37, %c0_38] : memref<8x256xf32, #tpu.memory_space<vmem>>, vector<1x256xf32>
    %41 = vector.broadcast %40 : vector<1x256xf32> to vector<24x256xf32>
    %42 = arith.mulf %39, %41 : vector<24x256xf32>
    %43 = arith.addf %35, %42 : vector<24x256xf32>
    %c0_39 = arith.constant 0 : index
    %c380 = arith.constant 380 : index
    %44 = vector.load %arg20[%c0_39, %c380] : memref<24x1024xbf16, #tpu.memory_space<vmem>>, vector<24x256xbf16>
    %c3 = arith.constant 3 : index
    %c0_40 = arith.constant 0 : index
    %c0_41 = arith.constant 0 : index
    %45 = vector.load %arg6[%c3, %c0_40, %c0_41] : memref<9x24x24xbf16, #tpu.memory_space<vmem>>, vector<1x24x24xbf16>
    %46 = vector.shape_cast %45 : vector<1x24x24xbf16> to vector<24x24xbf16>
    %cst_42 = arith.constant dense<0.000000e+00> : vector<24x256xf32>
    %47 = tpu.matmul %46, %44, %cst_42 {dimension_numbers = #tpu.dot_dimension_numbers<[1], [0], [0], [1], [0, 0, 1, 1], [], []>} : vector<24x24xbf16>, vector<24x256xbf16>, vector<24x256xf32> -> vector<24x256xf32>
    %c0_43 = arith.constant 0 : index
    %c0_44 = arith.constant 0 : index
    %48 = vector.load %arg2[%c0_43, %c0_44] : memref<8x256xf32, #tpu.memory_space<vmem>>, vector<1x256xf32>
    %49 = vector.broadcast %48 : vector<1x256xf32> to vector<24x256xf32>
    %50 = arith.mulf %47, %49 : vector<24x256xf32>
    %51 = arith.addf %43, %50 : vector<24x256xf32>
    %c4 = arith.constant 4 : index
    %c0_45 = arith.constant 0 : index
    %c0_46 = arith.constant 0 : index
    %52 = vector.load %arg6[%c4, %c0_45, %c0_46] : memref<9x24x24xbf16, #tpu.memory_space<vmem>>, vector<1x24x24xbf16>
    %53 = vector.shape_cast %52 : vector<1x24x24xbf16> to vector<24x24xbf16>
    %cst_47 = arith.constant dense<0.000000e+00> : vector<24x256xf32>
    %54 = tpu.matmul %53, %15, %cst_47 {dimension_numbers = #tpu.dot_dimension_numbers<[1], [0], [0], [1], [0, 0, 1, 1], [], []>} : vector<24x24xbf16>, vector<24x256xbf16>, vector<24x256xf32> -> vector<24x256xf32>
    %55 = arith.addf %51, %54 : vector<24x256xf32>
    %c0_48 = arith.constant 0 : index
    %c388 = arith.constant 388 : index
    %56 = vector.load %arg20[%c0_48, %c388] : memref<24x1024xbf16, #tpu.memory_space<vmem>>, vector<24x256xbf16>
    %c5 = arith.constant 5 : index
    %c0_49 = arith.constant 0 : index
    %c0_50 = arith.constant 0 : index
    %57 = vector.load %arg6[%c5, %c0_49, %c0_50] : memref<9x24x24xbf16, #tpu.memory_space<vmem>>, vector<1x24x24xbf16>
    %58 = vector.shape_cast %57 : vector<1x24x24xbf16> to vector<24x24xbf16>
    %cst_51 = arith.constant dense<0.000000e+00> : vector<24x256xf32>
    %59 = tpu.matmul %58, %56, %cst_51 {dimension_numbers = #tpu.dot_dimension_numbers<[1], [0], [0], [1], [0, 0, 1, 1], [], []>} : vector<24x24xbf16>, vector<24x256xbf16>, vector<24x256xf32> -> vector<24x256xf32>
    %c1_52 = arith.constant 1 : index
    %c0_53 = arith.constant 0 : index
    %60 = vector.load %arg2[%c1_52, %c0_53] : memref<8x256xf32, #tpu.memory_space<vmem>>, vector<1x256xf32>
    %61 = vector.broadcast %60 : vector<1x256xf32> to vector<24x256xf32>
    %62 = arith.mulf %59, %61 : vector<24x256xf32>
    %63 = arith.addf %55, %62 : vector<24x256xf32>
    %c0_54 = arith.constant 0 : index
    %c444 = arith.constant 444 : index
    %64 = vector.load %arg20[%c0_54, %c444] : memref<24x1024xbf16, #tpu.memory_space<vmem>>, vector<24x256xbf16>
    %c6 = arith.constant 6 : index
    %c0_55 = arith.constant 0 : index
    %c0_56 = arith.constant 0 : index
    %65 = vector.load %arg6[%c6, %c0_55, %c0_56] : memref<9x24x24xbf16, #tpu.memory_space<vmem>>, vector<1x24x24xbf16>
    %66 = vector.shape_cast %65 : vector<1x24x24xbf16> to vector<24x24xbf16>
    %cst_57 = arith.constant dense<0.000000e+00> : vector<24x256xf32>
    %67 = tpu.matmul %66, %64, %cst_57 {dimension_numbers = #tpu.dot_dimension_numbers<[1], [0], [0], [1], [0, 0, 1, 1], [], []>} : vector<24x24xbf16>, vector<24x256xbf16>, vector<24x256xf32> -> vector<24x256xf32>
    %c0_58 = arith.constant 0 : index
    %c0_59 = arith.constant 0 : index
    %68 = vector.load %arg2[%c0_58, %c0_59] : memref<8x256xf32, #tpu.memory_space<vmem>>, vector<1x256xf32>
    %69 = vector.broadcast %68 : vector<1x256xf32> to vector<24x256xf32>
    %70 = arith.mulf %67, %69 : vector<24x256xf32>
    %71 = arith.addf %63, %70 : vector<24x256xf32>
    %c0_60 = arith.constant 0 : index
    %c448 = arith.constant 448 : index
    %72 = vector.load %arg20[%c0_60, %c448] : memref<24x1024xbf16, #tpu.memory_space<vmem>>, vector<24x256xbf16>
    %c7 = arith.constant 7 : index
    %c0_61 = arith.constant 0 : index
    %c0_62 = arith.constant 0 : index
    %73 = vector.load %arg6[%c7, %c0_61, %c0_62] : memref<9x24x24xbf16, #tpu.memory_space<vmem>>, vector<1x24x24xbf16>
    %74 = vector.shape_cast %73 : vector<1x24x24xbf16> to vector<24x24xbf16>
    %cst_63 = arith.constant dense<0.000000e+00> : vector<24x256xf32>
    %75 = tpu.matmul %74, %72, %cst_63 {dimension_numbers = #tpu.dot_dimension_numbers<[1], [0], [0], [1], [0, 0, 1, 1], [], []>} : vector<24x24xbf16>, vector<24x256xbf16>, vector<24x256xf32> -> vector<24x256xf32>
    %76 = arith.addf %71, %75 : vector<24x256xf32>
    %c0_64 = arith.constant 0 : index
    %c452 = arith.constant 452 : index
    %77 = vector.load %arg20[%c0_64, %c452] : memref<24x1024xbf16, #tpu.memory_space<vmem>>, vector<24x256xbf16>
    %c8 = arith.constant 8 : index
    %c0_65 = arith.constant 0 : index
    %c0_66 = arith.constant 0 : index
    %78 = vector.load %arg6[%c8, %c0_65, %c0_66] : memref<9x24x24xbf16, #tpu.memory_space<vmem>>, vector<1x24x24xbf16>
    %79 = vector.shape_cast %78 : vector<1x24x24xbf16> to vector<24x24xbf16>
    %cst_67 = arith.constant dense<0.000000e+00> : vector<24x256xf32>
    %80 = tpu.matmul %79, %77, %cst_67 {dimension_numbers = #tpu.dot_dimension_numbers<[1], [0], [0], [1], [0, 0, 1, 1], [], []>} : vector<24x24xbf16>, vector<24x256xbf16>, vector<24x256xf32> -> vector<24x256xf32>
    %c1_68 = arith.constant 1 : index
    %c0_69 = arith.constant 0 : index
    %81 = vector.load %arg2[%c1_68, %c0_69] : memref<8x256xf32, #tpu.memory_space<vmem>>, vector<1x256xf32>
    %82 = vector.broadcast %81 : vector<1x256xf32> to vector<24x256xf32>
    %83 = arith.mulf %80, %82 : vector<24x256xf32>
    %84 = arith.addf %76, %83 : vector<24x256xf32>
    %c0_70 = arith.constant 0 : index
    %c0_71 = arith.constant 0 : index
    %85 = vector.load %arg10[%c0_70, %c0_71] : memref<24x1xf32, #tpu.memory_space<vmem>>, vector<24x1xf32>
    %86 = vector.broadcast %85 : vector<24x1xf32> to vector<24x256xf32>
    %87 = arith.addf %84, %86 : vector<24x256xf32>
    %cst_72 = arith.constant 0.000000e+00 : f32
    %88 = vector.broadcast %cst_72 : f32 to vector<24x256xf32>
    %89 = arith.maximumf %87, %88 : vector<24x256xf32>
    %c1_73 = arith.constant 1 : index
    %c0_74 = arith.constant 0 : index
    %c0_75 = arith.constant 0 : index
    %90 = vector.load %arg16[%c1_73, %c0_74, %c0_75] : memref<5x24x24xf32, #tpu.memory_space<vmem>>, vector<1x24x24xf32>
    %91 = vector.shape_cast %90 : vector<1x24x24xf32> to vector<24x24xf32>
    %cst_76 = arith.constant dense<0.000000e+00> : vector<24x256xf32>
    %92 = tpu.matmul %91, %89, %cst_76 {dimension_numbers = #tpu.dot_dimension_numbers<[1], [0], [0], [1], [0, 0, 1, 1], [], []>} : vector<24x24xf32>, vector<24x256xf32>, vector<24x256xf32> -> vector<24x256xf32>
    %93 = arith.addf %23, %92 : vector<24x256xf32>
    %c0_77 = arith.constant 0 : index
    %c248 = arith.constant 248 : index
    %94 = vector.load %arg20[%c0_77, %c248] : memref<24x1024xbf16, #tpu.memory_space<vmem>>, vector<24x256xbf16>
    %c0_78 = arith.constant 0 : index
    %c0_79 = arith.constant 0 : index
    %c0_80 = arith.constant 0 : index
    %95 = vector.load %arg7[%c0_78, %c0_79, %c0_80] : memref<9x24x24xbf16, #tpu.memory_space<vmem>>, vector<1x24x24xbf16>
    %96 = vector.shape_cast %95 : vector<1x24x24xbf16> to vector<24x24xbf16>
    %cst_81 = arith.constant dense<0.000000e+00> : vector<24x256xf32>
    %97 = tpu.matmul %96, %94, %cst_81 {dimension_numbers = #tpu.dot_dimension_numbers<[1], [0], [0], [1], [0, 0, 1, 1], [], []>} : vector<24x24xbf16>, vector<24x256xbf16>, vector<24x256xf32> -> vector<24x256xf32>
    %c2_82 = arith.constant 2 : index
    %c0_83 = arith.constant 0 : index
    %98 = vector.load %arg2[%c2_82, %c0_83] : memref<8x256xf32, #tpu.memory_space<vmem>>, vector<1x256xf32>
    %99 = vector.broadcast %98 : vector<1x256xf32> to vector<24x256xf32>
    %100 = arith.mulf %97, %99 : vector<24x256xf32>
    %c0_84 = arith.constant 0 : index
    %c256 = arith.constant 256 : index
    %101 = vector.load %arg20[%c0_84, %c256] : memref<24x1024xbf16, #tpu.memory_space<vmem>>, vector<24x256xbf16>
    %c1_85 = arith.constant 1 : index
    %c0_86 = arith.constant 0 : index
    %c0_87 = arith.constant 0 : index
    %102 = vector.load %arg7[%c1_85, %c0_86, %c0_87] : memref<9x24x24xbf16, #tpu.memory_space<vmem>>, vector<1x24x24xbf16>
    %103 = vector.shape_cast %102 : vector<1x24x24xbf16> to vector<24x24xbf16>
    %cst_88 = arith.constant dense<0.000000e+00> : vector<24x256xf32>
    %104 = tpu.matmul %103, %101, %cst_88 {dimension_numbers = #tpu.dot_dimension_numbers<[1], [0], [0], [1], [0, 0, 1, 1], [], []>} : vector<24x24xbf16>, vector<24x256xbf16>, vector<24x256xf32> -> vector<24x256xf32>
    %105 = arith.addf %100, %104 : vector<24x256xf32>
    %c0_89 = arith.constant 0 : index
    %c264 = arith.constant 264 : index
    %106 = vector.load %arg20[%c0_89, %c264] : memref<24x1024xbf16, #tpu.memory_space<vmem>>, vector<24x256xbf16>
    %c2_90 = arith.constant 2 : index
    %c0_91 = arith.constant 0 : index
    %c0_92 = arith.constant 0 : index
    %107 = vector.load %arg7[%c2_90, %c0_91, %c0_92] : memref<9x24x24xbf16, #tpu.memory_space<vmem>>, vector<1x24x24xbf16>
    %108 = vector.shape_cast %107 : vector<1x24x24xbf16> to vector<24x24xbf16>
    %cst_93 = arith.constant dense<0.000000e+00> : vector<24x256xf32>
    %109 = tpu.matmul %108, %106, %cst_93 {dimension_numbers = #tpu.dot_dimension_numbers<[1], [0], [0], [1], [0, 0, 1, 1], [], []>} : vector<24x24xbf16>, vector<24x256xbf16>, vector<24x256xf32> -> vector<24x256xf32>
    %c3_94 = arith.constant 3 : index
    %c0_95 = arith.constant 0 : index
    %110 = vector.load %arg2[%c3_94, %c0_95] : memref<8x256xf32, #tpu.memory_space<vmem>>, vector<1x256xf32>
    %111 = vector.broadcast %110 : vector<1x256xf32> to vector<24x256xf32>
    %112 = arith.mulf %109, %111 : vector<24x256xf32>
    %113 = arith.addf %105, %112 : vector<24x256xf32>
    %c0_96 = arith.constant 0 : index
    %c376 = arith.constant 376 : index
    %114 = vector.load %arg20[%c0_96, %c376] : memref<24x1024xbf16, #tpu.memory_space<vmem>>, vector<24x256xbf16>
    %c3_97 = arith.constant 3 : index
    %c0_98 = arith.constant 0 : index
    %c0_99 = arith.constant 0 : index
    %115 = vector.load %arg7[%c3_97, %c0_98, %c0_99] : memref<9x24x24xbf16, #tpu.memory_space<vmem>>, vector<1x24x24xbf16>
    %116 = vector.shape_cast %115 : vector<1x24x24xbf16> to vector<24x24xbf16>
    %cst_100 = arith.constant dense<0.000000e+00> : vector<24x256xf32>
    %117 = tpu.matmul %116, %114, %cst_100 {dimension_numbers = #tpu.dot_dimension_numbers<[1], [0], [0], [1], [0, 0, 1, 1], [], []>} : vector<24x24xbf16>, vector<24x256xbf16>, vector<24x256xf32> -> vector<24x256xf32>
    %c2_101 = arith.constant 2 : index
    %c0_102 = arith.constant 0 : index
    %118 = vector.load %arg2[%c2_101, %c0_102] : memref<8x256xf32, #tpu.memory_space<vmem>>, vector<1x256xf32>
    %119 = vector.broadcast %118 : vector<1x256xf32> to vector<24x256xf32>
    %120 = arith.mulf %117, %119 : vector<24x256xf32>
    %121 = arith.addf %113, %120 : vector<24x256xf32>
    %c4_103 = arith.constant 4 : index
    %c0_104 = arith.constant 0 : index
    %c0_105 = arith.constant 0 : index
    %122 = vector.load %arg7[%c4_103, %c0_104, %c0_105] : memref<9x24x24xbf16, #tpu.memory_space<vmem>>, vector<1x24x24xbf16>
    %123 = vector.shape_cast %122 : vector<1x24x24xbf16> to vector<24x24xbf16>
    %cst_106 = arith.constant dense<0.000000e+00> : vector<24x256xf32>
    %124 = tpu.matmul %123, %15, %cst_106 {dimension_numbers = #tpu.dot_dimension_numbers<[1], [0], [0], [1], [0, 0, 1, 1], [], []>} : vector<24x24xbf16>, vector<24x256xbf16>, vector<24x256xf32> -> vector<24x256xf32>
    %125 = arith.addf %121, %124 : vector<24x256xf32>
    %c0_107 = arith.constant 0 : index
    %c392 = arith.constant 392 : index
    %126 = vector.load %arg20[%c0_107, %c392] : memref<24x1024xbf16, #tpu.memory_space<vmem>>, vector<24x256xbf16>
    %c5_108 = arith.constant 5 : index
    %c0_109 = arith.constant 0 : index
    %c0_110 = arith.constant 0 : index
    %127 = vector.load %arg7[%c5_108, %c0_109, %c0_110] : memref<9x24x24xbf16, #tpu.memory_space<vmem>>, vector<1x24x24xbf16>
    %128 = vector.shape_cast %127 : vector<1x24x24xbf16> to vector<24x24xbf16>
    %cst_111 = arith.constant dense<0.000000e+00> : vector<24x256xf32>
    %129 = tpu.matmul %128, %126, %cst_111 {dimension_numbers = #tpu.dot_dimension_numbers<[1], [0], [0], [1], [0, 0, 1, 1], [], []>} : vector<24x24xbf16>, vector<24x256xbf16>, vector<24x256xf32> -> vector<24x256xf32>
    %c3_112 = arith.constant 3 : index
    %c0_113 = arith.constant 0 : index
    %130 = vector.load %arg2[%c3_112, %c0_113] : memref<8x256xf32, #tpu.memory_space<vmem>>, vector<1x256xf32>
    %131 = vector.broadcast %130 : vector<1x256xf32> to vector<24x256xf32>
    %132 = arith.mulf %129, %131 : vector<24x256xf32>
    %133 = arith.addf %125, %132 : vector<24x256xf32>
    %c0_114 = arith.constant 0 : index
    %c504 = arith.constant 504 : index
    %134 = vector.load %arg20[%c0_114, %c504] : memref<24x1024xbf16, #tpu.memory_space<vmem>>, vector<24x256xbf16>
    %c6_115 = arith.constant 6 : index
    %c0_116 = arith.constant 0 : index
    %c0_117 = arith.constant 0 : index
    %135 = vector.load %arg7[%c6_115, %c0_116, %c0_117] : memref<9x24x24xbf16, #tpu.memory_space<vmem>>, vector<1x24x24xbf16>
    %136 = vector.shape_cast %135 : vector<1x24x24xbf16> to vector<24x24xbf16>
    %cst_118 = arith.constant dense<0.000000e+00> : vector<24x256xf32>
    %137 = tpu.matmul %136, %134, %cst_118 {dimension_numbers = #tpu.dot_dimension_numbers<[1], [0], [0], [1], [0, 0, 1, 1], [], []>} : vector<24x24xbf16>, vector<24x256xbf16>, vector<24x256xf32> -> vector<24x256xf32>
    %c2_119 = arith.constant 2 : index
    %c0_120 = arith.constant 0 : index
    %138 = vector.load %arg2[%c2_119, %c0_120] : memref<8x256xf32, #tpu.memory_space<vmem>>, vector<1x256xf32>
    %139 = vector.broadcast %138 : vector<1x256xf32> to vector<24x256xf32>
    %140 = arith.mulf %137, %139 : vector<24x256xf32>
    %141 = arith.addf %133, %140 : vector<24x256xf32>
    %c0_121 = arith.constant 0 : index
    %c512 = arith.constant 512 : index
    %142 = vector.load %arg20[%c0_121, %c512] : memref<24x1024xbf16, #tpu.memory_space<vmem>>, vector<24x256xbf16>
    %c7_122 = arith.constant 7 : index
    %c0_123 = arith.constant 0 : index
    %c0_124 = arith.constant 0 : index
    %143 = vector.load %arg7[%c7_122, %c0_123, %c0_124] : memref<9x24x24xbf16, #tpu.memory_space<vmem>>, vector<1x24x24xbf16>
    %144 = vector.shape_cast %143 : vector<1x24x24xbf16> to vector<24x24xbf16>
    %cst_125 = arith.constant dense<0.000000e+00> : vector<24x256xf32>
    %145 = tpu.matmul %144, %142, %cst_125 {dimension_numbers = #tpu.dot_dimension_numbers<[1], [0], [0], [1], [0, 0, 1, 1], [], []>} : vector<24x24xbf16>, vector<24x256xbf16>, vector<24x256xf32> -> vector<24x256xf32>
    %146 = arith.addf %141, %145 : vector<24x256xf32>
    %c0_126 = arith.constant 0 : index
    %c520 = arith.constant 520 : index
    %147 = vector.load %arg20[%c0_126, %c520] : memref<24x1024xbf16, #tpu.memory_space<vmem>>, vector<24x256xbf16>
    %c8_127 = arith.constant 8 : index
    %c0_128 = arith.constant 0 : index
    %c0_129 = arith.constant 0 : index
    %148 = vector.load %arg7[%c8_127, %c0_128, %c0_129] : memref<9x24x24xbf16, #tpu.memory_space<vmem>>, vector<1x24x24xbf16>
    %149 = vector.shape_cast %148 : vector<1x24x24xbf16> to vector<24x24xbf16>
    %cst_130 = arith.constant dense<0.000000e+00> : vector<24x256xf32>
    %150 = tpu.matmul %149, %147, %cst_130 {dimension_numbers = #tpu.dot_dimension_numbers<[1], [0], [0], [1], [0, 0, 1, 1], [], []>} : vector<24x24xbf16>, vector<24x256xbf16>, vector<24x256xf32> -> vector<24x256xf32>
    %c3_131 = arith.constant 3 : index
    %c0_132 = arith.constant 0 : index
    %151 = vector.load %arg2[%c3_131, %c0_132] : memref<8x256xf32, #tpu.memory_space<vmem>>, vector<1x256xf32>
    %152 = vector.broadcast %151 : vector<1x256xf32> to vector<24x256xf32>
    %153 = arith.mulf %150, %152 : vector<24x256xf32>
    %154 = arith.addf %146, %153 : vector<24x256xf32>
    %c0_133 = arith.constant 0 : index
    %c0_134 = arith.constant 0 : index
    %155 = vector.load %arg11[%c0_133, %c0_134] : memref<24x1xf32, #tpu.memory_space<vmem>>, vector<24x1xf32>
    %156 = vector.broadcast %155 : vector<24x1xf32> to vector<24x256xf32>
    %157 = arith.addf %154, %156 : vector<24x256xf32>
    %cst_135 = arith.constant 0.000000e+00 : f32
    %158 = vector.broadcast %cst_135 : f32 to vector<24x256xf32>
    %159 = arith.maximumf %157, %158 : vector<24x256xf32>
    %c2_136 = arith.constant 2 : index
    %c0_137 = arith.constant 0 : index
    %c0_138 = arith.constant 0 : index
    %160 = vector.load %arg16[%c2_136, %c0_137, %c0_138] : memref<5x24x24xf32, #tpu.memory_space<vmem>>, vector<1x24x24xf32>
    %161 = vector.shape_cast %160 : vector<1x24x24xf32> to vector<24x24xf32>
    %cst_139 = arith.constant dense<0.000000e+00> : vector<24x256xf32>
    %162 = tpu.matmul %161, %159, %cst_139 {dimension_numbers = #tpu.dot_dimension_numbers<[1], [0], [0], [1], [0, 0, 1, 1], [], []>} : vector<24x24xf32>, vector<24x256xf32>, vector<24x256xf32> -> vector<24x256xf32>
    %163 = arith.addf %93, %162 : vector<24x256xf32>
    %c0_140 = arith.constant 0 : index
    %c180 = arith.constant 180 : index
    %164 = vector.load %arg20[%c0_140, %c180] : memref<24x1024xbf16, #tpu.memory_space<vmem>>, vector<24x256xbf16>
    %c0_141 = arith.constant 0 : index
    %c0_142 = arith.constant 0 : index
    %c0_143 = arith.constant 0 : index
    %165 = vector.load %arg8[%c0_141, %c0_142, %c0_143] : memref<9x24x24xbf16, #tpu.memory_space<vmem>>, vector<1x24x24xbf16>
    %166 = vector.shape_cast %165 : vector<1x24x24xbf16> to vector<24x24xbf16>
    %cst_144 = arith.constant dense<0.000000e+00> : vector<24x256xf32>
    %167 = tpu.matmul %166, %164, %cst_144 {dimension_numbers = #tpu.dot_dimension_numbers<[1], [0], [0], [1], [0, 0, 1, 1], [], []>} : vector<24x24xbf16>, vector<24x256xbf16>, vector<24x256xf32> -> vector<24x256xf32>
    %c4_145 = arith.constant 4 : index
    %c0_146 = arith.constant 0 : index
    %168 = vector.load %arg2[%c4_145, %c0_146] : memref<8x256xf32, #tpu.memory_space<vmem>>, vector<1x256xf32>
    %169 = vector.broadcast %168 : vector<1x256xf32> to vector<24x256xf32>
    %170 = arith.mulf %167, %169 : vector<24x256xf32>
    %c0_147 = arith.constant 0 : index
    %c192 = arith.constant 192 : index
    %171 = vector.load %arg20[%c0_147, %c192] : memref<24x1024xbf16, #tpu.memory_space<vmem>>, vector<24x256xbf16>
    %c1_148 = arith.constant 1 : index
    %c0_149 = arith.constant 0 : index
    %c0_150 = arith.constant 0 : index
    %172 = vector.load %arg8[%c1_148, %c0_149, %c0_150] : memref<9x24x24xbf16, #tpu.memory_space<vmem>>, vector<1x24x24xbf16>
    %173 = vector.shape_cast %172 : vector<1x24x24xbf16> to vector<24x24xbf16>
    %cst_151 = arith.constant dense<0.000000e+00> : vector<24x256xf32>
    %174 = tpu.matmul %173, %171, %cst_151 {dimension_numbers = #tpu.dot_dimension_numbers<[1], [0], [0], [1], [0, 0, 1, 1], [], []>} : vector<24x24xbf16>, vector<24x256xbf16>, vector<24x256xf32> -> vector<24x256xf32>
    %175 = arith.addf %170, %174 : vector<24x256xf32>
    %c0_152 = arith.constant 0 : index
    %c204 = arith.constant 204 : index
    %176 = vector.load %arg20[%c0_152, %c204] : memref<24x1024xbf16, #tpu.memory_space<vmem>>, vector<24x256xbf16>
    %c2_153 = arith.constant 2 : index
    %c0_154 = arith.constant 0 : index
    %c0_155 = arith.constant 0 : index
    %177 = vector.load %arg8[%c2_153, %c0_154, %c0_155] : memref<9x24x24xbf16, #tpu.memory_space<vmem>>, vector<1x24x24xbf16>
    %178 = vector.shape_cast %177 : vector<1x24x24xbf16> to vector<24x24xbf16>
    %cst_156 = arith.constant dense<0.000000e+00> : vector<24x256xf32>
    %179 = tpu.matmul %178, %176, %cst_156 {dimension_numbers = #tpu.dot_dimension_numbers<[1], [0], [0], [1], [0, 0, 1, 1], [], []>} : vector<24x24xbf16>, vector<24x256xbf16>, vector<24x256xf32> -> vector<24x256xf32>
    %c5_157 = arith.constant 5 : index
    %c0_158 = arith.constant 0 : index
    %180 = vector.load %arg2[%c5_157, %c0_158] : memref<8x256xf32, #tpu.memory_space<vmem>>, vector<1x256xf32>
    %181 = vector.broadcast %180 : vector<1x256xf32> to vector<24x256xf32>
    %182 = arith.mulf %179, %181 : vector<24x256xf32>
    %183 = arith.addf %175, %182 : vector<24x256xf32>
    %c0_159 = arith.constant 0 : index
    %c372 = arith.constant 372 : index
    %184 = vector.load %arg20[%c0_159, %c372] : memref<24x1024xbf16, #tpu.memory_space<vmem>>, vector<24x256xbf16>
    %c3_160 = arith.constant 3 : index
    %c0_161 = arith.constant 0 : index
    %c0_162 = arith.constant 0 : index
    %185 = vector.load %arg8[%c3_160, %c0_161, %c0_162] : memref<9x24x24xbf16, #tpu.memory_space<vmem>>, vector<1x24x24xbf16>
    %186 = vector.shape_cast %185 : vector<1x24x24xbf16> to vector<24x24xbf16>
    %cst_163 = arith.constant dense<0.000000e+00> : vector<24x256xf32>
    %187 = tpu.matmul %186, %184, %cst_163 {dimension_numbers = #tpu.dot_dimension_numbers<[1], [0], [0], [1], [0, 0, 1, 1], [], []>} : vector<24x24xbf16>, vector<24x256xbf16>, vector<24x256xf32> -> vector<24x256xf32>
    %c4_164 = arith.constant 4 : index
    %c0_165 = arith.constant 0 : index
    %188 = vector.load %arg2[%c4_164, %c0_165] : memref<8x256xf32, #tpu.memory_space<vmem>>, vector<1x256xf32>
    %189 = vector.broadcast %188 : vector<1x256xf32> to vector<24x256xf32>
    %190 = arith.mulf %187, %189 : vector<24x256xf32>
    %191 = arith.addf %183, %190 : vector<24x256xf32>
    %c4_166 = arith.constant 4 : index
    %c0_167 = arith.constant 0 : index
    %c0_168 = arith.constant 0 : index
    %192 = vector.load %arg8[%c4_166, %c0_167, %c0_168] : memref<9x24x24xbf16, #tpu.memory_space<vmem>>, vector<1x24x24xbf16>
    %193 = vector.shape_cast %192 : vector<1x24x24xbf16> to vector<24x24xbf16>
    %cst_169 = arith.constant dense<0.000000e+00> : vector<24x256xf32>
    %194 = tpu.matmul %193, %15, %cst_169 {dimension_numbers = #tpu.dot_dimension_numbers<[1], [0], [0], [1], [0, 0, 1, 1], [], []>} : vector<24x24xbf16>, vector<24x256xbf16>, vector<24x256xf32> -> vector<24x256xf32>
    %195 = arith.addf %191, %194 : vector<24x256xf32>
    %c0_170 = arith.constant 0 : index
    %c396 = arith.constant 396 : index
    %196 = vector.load %arg20[%c0_170, %c396] : memref<24x1024xbf16, #tpu.memory_space<vmem>>, vector<24x256xbf16>
    %c5_171 = arith.constant 5 : index
    %c0_172 = arith.constant 0 : index
    %c0_173 = arith.constant 0 : index
    %197 = vector.load %arg8[%c5_171, %c0_172, %c0_173] : memref<9x24x24xbf16, #tpu.memory_space<vmem>>, vector<1x24x24xbf16>
    %198 = vector.shape_cast %197 : vector<1x24x24xbf16> to vector<24x24xbf16>
    %cst_174 = arith.constant dense<0.000000e+00> : vector<24x256xf32>
    %199 = tpu.matmul %198, %196, %cst_174 {dimension_numbers = #tpu.dot_dimension_numbers<[1], [0], [0], [1], [0, 0, 1, 1], [], []>} : vector<24x24xbf16>, vector<24x256xbf16>, vector<24x256xf32> -> vector<24x256xf32>
    %c5_175 = arith.constant 5 : index
    %c0_176 = arith.constant 0 : index
    %200 = vector.load %arg2[%c5_175, %c0_176] : memref<8x256xf32, #tpu.memory_space<vmem>>, vector<1x256xf32>
    %201 = vector.broadcast %200 : vector<1x256xf32> to vector<24x256xf32>
    %202 = arith.mulf %199, %201 : vector<24x256xf32>
    %203 = arith.addf %195, %202 : vector<24x256xf32>
    %c0_177 = arith.constant 0 : index
    %c564 = arith.constant 564 : index
    %204 = vector.load %arg20[%c0_177, %c564] : memref<24x1024xbf16, #tpu.memory_space<vmem>>, vector<24x256xbf16>
    %c6_178 = arith.constant 6 : index
    %c0_179 = arith.constant 0 : index
    %c0_180 = arith.constant 0 : index
    %205 = vector.load %arg8[%c6_178, %c0_179, %c0_180] : memref<9x24x24xbf16, #tpu.memory_space<vmem>>, vector<1x24x24xbf16>
    %206 = vector.shape_cast %205 : vector<1x24x24xbf16> to vector<24x24xbf16>
    %cst_181 = arith.constant dense<0.000000e+00> : vector<24x256xf32>
    %207 = tpu.matmul %206, %204, %cst_181 {dimension_numbers = #tpu.dot_dimension_numbers<[1], [0], [0], [1], [0, 0, 1, 1], [], []>} : vector<24x24xbf16>, vector<24x256xbf16>, vector<24x256xf32> -> vector<24x256xf32>
    %c4_182 = arith.constant 4 : index
    %c0_183 = arith.constant 0 : index
    %208 = vector.load %arg2[%c4_182, %c0_183] : memref<8x256xf32, #tpu.memory_space<vmem>>, vector<1x256xf32>
    %209 = vector.broadcast %208 : vector<1x256xf32> to vector<24x256xf32>
    %210 = arith.mulf %207, %209 : vector<24x256xf32>
    %211 = arith.addf %203, %210 : vector<24x256xf32>
    %c0_184 = arith.constant 0 : index
    %c576 = arith.constant 576 : index
    %212 = vector.load %arg20[%c0_184, %c576] : memref<24x1024xbf16, #tpu.memory_space<vmem>>, vector<24x256xbf16>
    %c7_185 = arith.constant 7 : index
    %c0_186 = arith.constant 0 : index
    %c0_187 = arith.constant 0 : index
    %213 = vector.load %arg8[%c7_185, %c0_186, %c0_187] : memref<9x24x24xbf16, #tpu.memory_space<vmem>>, vector<1x24x24xbf16>
    %214 = vector.shape_cast %213 : vector<1x24x24xbf16> to vector<24x24xbf16>
    %cst_188 = arith.constant dense<0.000000e+00> : vector<24x256xf32>
    %215 = tpu.matmul %214, %212, %cst_188 {dimension_numbers = #tpu.dot_dimension_numbers<[1], [0], [0], [1], [0, 0, 1, 1], [], []>} : vector<24x24xbf16>, vector<24x256xbf16>, vector<24x256xf32> -> vector<24x256xf32>
    %216 = arith.addf %211, %215 : vector<24x256xf32>
    %c0_189 = arith.constant 0 : index
    %c588 = arith.constant 588 : index
    %217 = vector.load %arg20[%c0_189, %c588] : memref<24x1024xbf16, #tpu.memory_space<vmem>>, vector<24x256xbf16>
    %c8_190 = arith.constant 8 : index
    %c0_191 = arith.constant 0 : index
    %c0_192 = arith.constant 0 : index
    %218 = vector.load %arg8[%c8_190, %c0_191, %c0_192] : memref<9x24x24xbf16, #tpu.memory_space<vmem>>, vector<1x24x24xbf16>
    %219 = vector.shape_cast %218 : vector<1x24x24xbf16> to vector<24x24xbf16>
    %cst_193 = arith.constant dense<0.000000e+00> : vector<24x256xf32>
    %220 = tpu.matmul %219, %217, %cst_193 {dimension_numbers = #tpu.dot_dimension_numbers<[1], [0], [0], [1], [0, 0, 1, 1], [], []>} : vector<24x24xbf16>, vector<24x256xbf16>, vector<24x256xf32> -> vector<24x256xf32>
    %c5_194 = arith.constant 5 : index
    %c0_195 = arith.constant 0 : index
    %221 = vector.load %arg2[%c5_194, %c0_195] : memref<8x256xf32, #tpu.memory_space<vmem>>, vector<1x256xf32>
    %222 = vector.broadcast %221 : vector<1x256xf32> to vector<24x256xf32>
    %223 = arith.mulf %220, %222 : vector<24x256xf32>
    %224 = arith.addf %216, %223 : vector<24x256xf32>
    %c0_196 = arith.constant 0 : index
    %c0_197 = arith.constant 0 : index
    %225 = vector.load %arg12[%c0_196, %c0_197] : memref<24x1xf32, #tpu.memory_space<vmem>>, vector<24x1xf32>
    %226 = vector.broadcast %225 : vector<24x1xf32> to vector<24x256xf32>
    %227 = arith.addf %224, %226 : vector<24x256xf32>
    %cst_198 = arith.constant 0.000000e+00 : f32
    %228 = vector.broadcast %cst_198 : f32 to vector<24x256xf32>
    %229 = arith.maximumf %227, %228 : vector<24x256xf32>
    %c3_199 = arith.constant 3 : index
    %c0_200 = arith.constant 0 : index
    %c0_201 = arith.constant 0 : index
    %230 = vector.load %arg16[%c3_199, %c0_200, %c0_201] : memref<5x24x24xf32, #tpu.memory_space<vmem>>, vector<1x24x24xf32>
    %231 = vector.shape_cast %230 : vector<1x24x24xf32> to vector<24x24xf32>
    %cst_202 = arith.constant dense<0.000000e+00> : vector<24x256xf32>
    %232 = tpu.matmul %231, %229, %cst_202 {dimension_numbers = #tpu.dot_dimension_numbers<[1], [0], [0], [1], [0, 0, 1, 1], [], []>} : vector<24x24xf32>, vector<24x256xf32>, vector<24x256xf32> -> vector<24x256xf32>
    %233 = arith.addf %163, %232 : vector<24x256xf32>
    %c4_203 = arith.constant 4 : index
    %c0_204 = arith.constant 0 : index
    %c0_205 = arith.constant 0 : index
    %234 = vector.load %arg9[%c4_203, %c0_204, %c0_205] : memref<9x24x24xbf16, #tpu.memory_space<vmem>>, vector<1x24x24xbf16>
    %235 = vector.shape_cast %234 : vector<1x24x24xbf16> to vector<24x24xbf16>
    %cst_206 = arith.constant dense<0.000000e+00> : vector<24x256xf32>
    %236 = tpu.matmul %235, %15, %cst_206 {dimension_numbers = #tpu.dot_dimension_numbers<[1], [0], [0], [1], [0, 0, 1, 1], [], []>} : vector<24x24xbf16>, vector<24x256xbf16>, vector<24x256xf32> -> vector<24x256xf32>
    %c0_207 = arith.constant 0 : index
    %c0_208 = arith.constant 0 : index
    %237 = vector.load %arg13[%c0_207, %c0_208] : memref<24x1xf32, #tpu.memory_space<vmem>>, vector<24x1xf32>
    %238 = vector.broadcast %237 : vector<24x1xf32> to vector<24x256xf32>
    %239 = arith.addf %236, %238 : vector<24x256xf32>
    %cst_209 = arith.constant 0.000000e+00 : f32
    %240 = vector.broadcast %cst_209 : f32 to vector<24x256xf32>
    %241 = arith.maximumf %239, %240 : vector<24x256xf32>
    %c4_210 = arith.constant 4 : index
    %c0_211 = arith.constant 0 : index
    %c0_212 = arith.constant 0 : index
    %242 = vector.load %arg16[%c4_210, %c0_211, %c0_212] : memref<5x24x24xf32, #tpu.memory_space<vmem>>, vector<1x24x24xf32>
    %243 = vector.shape_cast %242 : vector<1x24x24xf32> to vector<24x24xf32>
    %cst_213 = arith.constant dense<0.000000e+00> : vector<24x256xf32>
    %244 = tpu.matmul %243, %241, %cst_213 {dimension_numbers = #tpu.dot_dimension_numbers<[1], [0], [0], [1], [0, 0, 1, 1], [], []>} : vector<24x24xf32>, vector<24x256xf32>, vector<24x256xf32> -> vector<24x256xf32>
    %245 = arith.addf %233, %244 : vector<24x256xf32>
    %c0_214 = arith.constant 0 : index
    %c0_215 = arith.constant 0 : index
    %246 = vector.load %arg14[%c0_214, %c0_215] : memref<24x24xf32, #tpu.memory_space<vmem>>, vector<24x24xf32>
    %cst_216 = arith.constant dense<0.000000e+00> : vector<24x1xf32>
    %247 = tpu.matmul %246, %14, %cst_216 {dimension_numbers = #tpu.dot_dimension_numbers<[1], [0], [0], [1], [0, 0, 1, 1], [], []>} : vector<24x24xf32>, vector<24x1xf32>, vector<24x1xf32> -> vector<24x1xf32>
    %c0_217 = arith.constant 0 : index
    %c0_218 = arith.constant 0 : index
    %248 = vector.load %arg15[%c0_217, %c0_218] : memref<24x1xf32, #tpu.memory_space<vmem>>, vector<24x1xf32>
    %249 = arith.addf %247, %248 : vector<24x1xf32>
    %cst_219 = arith.constant 0.000000e+00 : f32
    %250 = vector.broadcast %cst_219 : f32 to vector<24x1xf32>
    %251 = arith.maximumf %249, %250 : vector<24x1xf32>
    %c0_220 = arith.constant 0 : index
    %c0_221 = arith.constant 0 : index
    %252 = vector.load %arg17[%c0_220, %c0_221] : memref<24x24xf32, #tpu.memory_space<vmem>>, vector<24x24xf32>
    %cst_222 = arith.constant dense<0.000000e+00> : vector<24x1xf32>
    %253 = tpu.matmul %252, %251, %cst_222 {dimension_numbers = #tpu.dot_dimension_numbers<[1], [0], [0], [1], [0, 0, 1, 1], [], []>} : vector<24x24xf32>, vector<24x1xf32>, vector<24x1xf32> -> vector<24x1xf32>
    %254 = vector.broadcast %253 : vector<24x1xf32> to vector<24x256xf32>
    %255 = arith.addf %245, %254 : vector<24x256xf32>
    %c0_223 = arith.constant 0 : index
    %c0_224 = arith.constant 0 : index
    %256 = vector.load %arg18[%c0_223, %c0_224] : memref<24x1xf32, #tpu.memory_space<vmem>>, vector<24x1xf32>
    %257 = vector.broadcast %256 : vector<24x1xf32> to vector<24x256xf32>
    %258 = arith.addf %255, %257 : vector<24x256xf32>
    %cst_225 = arith.constant 0.000000e+00 : f32
    %259 = vector.broadcast %cst_225 : f32 to vector<24x256xf32>
    %260 = arith.maximumf %258, %259 : vector<24x256xf32>
    %c0_226 = arith.constant 0 : index
    %c0_227 = arith.constant 0 : index
    %c0_228 = arith.constant 0 : index
    %261 = vector.load %arg19[%c0_226, %c0_227, %c0_228] : memref<1x24x256xf32, #tpu.memory_space<vmem>>, vector<1x24x256xf32>
    %262 = vector.shape_cast %261 : vector<1x24x256xf32> to vector<24x256xf32>
    %263 = vector.shape_cast %260 : vector<24x256xf32> to vector<1x24x256xf32>
    tpu.vector_store %arg19[%c0_226, %c0_227, %c0_228], %263 {strides = array<i32>} : memref<1x24x256xf32, #tpu.memory_space<vmem>>, vector<1x24x256xf32>,
    return
  }
  func.func @transform_0(%arg0: i32) -> (i32, i32, i32) {
    %c0_i32 = arith.constant 0 : i32
    %c0_i32_0 = arith.constant 0 : i32
    %c0_i32_1 = arith.constant 0 : i32
    return %arg0, %c0_i32, %c0_i32_0 : i32, i32, i32
  }
  func.func @transform_1(%arg0: i32) -> (i32, i32) {
    %c0_i32 = arith.constant 0 : i32
    %c0_i32_0 = arith.constant 0 : i32
    %c0_i32_1 = arith.constant 0 : i32
    return %c0_i32, %c0_i32_0 : i32, i32
  }
  func.func @transform_2(%arg0: i32) -> (i32, i32) {
    %c0_i32 = arith.constant 0 : i32
    %c0_i32_0 = arith.constant 0 : i32
    %c0_i32_1 = arith.constant 0 : i32
    return %c0_i32, %c0_i32_0 : i32, i32
  }
  func.func @transform_3(%arg0: i32) -> (i32, i32) {
    %c0_i32 = arith.constant 0 : i32
    %c0_i32_0 = arith.constant 0 : i32
    %c0_i32_1 = arith.constant 0 : i32
    return %c0_i32, %c0_i32_0 : i32, i32
  }
  func.func @transform_4(%arg0: i32) -> (i32, i32) {
    %c0_i32 = arith.constant 0 : i32
    %c0_i32_0 = arith.constant 0 : i32
    %c0_i32_1 = arith.constant 0 : i32
    return %c0_i32, %c0_i32_0 : i32, i32
  }
  func.func @transform_5(%arg0: i32) -> (i32, i32, i32) {
    %c0_i32 = arith.constant 0 : i32
    %c0_i32_0 = arith.constant 0 : i32
    %c0_i32_1 = arith.constant 0 : i32
    %c0_i32_2 = arith.constant 0 : i32
    return %c0_i32, %c0_i32_0, %c0_i32_1 : i32, i32, i32
  }
  func.func @transform_6(%arg0: i32) -> (i32, i32, i32) {
    %c0_i32 = arith.constant 0 : i32
    %c0_i32_0 = arith.constant 0 : i32
    %c0_i32_1 = arith.constant 0 : i32
    %c0_i32_2 = arith.constant 0 : i32
    return %c0_i32, %c0_i32_0, %c0_i32_1 : i32, i32, i32
  }
  func.func @transform_7(%arg0: i32) -> (i32, i32, i32) {
    %c0_i32 = arith.constant 0 : i32
    %c0_i32_0 = arith.constant 0 : i32
    %c0_i32_1 = arith.constant 0 : i32
    %c0_i32_2 = arith.constant 0 : i32
    return %c0_i32, %c0_i32_0, %c0_i32_1 : i32, i32, i32
  }
  func.func @transform_8(%arg0: i32) -> (i32, i32, i32) {
    %c0_i32 = arith.constant 0 : i32
    %c0_i32_0 = arith.constant 0 : i32
    %c0_i32_1 = arith.constant 0 : i32
    %c0_i32_2 = arith.constant 0 : i32
    return %c0_i32, %c0_i32_0, %c0_i32_1 : i32, i32, i32
  }
  func.func @transform_9(%arg0: i32) -> (i32, i32) {
    %c0_i32 = arith.constant 0 : i32
    %c0_i32_0 = arith.constant 0 : i32
    %c0_i32_1 = arith.constant 0 : i32
    return %c0_i32, %c0_i32_0 : i32, i32
  }
  func.func @transform_10(%arg0: i32) -> (i32, i32) {
    %c0_i32 = arith.constant 0 : i32
    %c0_i32_0 = arith.constant 0 : i32
    %c0_i32_1 = arith.constant 0 : i32
    return %c0_i32, %c0_i32_0 : i32, i32
  }
  func.func @transform_11(%arg0: i32) -> (i32, i32) {
    %c0_i32 = arith.constant 0 : i32
    %c0_i32_0 = arith.constant 0 : i32
    %c0_i32_1 = arith.constant 0 : i32
    return %c0_i32, %c0_i32_0 : i32, i32
  }
  func.func @transform_12(%arg0: i32) -> (i32, i32) {
    %c0_i32 = arith.constant 0 : i32
    %c0_i32_0 = arith.constant 0 : i32
    %c0_i32_1 = arith.constant 0 : i32
    return %c0_i32, %c0_i32_0 : i32, i32
  }
  func.func @transform_13(%arg0: i32) -> (i32, i32) {
    %c0_i32 = arith.constant 0 : i32
    %c0_i32_0 = arith.constant 0 : i32
    %c0_i32_1 = arith.constant 0 : i32
    return %c0_i32, %c0_i32_0 : i32, i32
  }
  func.func @transform_14(%arg0: i32) -> (i32, i32) {
    %c0_i32 = arith.constant 0 : i32
    %c0_i32_0 = arith.constant 0 : i32
    %c0_i32_1 = arith.constant 0 : i32
    return %c0_i32, %c0_i32_0 : i32, i32
  }
  func.func @transform_15(%arg0: i32) -> (i32, i32, i32) {
    %c0_i32 = arith.constant 0 : i32
    %c0_i32_0 = arith.constant 0 : i32
    %c0_i32_1 = arith.constant 0 : i32
    %c0_i32_2 = arith.constant 0 : i32
    return %c0_i32, %c0_i32_0, %c0_i32_1 : i32, i32, i32
  }
  func.func @transform_16(%arg0: i32) -> (i32, i32) {
    %c0_i32 = arith.constant 0 : i32
    %c0_i32_0 = arith.constant 0 : i32
    %c0_i32_1 = arith.constant 0 : i32
    return %c0_i32, %c0_i32_0 : i32, i32
  }
  func.func @transform_17(%arg0: i32) -> (i32, i32) {
    %c0_i32 = arith.constant 0 : i32
    %c0_i32_0 = arith.constant 0 : i32
    %c0_i32_1 = arith.constant 0 : i32
    return %c0_i32, %c0_i32_0 : i32, i32
  }
  func.func @transform_18(%arg0: i32) -> (i32, i32, i32) {
    %c0_i32 = arith.constant 0 : i32
    %c0_i32_0 = arith.constant 0 : i32
    %c0_i32_1 = arith.constant 0 : i32
    return %arg0, %c0_i32, %c0_i32_0 : i32, i32, i32
  }
}

</mosaic_0001>

<llo_original>
// kernel: aspp_pallas.1
$region0: #{aspp_pallas.1}
  #allocation0 [shape = 'u32[]', space=smem, size = 0x4, offset = 0x4, fixed_abs, tag = 'smem constant byte address 0x4 - core index']
  #allocation1 [shape = 'u32[144,128]{1,0:T(1,128)}', space=vmem, size = 0x12000, scoped, tag = 'internal scratch']
  #allocation2 [shape = 'bf16[24,1024]{1,0:T(8,128)(2,1)}', space=vmem, size = 0xc000, scoped, tag = 'scratch operand']
  %s0 = inlined_call_operand.vmem [shape: bf16[2,1024,256], index: 0, kind: input, shape index: {}]
  %s1 = inlined_call_operand.vmem [shape: f32[8,256], index: 1, kind: input, shape index: {}]
  %s2 = inlined_call_operand.vmem [shape: bf16[24,1024], index: 2, kind: input, shape index: {}]
  %s3 = inlined_call_operand.vmem [shape: f32[24,1], index: 3, kind: input, shape index: {}]
  %s4 = inlined_call_operand.vmem [shape: bf16[24,24], index: 4, kind: input, shape index: {}]
  %s5 = inlined_call_operand.vmem [shape: bf16[9,24,24], index: 5, kind: input, shape index: {}]
  %s6 = inlined_call_operand.vmem [shape: bf16[9,24,24], index: 6, kind: input, shape index: {}]
  %s7 = inlined_call_operand.vmem [shape: bf16[9,24,24], index: 7, kind: input, shape index: {}]
  %s8 = inlined_call_operand.vmem [shape: bf16[9,24,24], index: 8, kind: input, shape index: {}]
  %s9 = inlined_call_operand.vmem [shape: f32[24,1], index: 9, kind: input, shape index: {}]
  %s10 = inlined_call_operand.vmem [shape: f32[24,1], index: 10, kind: input, shape index: {}]
  %s11 = inlined_call_operand.vmem [shape: f32[24,1], index: 11, kind: input, shape index: {}]
  %s12 = inlined_call_operand.vmem [shape: f32[24,1], index: 12, kind: input, shape index: {}]
  %s13 = inlined_call_operand.vmem [shape: f32[24,24], index: 13, kind: input, shape index: {}]
  %s14 = inlined_call_operand.vmem [shape: f32[24,1], index: 14, kind: input, shape index: {}]
  %s15 = inlined_call_operand.vmem [shape: f32[5,24,24], index: 15, kind: input, shape index: {}]
  %s16 = inlined_call_operand.vmem [shape: f32[24,24], index: 16, kind: input, shape index: {}]
  %s17 = inlined_call_operand.vmem [shape: f32[24,1], index: 17, kind: input, shape index: {}]
  %s18 = inlined_call_operand.vmem [shape: f32[2,24,256], index: 18, kind: output, shape index: {}]
  %s19 = sld [smem:[#allocation0]]
  $region105: #{aspp_pallas.1} parent=0
    _
  %s21 = ssub.s32 1, %s19
  %s22 = scalar_select 0, %s21, %s19
  loop: start=0, step=1, limit=4
  $region2: #{aspp_pallas.1} parent=0 // loop_pre_header
    _
  $region3: #{aspp_pallas.1} parent=0 // loop_header
    %s24 = sphi 0, %s28
    %p25 = scmp.ge.s32.totalorder %s24, 4
    %s34 = sphi 0, %s36
    %s37 = sphi 0, %s34
    %s38 = sphi 0, %s37
    %s54 = sphi 0, %s38
    %s58 = sphi 0, %s58
    %s60 = sphi 0, %s58
    %s61 = sphi 0, %s60
    %s75 = sphi 0, %s61
    %s79 = sphi 0, %s79
    %s81 = sphi 0, %s79
    %s82 = sphi 0, %s81
    %s96 = sphi 0, %s82
    %s100 = sphi 0, %s100
    %s102 = sphi 0, %s100
    %s103 = sphi 0, %s102
    %s117 = sphi 0, %s103
    %s121 = sphi 0, %s121
    %s123 = sphi 0, %s121
    %s124 = sphi 0, %s123
    %s138 = sphi 0, %s124
    %s142 = sphi 0, %s142
    %s144 = sphi 0, %s142
    %s145 = sphi 0, %s144
    %s159 = sphi 0, %s145
    %s163 = sphi 0, %s163
    %s165 = sphi 0, %s163
    %s166 = sphi 0, %s165
    %s180 = sphi 0, %s166
    %s184 = sphi 0, %s184
    %s186 = sphi 0, %s184
    %s187 = sphi 0, %s186
    %s201 = sphi 0, %s187
    %s205 = sphi 0, %s205
    %s207 = sphi 0, %s205
    %s208 = sphi 0, %s207
    %s222 = sphi 0, %s208
    %s226 = sphi 0, %s226
    %s228 = sphi 0, %s226
    %s229 = sphi 0, %s228
    %s243 = sphi 0, %s229
    %s247 = sphi 0, %s247
    %s249 = sphi 0, %s247
    %s250 = sphi 0, %s249
    %s264 = sphi 0, %s250
    %s268 = sphi 0, %s268
    %s270 = sphi 0, %s268
    %s271 = sphi 0, %s270
    %s285 = sphi 0, %s271
    %s289 = sphi 0, %s289
    %s291 = sphi 0, %s289
    %s292 = sphi 0, %s291
    %s306 = sphi 0, %s292
    %s310 = sphi 0, %s310
    %s312 = sphi 0, %s310
    %s313 = sphi 0, %s312
    %s327 = sphi 0, %s313
    %s331 = sphi 0, %s331
    %s333 = sphi 0, %s331
    %s334 = sphi 0, %s333
    %s348 = sphi 0, %s334
    %s352 = sphi 0, %s352
    %s354 = sphi 0, %s352
    %s355 = sphi 0, %s354
    %s369 = sphi 0, %s355
    %s373 = sphi 0, %s373
    %s375 = sphi 0, %s373
    %s376 = sphi 0, %s375
    %s390 = sphi 0, %s376
    %s394 = sphi 0, %s394
    %s396 = sphi 0, %s394
    %s397 = sphi 0, %s396
    %s411 = sphi 0, %s397
    %s417 = sphi 0, %s419
    %s420 = sphi 0, %s417
    %s421 = sphi 0, %s420
    %s437 = sphi 0, %s421
  $region4: #{aspp_pallas.1} parent=0 // loop_header_branch
    %27 = sbr.rel (%p25) target = $region8
  $region5: #{aspp_pallas.1} parent=0 // loop_body
    %s29 = ssub.s32 %s24, 1
    %s30 = ssub.s32 %s24, 2
    %s31 = sadd.s32 %s24, 1
    %s32 = ssub.s32 %s24, %s31
    %p33 = scmp.eq.s32.totalorder %s32, 0
    %s35 = sadd.s32 %s34, 1
    %s36 = scalar_select %p33, %s34, %s35
    %p39 = pneg %p33
    %p40 = scmp.eq.s32.totalorder %s24, 1
    %p41 = por %p39, %p40
    %p42 = scmp.ne.s32.totalorder %s34, %s37
    %p43 = scmp.eq.s32.totalorder %s24, 0
    %p44 = por %p42, %p43
    %p45 = scmp.ne.s32.totalorder %s34, %s37
    %p46 = scmp.eq.s32.totalorder %s29, 1
    %p47 = por %p45, %p46
    %p48 = scmp.ne.s32.totalorder %s37, %s38
    %p49 = scmp.eq.s32.totalorder %s29, 0
    %p50 = por %p48, %p49
    %p51 = scmp.ne.s32.totalorder %s37, %s38
    %p52 = scmp.eq.s32.totalorder %s30, 1
    %p53 = por %p51, %p52
    %p55 = scmp.ne.s32.totalorder %s38, %s54
    %p56 = scmp.eq.s32.totalorder %s30, 0
    %p57 = por %p55, %p56
    %s59 = sadd.s32 %s58, 1
    %p62 = scmp.eq.s32.totalorder %s24, 1
    %p63 = scmp.ne.s32.totalorder %s58, %s60
    %p64 = scmp.eq.s32.totalorder %s24, 0
    %p65 = por %p63, %p64
    %p66 = scmp.ne.s32.totalorder %s58, %s60
    %p67 = scmp.eq.s32.totalorder %s29, 1
    %p68 = por %p66, %p67
    %p69 = scmp.ne.s32.totalorder %s60, %s61
    %p70 = scmp.eq.s32.totalorder %s29, 0
    %p71 = por %p69, %p70
    %p72 = scmp.ne.s32.totalorder %s60, %s61
    %p73 = scmp.eq.s32.totalorder %s30, 1
    %p74 = por %p72, %p73
    %p76 = scmp.ne.s32.totalorder %s61, %s75
    %p77 = scmp.eq.s32.totalorder %s30, 0
    %p78 = por %p76, %p77
    %s80 = sadd.s32 %s79, 1
    %p83 = scmp.eq.s32.totalorder %s24, 1
    %p84 = scmp.ne.s32.totalorder %s79, %s81
    %p85 = scmp.eq.s32.totalorder %s24, 0
    %p86 = por %p84, %p85
    %p87 = scmp.ne.s32.totalorder %s79, %s81
    %p88 = scmp.eq.s32.totalorder %s29, 1
    %p89 = por %p87, %p88
    %p90 = scmp.ne.s32.totalorder %s81, %s82
    %p91 = scmp.eq.s32.totalorder %s29, 0
    %p92 = por %p90, %p91
    %p93 = scmp.ne.s32.totalorder %s81, %s82
    %p94 = scmp.eq.s32.totalorder %s30, 1
    %p95 = por %p93, %p94
    %p97 = scmp.ne.s32.totalorder %s82, %s96
    %p98 = scmp.eq.s32.totalorder %s30, 0
    %p99 = por %p97, %p98
    %s101 = sadd.s32 %s100, 1
    %p104 = scmp.eq.s32.totalorder %s24, 1
    %p105 = scmp.ne.s32.totalorder %s100, %s102
    %p106 = scmp.eq.s32.totalorder %s24, 0
    %p107 = por %p105, %p106
    %p108 = scmp.ne.s32.totalorder %s100, %s102
    %p109 = scmp.eq.s32.totalorder %s29, 1
    %p110 = por %p108, %p109
    %p111 = scmp.ne.s32.totalorder %s102, %s103
    %p112 = scmp.eq.s32.totalorder %s29, 0
    %p113 = por %p111, %p112
    %p114 = scmp.ne.s32.totalorder %s102, %s103
    %p115 = scmp.eq.s32.totalorder %s30, 1
    %p116 = por %p114, %p115
    %p118 = scmp.ne.s32.totalorder %s103, %s117
    %p119 = scmp.eq.s32.totalorder %s30, 0
    %p120 = por %p118, %p119
    %s122 = sadd.s32 %s121, 1
    %p125 = scmp.eq.s32.totalorder %s24, 1
    %p126 = scmp.ne.s32.totalorder %s121, %s123
    %p127 = scmp.eq.s32.totalorder %s24, 0
    %p128 = por %p126, %p127
    %p129 = scmp.ne.s32.totalorder %s121, %s123
    %p130 = scmp.eq.s32.totalorder %s29, 1
    %p131 = por %p129, %p130
    %p132 = scmp.ne.s32.totalorder %s123, %s124
    %p133 = scmp.eq.s32.totalorder %s29, 0
    %p134 = por %p132, %p133
    %p135 = scmp.ne.s32.totalorder %s123, %s124
    %p136 = scmp.eq.s32.totalorder %s30, 1
    %p137 = por %p135, %p136
    %p139 = scmp.ne.s32.totalorder %s124, %s138
    %p140 = scmp.eq.s32.totalorder %s30, 0
    %p141 = por %p139, %p140
    %s143 = sadd.s32 %s142, 1
    %p146 = scmp.eq.s32.totalorder %s24, 1
    %p147 = scmp.ne.s32.totalorder %s142, %s144
    %p148 = scmp.eq.s32.totalorder %s24, 0
    %p149 = por %p147, %p148
    %p150 = scmp.ne.s32.totalorder %s142, %s144
    %p151 = scmp.eq.s32.totalorder %s29, 1
    %p152 = por %p150, %p151
    %p153 = scmp.ne.s32.totalorder %s144, %s145
    %p154 = scmp.eq.s32.totalorder %s29, 0
    %p155 = por %p153, %p154
    %p156 = scmp.ne.s32.totalorder %s144, %s145
    %p157 = scmp.eq.s32.totalorder %s30, 1
    %p158 = por %p156, %p157
    %p160 = scmp.ne.s32.totalorder %s145, %s159
    %p161 = scmp.eq.s32.totalorder %s30, 0
    %p162 = por %p160, %p161
    %s164 = sadd.s32 %s163, 1
    %p167 = scmp.eq.s32.totalorder %s24, 1
    %p168 = scmp.ne.s32.totalorder %s163, %s165
    %p169 = scmp.eq.s32.totalorder %s24, 0
    %p170 = por %p168, %p169
    %p171 = scmp.ne.s32.totalorder %s163, %s165
    %p172 = scmp.eq.s32.totalorder %s29, 1
    %p173 = por %p171, %p172
    %p174 = scmp.ne.s32.totalorder %s165, %s166
    %p175 = scmp.eq.s32.totalorder %s29, 0
    %p176 = por %p174, %p175
    %p177 = scmp.ne.s32.totalorder %s165, %s166
    %p178 = scmp.eq.s32.totalorder %s30, 1
    %p179 = por %p177, %p178
    %p181 = scmp.ne.s32.totalorder %s166, %s180
    %p182 = scmp.eq.s32.totalorder %s30, 0
    %p183 = por %p181, %p182
    %s185 = sadd.s32 %s184, 1
    %p188 = scmp.eq.s32.totalorder %s24, 1
    %p189 = scmp.ne.s32.totalorder %s184, %s186
    %p190 = scmp.eq.s32.totalorder %s24, 0
    %p191 = por %p189, %p190
    %p192 = scmp.ne.s32.totalorder %s184, %s186
    %p193 = scmp.eq.s32.totalorder %s29, 1
    %p194 = por %p192, %p193
    %p195 = scmp.ne.s32.totalorder %s186, %s187
    %p196 = scmp.eq.s32.totalorder %s29, 0
    %p197 = por %p195, %p196
    %p198 = scmp.ne.s32.totalorder %s186, %s187
    %p199 = scmp.eq.s32.totalorder %s30, 1
    %p200 = por %p198, %p199
    %p202 = scmp.ne.s32.totalorder %s187, %s201
    %p203 = scmp.eq.s32.totalorder %s30, 0
    %p204 = por %p202, %p203
    %s206 = sadd.s32 %s205, 1
    %p209 = scmp.eq.s32.totalorder %s24, 1
    %p210 = scmp.ne.s32.totalorder %s205, %s207
    %p211 = scmp.eq.s32.totalorder %s24, 0
    %p212 = por %p210, %p211
    %p213 = scmp.ne.s32.totalorder %s205, %s207
    %p214 = scmp.eq.s32.totalorder %s29, 1
    %p215 = por %p213, %p214
    %p216 = scmp.ne.s32.totalorder %s207, %s208
    %p217 = scmp.eq.s32.totalorder %s29, 0
    %p218 = por %p216, %p217
    %p219 = scmp.ne.s32.totalorder %s207, %s208
    %p220 = scmp.eq.s32.totalorder %s30, 1
    %p221 = por %p219, %p220
    %p223 = scmp.ne.s32.totalorder %s208, %s222
    %p224 = scmp.eq.s32.totalorder %s30, 0
    %p225 = por %p223, %p224
    %s227 = sadd.s32 %s226, 1
    %p230 = scmp.eq.s32.totalorder %s24, 1
    %p231 = scmp.ne.s32.totalorder %s226, %s228
    %p232 = scmp.eq.s32.totalorder %s24, 0
    %p233 = por %p231, %p232
    %p234 = scmp.ne.s32.totalorder %s226, %s228
    %p235 = scmp.eq.s32.totalorder %s29, 1
    %p236 = por %p234, %p235
    %p237 = scmp.ne.s32.totalorder %s228, %s229
    %p238 = scmp.eq.s32.totalorder %s29, 0
    %p239 = por %p237, %p238
    %p240 = scmp.ne.s32.totalorder %s228, %s229
    %p241 = scmp.eq.s32.totalorder %s30, 1
    %p242 = por %p240, %p241
    %p244 = scmp.ne.s32.totalorder %s229, %s243
    %p245 = scmp.eq.s32.totalorder %s30, 0
    %p246 = por %p244, %p245
    %s248 = sadd.s32 %s247, 1
    %p251 = scmp.eq.s32.totalorder %s24, 1
    %p252 = scmp.ne.s32.totalorder %s247, %s249
    %p253 = scmp.eq.s32.totalorder %s24, 0
    %p254 = por %p252, %p253
    %p255 = scmp.ne.s32.totalorder %s247, %s249
    %p256 = scmp.eq.s32.totalorder %s29, 1
    %p257 = por %p255, %p256
    %p258 = scmp.ne.s32.totalorder %s249, %s250
    %p259 = scmp.eq.s32.totalorder %s29, 0
    %p260 = por %p258, %p259
    %p261 = scmp.ne.s32.totalorder %s249, %s250
    %p262 = scmp.eq.s32.totalorder %s30, 1
    %p263 = por %p261, %p262
    %p265 = scmp.ne.s32.totalorder %s250, %s264
    %p266 = scmp.eq.s32.totalorder %s30, 0
    %p267 = por %p265, %p266
    %s269 = sadd.s32 %s268, 1
    %p272 = scmp.eq.s32.totalorder %s24, 1
    %p273 = scmp.ne.s32.totalorder %s268, %s270
    %p274 = scmp.eq.s32.totalorder %s24, 0
    %p275 = por %p273, %p274
    %p276 = scmp.ne.s32.totalorder %s268, %s270
    %p277 = scmp.eq.s32.totalorder %s29, 1
    %p278 = por %p276, %p277
    %p279 = scmp.ne.s32.totalorder %s270, %s271
    %p280 = scmp.eq.s32.totalorder %s29, 0
    %p281 = por %p279, %p280
    %p282 = scmp.ne.s32.totalorder %s270, %s271
    %p283 = scmp.eq.s32.totalorder %s30, 1
    %p284 = por %p282, %p283
    %p286 = scmp.ne.s32.totalorder %s271, %s285
    %p287 = scmp.eq.s32.totalorder %s30, 0
    %p288 = por %p286, %p287
    %s290 = sadd.s32 %s289, 1
    %p293 = scmp.eq.s32.totalorder %s24, 1
    %p294 = scmp.ne.s32.totalorder %s289, %s291
    %p295 = scmp.eq.s32.totalorder %s24, 0
    %p296 = por %p294, %p295
    %p297 = scmp.ne.s32.totalorder %s289, %s291
    %p298 = scmp.eq.s32.totalorder %s29, 1
    %p299 = por %p297, %p298
    %p300 = scmp.ne.s32.totalorder %s291, %s292
    %p301 = scmp.eq.s32.totalorder %s29, 0
    %p302 = por %p300, %p301
    %p303 = scmp.ne.s32.totalorder %s291, %s292
    %p304 = scmp.eq.s32.totalorder %s30, 1
    %p305 = por %p303, %p304
    %p307 = scmp.ne.s32.totalorder %s292, %s306
    %p308 = scmp.eq.s32.totalorder %s30, 0
    %p309 = por %p307, %p308
    %s311 = sadd.s32 %s310, 1
    %p314 = scmp.eq.s32.totalorder %s24, 1
    %p315 = scmp.ne.s32.totalorder %s310, %s312
    %p316 = scmp.eq.s32.totalorder %s24, 0
    %p317 = por %p315, %p316
    %p318 = scmp.ne.s32.totalorder %s310, %s312
    %p319 = scmp.eq.s32.totalorder %s29, 1
    %p320 = por %p318, %p319
    %p321 = scmp.ne.s32.totalorder %s312, %s313
    %p322 = scmp.eq.s32.totalorder %s29, 0
    %p323 = por %p321, %p322
    %p324 = scmp.ne.s32.totalorder %s312, %s313
    %p325 = scmp.eq.s32.totalorder %s30, 1
    %p326 = por %p324, %p325
    %p328 = scmp.ne.s32.totalorder %s313, %s327
    %p329 = scmp.eq.s32.totalorder %s30, 0
    %p330 = por %p328, %p329
    %s332 = sadd.s32 %s331, 1
    %p335 = scmp.eq.s32.totalorder %s24, 1
    %p336 = scmp.ne.s32.totalorder %s331, %s333
    %p337 = scmp.eq.s32.totalorder %s24, 0
    %p338 = por %p336, %p337
    %p339 = scmp.ne.s32.totalorder %s331, %s333
    %p340 = scmp.eq.s32.totalorder %s29, 1
    %p341 = por %p339, %p340
    %p342 = scmp.ne.s32.totalorder %s333, %s334
    %p343 = scmp.eq.s32.totalorder %s29, 0
    %p344 = por %p342, %p343
    %p345 = scmp.ne.s32.totalorder %s333, %s334
    %p346 = scmp.eq.s32.totalorder %s30, 1
    %p347 = por %p345, %p346
    %p349 = scmp.ne.s32.totalorder %s334, %s348
    %p350 = scmp.eq.s32.totalorder %s30, 0
    %p351 = por %p349, %p350
    %s353 = sadd.s32 %s352, 1
    %p356 = scmp.eq.s32.totalorder %s24, 1
    %p357 = scmp.ne.s32.totalorder %s352, %s354
    %p358 = scmp.eq.s32.totalorder %s24, 0
    %p359 = por %p357, %p358
    %p360 = scmp.ne.s32.totalorder %s352, %s354
    %p361 = scmp.eq.s32.totalorder %s29, 1
    %p362 = por %p360, %p361
    %p363 = scmp.ne.s32.totalorder %s354, %s355
    %p364 = scmp.eq.s32.totalorder %s29, 0
    %p365 = por %p363, %p364
    %p366 = scmp.ne.s32.totalorder %s354, %s355
    %p367 = scmp.eq.s32.totalorder %s30, 1
    %p368 = por %p366, %p367
    %p370 = scmp.ne.s32.totalorder %s355, %s369
    %p371 = scmp.eq.s32.totalorder %s30, 0
    %p372 = por %p370, %p371
    %s374 = sadd.s32 %s373, 1
    %p377 = scmp.eq.s32.totalorder %s24, 1
    %p378 = scmp.ne.s32.totalorder %s373, %s375
    %p379 = scmp.eq.s32.totalorder %s24, 0
    %p380 = por %p378, %p379
    %p381 = scmp.ne.s32.totalorder %s373, %s375
    %p382 = scmp.eq.s32.totalorder %s29, 1
    %p383 = por %p381, %p382
    %p384 = scmp.ne.s32.totalorder %s375, %s376
    %p385 = scmp.eq.s32.totalorder %s29, 0
    %p386 = por %p384, %p385
    %p387 = scmp.ne.s32.totalorder %s375, %s376
    %p388 = scmp.eq.s32.totalorder %s30, 1
    %p389 = por %p387, %p388
    %p391 = scmp.ne.s32.totalorder %s376, %s390
    %p392 = scmp.eq.s32.totalorder %s30, 0
    %p393 = por %p391, %p392
    %s395 = sadd.s32 %s394, 1
    %p398 = scmp.eq.s32.totalorder %s24, 1
    %p399 = scmp.ne.s32.totalorder %s394, %s396
    %p400 = scmp.eq.s32.totalorder %s24, 0
    %p401 = por %p399, %p400
    %p402 = scmp.ne.s32.totalorder %s394, %s396
    %p403 = scmp.eq.s32.totalorder %s29, 1
    %p404 = por %p402, %p403
    %p405 = scmp.ne.s32.totalorder %s396, %s397
    %p406 = scmp.eq.s32.totalorder %s29, 0
    %p407 = por %p405, %p406
    %p408 = scmp.ne.s32.totalorder %s396, %s397
    %p409 = scmp.eq.s32.totalorder %s30, 1
    %p410 = por %p408, %p409
    %p412 = scmp.ne.s32.totalorder %s397, %s411
    %p413 = scmp.eq.s32.totalorder %s30, 0
    %p414 = por %p412, %p413
    %s415 = ssub.s32 %s24, %s31
    %p416 = scmp.eq.s32.totalorder %s415, 0
    %s418 = sadd.s32 %s417, 1
    %s419 = scalar_select %p416, %s417, %s418
    %p422 = pneg %p416
    %p423 = scmp.eq.s32.totalorder %s24, 1
    %p424 = por %p422, %p423
    %p425 = scmp.ne.s32.totalorder %s417, %s420
    %p426 = scmp.eq.s32.totalorder %s24, 0
    %p427 = por %p425, %p426
    %p428 = scmp.ne.s32.totalorder %s417, %s420
    %p429 = scmp.eq.s32.totalorder %s29, 1
    %p430 = por %p428, %p429
    %p431 = scmp.ne.s32.totalorder %s420, %s421
    %p432 = scmp.eq.s32.totalorder %s29, 0
    %p433 = por %p431, %p432
    %p434 = scmp.ne.s32.totalorder %s420, %s421
    %p435 = scmp.eq.s32.totalorder %s30, 1
    %p436 = por %p434, %p435
    %p438 = scmp.ne.s32.totalorder %s421, %s437
    %p439 = scmp.eq.s32.totalorder %s30, 0
    %p440 = por %p438, %p439
    %p441 = scmp.le.s32.totalorder 1, %s24
    %p442 = scmp.lt.s32.totalorder %s24, 3
    %p443 = pnand %p441, %p442
    %p444 = pneg %p443
    // Predicated region
    $region9: #{aspp_pallas.1} parent=5 // pred_check
      _
    $region10: #{aspp_pallas.1} parent=5 // pred_check_branch
      %446 = sbr.rel (%p443) target = $region12
    $region11: #{aspp_pallas.1} parent=5 // pred_region
      %s447 = ssub.s32 %s24, 1
      // Predicated region
      $region13: #{aspp_pallas.1} parent=11 // pred_check
        %p448 = pneg %p71
      $region14: #{aspp_pallas.1} parent=11 // pred_check_branch
        %450 = sbr.rel (%p448) target = $region16
      $region15: #{aspp_pallas.1} parent=11 // pred_region
        _
      $region16: #{aspp_pallas.1} parent=11 // pred_fallthru
        _
      // Predicated region
      $region17: #{aspp_pallas.1} parent=11 // pred_check
        %p451 = pneg %p92
      $region18: #{aspp_pallas.1} parent=11 // pred_check_branch
        %453 = sbr.rel (%p451) target = $region20
      $region19: #{aspp_pallas.1} parent=11 // pred_region
        _
      $region20: #{aspp_pallas.1} parent=11 // pred_fallthru
        _
      // Predicated region
      $region21: #{aspp_pallas.1} parent=11 // pred_check
        %p454 = pneg %p113
      $region22: #{aspp_pallas.1} parent=11 // pred_check_branch
        %456 = sbr.rel (%p454) target = $region24
      $region23: #{aspp_pallas.1} parent=11 // pred_region
        _
      $region24: #{aspp_pallas.1} parent=11 // pred_fallthru
        _
      // Predicated region
      $region25: #{aspp_pallas.1} parent=11 // pred_check
        %p457 = pneg %p134
      $region26: #{aspp_pallas.1} parent=11 // pred_check_branch
        %459 = sbr.rel (%p457) target = $region28
      $region27: #{aspp_pallas.1} parent=11 // pred_region
        _
      $region28: #{aspp_pallas.1} parent=11 // pred_fallthru
        _
      // Predicated region
      $region29: #{aspp_pallas.1} parent=11 // pred_check
        %p460 = pneg %p155
      $region30: #{aspp_pallas.1} parent=11 // pred_check_branch
        %462 = sbr.rel (%p460) target = $region32
      $region31: #{aspp_pallas.1} parent=11 // pred_region
        _
      $region32: #{aspp_pallas.1} parent=11 // pred_fallthru
        _
      // Predicated region
      $region33: #{aspp_pallas.1} parent=11 // pred_check
        %p463 = pneg %p176
      $region34: #{aspp_pallas.1} parent=11 // pred_check_branch
        %465 = sbr.rel (%p463) target = $region36
      $region35: #{aspp_pallas.1} parent=11 // pred_region
        _
      $region36: #{aspp_pallas.1} parent=11 // pred_fallthru
        _
      // Predicated region
      $region37: #{aspp_pallas.1} parent=11 // pred_check
        %p466 = pneg %p197
      $region38: #{aspp_pallas.1} parent=11 // pred_check_branch
        %468 = sbr.rel (%p466) target = $region40
      $region39: #{aspp_pallas.1} parent=11 // pred_region
        _
      $region40: #{aspp_pallas.1} parent=11 // pred_fallthru
        _
      // Predicated region
      $region41: #{aspp_pallas.1} parent=11 // pred_check
        %p469 = pneg %p218
      $region42: #{aspp_pallas.1} parent=11 // pred_check_branch
        %471 = sbr.rel (%p469) target = $region44
      $region43: #{aspp_pallas.1} parent=11 // pred_region
        _
      $region44: #{aspp_pallas.1} parent=11 // pred_fallthru
        _
      // Predicated region
      $region45: #{aspp_pallas.1} parent=11 // pred_check
        %p472 = pneg %p239
      $region46: #{aspp_pallas.1} parent=11 // pred_check_branch
        %474 = sbr.rel (%p472) target = $region48
      $region47: #{aspp_pallas.1} parent=11 // pred_region
        _
      $region48: #{aspp_pallas.1} parent=11 // pred_fallthru
        _
      // Predicated region
      $region49: #{aspp_pallas.1} parent=11 // pred_check
        %p475 = pneg %p260
      $region50: #{aspp_pallas.1} parent=11 // pred_check_branch
        %477 = sbr.rel (%p475) target = $region52
      $region51: #{aspp_pallas.1} parent=11 // pred_region
        _
      $region52: #{aspp_pallas.1} parent=11 // pred_fallthru
        _
      // Predicated region
      $region53: #{aspp_pallas.1} parent=11 // pred_check
        %p478 = pneg %p281
      $region54: #{aspp_pallas.1} parent=11 // pred_check_branch
        %480 = sbr.rel (%p478) target = $region56
      $region55: #{aspp_pallas.1} parent=11 // pred_region
        _
      $region56: #{aspp_pallas.1} parent=11 // pred_fallthru
        _
      // Predicated region
      $region57: #{aspp_pallas.1} parent=11 // pred_check
        %p481 = pneg %p302
      $region58: #{aspp_pallas.1} parent=11 // pred_check_branch
        %483 = sbr.rel (%p481) target = $region60
      $region59: #{aspp_pallas.1} parent=11 // pred_region
        _
      $region60: #{aspp_pallas.1} parent=11 // pred_fallthru
        _
      // Predicated region
      $region61: #{aspp_pallas.1} parent=11 // pred_check
        %p484 = pneg %p323
      $region62: #{aspp_pallas.1} parent=11 // pred_check_branch
        %486 = sbr.rel (%p484) target = $region64
      $region63: #{aspp_pallas.1} parent=11 // pred_region
        _
      $region64: #{aspp_pallas.1} parent=11 // pred_fallthru
        _
      // Predicated region
      $region65: #{aspp_pallas.1} parent=11 // pred_check
        %p487 = pneg %p344
      $region66: #{aspp_pallas.1} parent=11 // pred_check_branch
        %489 = sbr.rel (%p487) target = $region68
      $region67: #{aspp_pallas.1} parent=11 // pred_region
        _
      $region68: #{aspp_pallas.1} parent=11 // pred_fallthru
        _
      // Predicated region
      $region69: #{aspp_pallas.1} parent=11 // pred_check
        %p490 = pneg %p365
      $region70: #{aspp_pallas.1} parent=11 // pred_check_branch
        %492 = sbr.rel (%p490) target = $region72
      $region71: #{aspp_pallas.1} parent=11 // pred_region
        _
      $region72: #{aspp_pallas.1} parent=11 // pred_fallthru
        _
      // Predicated region
      $region73: #{aspp_pallas.1} parent=11 // pred_check
        %p493 = pneg %p386
      $region74: #{aspp_pallas.1} parent=11 // pred_check_branch
        %495 = sbr.rel (%p493) target = $region76
      $region75: #{aspp_pallas.1} parent=11 // pred_region
        _
      $region76: #{aspp_pallas.1} parent=11 // pred_fallthru
        _
      // Predicated region
      $region77: #{aspp_pallas.1} parent=11 // pred_check
        %p496 = pneg %p407
      $region78: #{aspp_pallas.1} parent=11 // pred_check_branch
        %498 = sbr.rel (%p496) target = $region80
      $region79: #{aspp_pallas.1} parent=11 // pred_region
        _
      $region80: #{aspp_pallas.1} parent=11 // pred_fallthru
        _
    $region12: #{aspp_pallas.1} parent=5 // pred_fallthru
      _
    %p499 = scmp.lt.s32.totalorder %s24, 2
    // Predicated region
    $region81: #{aspp_pallas.1} parent=5 // pred_check
      %p500 = pneg %p499
    $region82: #{aspp_pallas.1} parent=5 // pred_check_branch
      %502 = sbr.rel (%p500) target = $region84
    $region83: #{aspp_pallas.1} parent=5 // pred_region
      // Predicated region
      $region85: #{aspp_pallas.1} parent=83 // pred_check
        %p503 = pneg %p44
      $region86: #{aspp_pallas.1} parent=83 // pred_check_branch
        %505 = sbr.rel (%p503) target = $region88
      $region87: #{aspp_pallas.1} parent=83 // pred_region
        %p506 = scmp.lt.s32.totalorder %s24, 1
        %s507 = scalar_select %p506, %s24, 1
        %s508 = smul.addr %s507, 256
        %s509 = smul.addr %s508, 4
        %s510 = scalar_lea.vmem %s0, %s509
      $region88: #{aspp_pallas.1} parent=83 // pred_fallthru
        _
    $region84: #{aspp_pallas.1} parent=5 // pred_fallthru
      _
    %p511 = scmp.le.s32.totalorder 1, %s24
    %p512 = scmp.lt.s32.totalorder %s24, 3
    %p513 = pnand %p511, %p512
    %p514 = pneg %p513
    // Predicated region
    $region89: #{aspp_pallas.1} parent=5 // pred_check
      _
    $region90: #{aspp_pallas.1} parent=5 // pred_check_branch
      %516 = sbr.rel (%p513) target = $region92
    $region91: #{aspp_pallas.1} parent=5 // pred_region
      %s517 = ssub.s32 %s24, 1
      %p518 = scmp.lt.s32.totalorder %s29, 1
      %s519 = scalar_select %p518, %s29, 1
      %s520 = smul.addr %s519, 256
      %s521 = smul.addr %s520, 4
      %s522 = scalar_lea.vmem %s0, %s521
      %p523 = pneg %p50
      %p524 = pneg %p47
      %p525 = pneg %p71
      %p526 = pneg %p68
      %p527 = pneg %p92
      %p528 = pneg %p89
      %p529 = pneg %p113
      %p530 = pneg %p110
      %p531 = pneg %p134
      %p532 = pneg %p131
      %p533 = pneg %p155
      %p534 = pneg %p152
      %p535 = pneg %p176
      %p536 = pneg %p173
      %p537 = pneg %p197
      %p538 = pneg %p194
      %p539 = pneg %p218
      %p540 = pneg %p215
      %p541 = pneg %p239
      %p542 = pneg %p236
      %p543 = pneg %p260
      %p544 = pneg %p257
      %p545 = pneg %p281
      %p546 = pneg %p278
      %p547 = pneg %p302
      %p548 = pneg %p299
      %p549 = pneg %p323
      %p550 = pneg %p320
      %p551 = pneg %p344
      %p552 = pneg %p341
      %p553 = pneg %p365
      %p554 = pneg %p362
      %p555 = pneg %p386
      %p556 = pneg %p383
      %p557 = pneg %p407
      %p558 = pneg %p404
      %p559 = pneg %p433
      %p560 = pneg %p430
      %p561 = scmp.lt.s32.totalorder %s29, 1
      %s562 = scalar_select %p561, %s29, 1
      %s563 = smul.addr %s562, 6
      %s564 = smul.addr %s563, 8
      %s565 = scalar_lea.vmem %s18, %s564
      %p566 = scmp.lt.s32.totalorder %s29, 1
      %s567 = scalar_select %p566, %s29, 1
      %s568 = smul.addr %s567, 256
      %s569 = smul.addr %s568, 4
      %s570 = scalar_lea.vmem %s0, %s569
      %p571 = scmp.lt.s32.totalorder %s29, 1
      %s572 = scalar_select %p571, %s29, 1
      %s573 = smul.addr %s572, 6
      %s574 = smul.addr %s573, 8
      %s575 = scalar_lea.vmem %s18, %s574
      %577 = vst [vmem:[#allocation2] sm:$0xff] 0
      %578 = vst [vmem:[#allocation2 + $0x8] sm:$0xf] 0
      %579 = vst [vmem:[#allocation2 + $0x20] sm:$0xff] 0
      %580 = vst [vmem:[#allocation2 + $0x28] sm:$0xf] 0
      %581 = vst [vmem:[#allocation2 + $0x40] sm:$0xff] 0
      %582 = vst [vmem:[#allocation2 + $0x48] sm:$0xf] 0
      %583 = vst [vmem:[#allocation2 + $0x14] sm:$0xff] 0
      %584 = vst [vmem:[#allocation2 + $0x1c] sm:$0xf] 0
      %585 = vst [vmem:[#allocation2 + $0x34] sm:$0xff] 0
      %586 = vst [vmem:[#allocation2 + $0x3c] sm:$0xf] 0
      %587 = vst [vmem:[#allocation2 + $0x54] sm:$0xff] 0
      %588 = vst [vmem:[#allocation2 + $0x5c] sm:$0xf] 0
      %v589 = vld [vmem:[%s2] sm:$0xff]
      %v590 = vld [vmem:[%s2 + $0x8] sm:$0xff]
      %v591 = vld [vmem:[%s2 + $0x10] sm:$0xff]
      %v592 = vld [vmem:[%s2 + $0x18] sm:$0xff]
      %v593 = vld [vmem:[%s2 + $0x20] sm:$0xff]
      %v594 = vld [vmem:[%s2 + $0x28] sm:$0xff]
      %v595 = vld [vmem:[%s2 + $0x30] sm:$0xff]
      %v596 = vld [vmem:[%s2 + $0x38] sm:$0xff]
      %v597 = vld [vmem:[%s2 + $0x40] sm:$0xff]
      %v598 = vld [vmem:[%s2 + $0x48] sm:$0xff]
      %v599 = vld [vmem:[%s2 + $0x50] sm:$0xff]
      %v600 = vld [vmem:[%s2 + $0x58] sm:$0xff]
      %v601 = vld [vmem:[%s570] sm:$0xff]
      %v602 = vld [vmem:[%s570 + $0x8] sm:$0xff]
      %v603 = vld [vmem:[%s570 + $0x10] sm:$0xff]
      %v604 = vld [vmem:[%s570 + $0x18] sm:$0xff]
      %v605 = vld [vmem:[%s570 + $0x20] sm:$0xff]
      %v606 = vld [vmem:[%s570 + $0x28] sm:$0xff]
      %v607 = vld [vmem:[%s570 + $0x30] sm:$0xff]
      %v608 = vld [vmem:[%s570 + $0x38] sm:$0xff]
      %v609 = vld [vmem:[%s570 + $0x40] sm:$0xff]
      %v610 = vld [vmem:[%s570 + $0x48] sm:$0xff]
      %v611 = vld [vmem:[%s570 + $0x50] sm:$0xff]
      %v612 = vld [vmem:[%s570 + $0x58] sm:$0xff]
      %v613 = vld [vmem:[%s570 + $0x60] sm:$0xff]
      %v614 = vld [vmem:[%s570 + $0x68] sm:$0xff]
      %v615 = vld [vmem:[%s570 + $0x70] sm:$0xff]
      %v616 = vld [vmem:[%s570 + $0x78] sm:$0xff]
      %v617 = vld [vmem:[%s570 + $0x80] sm:$0xff]
      %v618 = vld [vmem:[%s570 + $0x88] sm:$0xff]
      %v619 = vld [vmem:[%s570 + $0x90] sm:$0xff]
      %v620 = vld [vmem:[%s570 + $0x98] sm:$0xff]
      %v621 = vld [vmem:[%s570 + $0xa0] sm:$0xff]
      %v622 = vld [vmem:[%s570 + $0xa8] sm:$0xff]
      %v623 = vld [vmem:[%s570 + $0xb0] sm:$0xff]
      %v624 = vld [vmem:[%s570 + $0xb8] sm:$0xff]
      %v625 = vld [vmem:[%s570 + $0xc0] sm:$0xff]
      %v626 = vld [vmem:[%s570 + $0xc8] sm:$0xff]
      %v627 = vld [vmem:[%s570 + $0xd0] sm:$0xff]
      %v628 = vld [vmem:[%s570 + $0xd8] sm:$0xff]
      %v629 = vld [vmem:[%s570 + $0xe0] sm:$0xff]
      %v630 = vld [vmem:[%s570 + $0xe8] sm:$0xff]
      %v631 = vld [vmem:[%s570 + $0xf0] sm:$0xff]
      %v632 = vld [vmem:[%s570 + $0xf8] sm:$0xff]
      %v633 = vld [vmem:[%s570 + $0x100] sm:$0xff]
      %v634 = vld [vmem:[%s570 + $0x108] sm:$0xff]
      %v635 = vld [vmem:[%s570 + $0x110] sm:$0xff]
      %v636 = vld [vmem:[%s570 + $0x118] sm:$0xff]
      %v637 = vld [vmem:[%s570 + $0x120] sm:$0xff]
      %v638 = vld [vmem:[%s570 + $0x128] sm:$0xff]
      %v639 = vld [vmem:[%s570 + $0x130] sm:$0xff]
      %v640 = vld [vmem:[%s570 + $0x138] sm:$0xff]
      %v641 = vld [vmem:[%s570 + $0x140] sm:$0xff]
      %v642 = vld [vmem:[%s570 + $0x148] sm:$0xff]
      %v643 = vld [vmem:[%s570 + $0x150] sm:$0xff]
      %v644 = vld [vmem:[%s570 + $0x158] sm:$0xff]
      %v645 = vld [vmem:[%s570 + $0x160] sm:$0xff]
      %v646 = vld [vmem:[%s570 + $0x168] sm:$0xff]
      %v647 = vld [vmem:[%s570 + $0x170] sm:$0xff]
      %v648 = vld [vmem:[%s570 + $0x178] sm:$0xff]
      %v649 = vld [vmem:[%s570 + $0x180] sm:$0xff]
      %v650 = vld [vmem:[%s570 + $0x188] sm:$0xff]
      %v651 = vld [vmem:[%s570 + $0x190] sm:$0xff]
      %v652 = vld [vmem:[%s570 + $0x198] sm:$0xff]
      %v653 = vld [vmem:[%s570 + $0x1a0] sm:$0xff]
      %v654 = vld [vmem:[%s570 + $0x1a8] sm:$0xff]
      %v655 = vld [vmem:[%s570 + $0x1b0] sm:$0xff]
      %v656 = vld [vmem:[%s570 + $0x1b8] sm:$0xff]
      %v657 = vld [vmem:[%s570 + $0x1c0] sm:$0xff]
      %v658 = vld [vmem:[%s570 + $0x1c8] sm:$0xff]
      %v659 = vld [vmem:[%s570 + $0x1d0] sm:$0xff]
      %v660 = vld [vmem:[%s570 + $0x1d8] sm:$0xff]
      %v661 = vld [vmem:[%s570 + $0x1e0] sm:$0xff]
      %v662 = vld [vmem:[%s570 + $0x1e8] sm:$0xff]
      %v663 = vld [vmem:[%s570 + $0x1f0] sm:$0xff]
      %v664 = vld [vmem:[%s570 + $0x1f8] sm:$0xff]
      %v665 = vld [vmem:[%s570 + $0x200] sm:$0xff]
      %v666 = vld [vmem:[%s570 + $0x208] sm:$0xff]
      %v667 = vld [vmem:[%s570 + $0x210] sm:$0xff]
      %v668 = vld [vmem:[%s570 + $0x218] sm:$0xff]
      %v669 = vld [vmem:[%s570 + $0x220] sm:$0xff]
      %v670 = vld [vmem:[%s570 + $0x228] sm:$0xff]
      %v671 = vld [vmem:[%s570 + $0x230] sm:$0xff]
      %v672 = vld [vmem:[%s570 + $0x238] sm:$0xff]
      %v673 = vld [vmem:[%s570 + $0x240] sm:$0xff]
      %v674 = vld [vmem:[%s570 + $0x248] sm:$0xff]
      %v675 = vld [vmem:[%s570 + $0x250] sm:$0xff]
      %v676 = vld [vmem:[%s570 + $0x258] sm:$0xff]
      %v677 = vld [vmem:[%s570 + $0x260] sm:$0xff]
      %v678 = vld [vmem:[%s570 + $0x268] sm:$0xff]
      %v679 = vld [vmem:[%s570 + $0x270] sm:$0xff]
      %v680 = vld [vmem:[%s570 + $0x278] sm:$0xff]
      %v681 = vld [vmem:[%s570 + $0x280] sm:$0xff]
      %v682 = vld [vmem:[%s570 + $0x288] sm:$0xff]
      %v683 = vld [vmem:[%s570 + $0x290] sm:$0xff]
      %v684 = vld [vmem:[%s570 + $0x298] sm:$0xff]
      %v685 = vld [vmem:[%s570 + $0x2a0] sm:$0xff]
      %v686 = vld [vmem:[%s570 + $0x2a8] sm:$0xff]
      %v687 = vld [vmem:[%s570 + $0x2b0] sm:$0xff]
      %v688 = vld [vmem:[%s570 + $0x2b8] sm:$0xff]
      %v689 = vld [vmem:[%s570 + $0x2c0] sm:$0xff]
      %v690 = vld [vmem:[%s570 + $0x2c8] sm:$0xff]
      %v691 = vld [vmem:[%s570 + $0x2d0] sm:$0xff]
      %v692 = vld [vmem:[%s570 + $0x2d8] sm:$0xff]
      %v693 = vld [vmem:[%s570 + $0x2e0] sm:$0xff]
      %v694 = vld [vmem:[%s570 + $0x2e8] sm:$0xff]
      %v695 = vld [vmem:[%s570 + $0x2f0] sm:$0xff]
      %v696 = vld [vmem:[%s570 + $0x2f8] sm:$0xff]
      %v697 = vld [vmem:[%s570 + $0x300] sm:$0xff]
      %v698 = vld [vmem:[%s570 + $0x308] sm:$0xff]
      %v699 = vld [vmem:[%s570 + $0x310] sm:$0xff]
      %v700 = vld [vmem:[%s570 + $0x318] sm:$0xff]
      %v701 = vld [vmem:[%s570 + $0x320] sm:$0xff]
      %v702 = vld [vmem:[%s570 + $0x328] sm:$0xff]
      %v703 = vld [vmem:[%s570 + $0x330] sm:$0xff]
      %v704 = vld [vmem:[%s570 + $0x338] sm:$0xff]
      %v705 = vld [vmem:[%s570 + $0x340] sm:$0xff]
      %v706 = vld [vmem:[%s570 + $0x348] sm:$0xff]
      %v707 = vld [vmem:[%s570 + $0x350] sm:$0xff]
      %v708 = vld [vmem:[%s570 + $0x358] sm:$0xff]
      %v709 = vld [vmem:[%s570 + $0x360] sm:$0xff]
      %v710 = vld [vmem:[%s570 + $0x368] sm:$0xff]
      %v711 = vld [vmem:[%s570 + $0x370] sm:$0xff]
      %v712 = vld [vmem:[%s570 + $0x378] sm:$0xff]
      %v713 = vld [vmem:[%s570 + $0x380] sm:$0xff]
      %v714 = vld [vmem:[%s570 + $0x388] sm:$0xff]
      %v715 = vld [vmem:[%s570 + $0x390] sm:$0xff]
      %v716 = vld [vmem:[%s570 + $0x398] sm:$0xff]
      %v717 = vld [vmem:[%s570 + $0x3a0] sm:$0xff]
      %v718 = vld [vmem:[%s570 + $0x3a8] sm:$0xff]
      %v719 = vld [vmem:[%s570 + $0x3b0] sm:$0xff]
      %v720 = vld [vmem:[%s570 + $0x3b8] sm:$0xff]
      %v721 = vld [vmem:[%s570 + $0x3c0] sm:$0xff]
      %v722 = vld [vmem:[%s570 + $0x3c8] sm:$0xff]
      %v723 = vld [vmem:[%s570 + $0x3d0] sm:$0xff]
      %v724 = vld [vmem:[%s570 + $0x3d8] sm:$0xff]
      %v725 = vld [vmem:[%s570 + $0x3e0] sm:$0xff]
      %v726 = vld [vmem:[%s570 + $0x3e8] sm:$0xff]
      %v727 = vld [vmem:[%s570 + $0x3f0] sm:$0xff]
      %v728 = vld [vmem:[%s570 + $0x3f8] sm:$0xff]
      %v729 = vld [vmem:[%s3] sm:$0xff]
      %v730 = vld [vmem:[%s3 + $0x8] sm:$0xff]
      %v731 = vld [vmem:[%s3 + $0x10] sm:$0xff]
      %733 = vset.pattern.permute.xlu0 0
      %734 = vperm.xlu0 %733, %v729
      %v735 = vpop.permute.xlu0 %734
      %738 = vset.pattern.permute.xlu0 0
      %739 = vperm.xlu0 %738, %v730
      %v740 = vpop.permute.xlu0 %739
      %743 = vset.pattern.permute.xlu0 0
      %744 = vperm.xlu0 %743, %v731
      %v745 = vpop.permute.xlu0 %744
      %v759 = vunpack.c.l.b16 %v589
      %v760 = vunpack.c.h.b16 %v589
      %v761 = vunpack.c.l.b16 %v590
      %v762 = vunpack.c.h.b16 %v590
      %v763 = vunpack.c.l.b16 %v591
      %v764 = vunpack.c.h.b16 %v591
      %v765 = vunpack.c.l.b16 %v592
      %v766 = vunpack.c.h.b16 %v592
      %v767 = vunpack.c.l.b16 %v593
      %v768 = vunpack.c.h.b16 %v593
      %v769 = vunpack.c.l.b16 %v594
      %v770 = vunpack.c.h.b16 %v594
      %v771 = vunpack.c.l.b16 %v595
      %v772 = vunpack.c.h.b16 %v595
      %v773 = vunpack.c.l.b16 %v596
      %v774 = vunpack.c.h.b16 %v596
      %v775 = vunpack.c.l.b16 %v597
      %v776 = vunpack.c.h.b16 %v597
      %v777 = vunpack.c.l.b16 %v598
      %v778 = vunpack.c.h.b16 %v598
      %v779 = vunpack.c.l.b16 %v599
      %v780 = vunpack.c.h.b16 %v599
      %v781 = vunpack.c.l.b16 %v600
      %v782 = vunpack.c.h.b16 %v600
      %v783 = vpack.c.b16 %v767, %v759
      %v784 = vpack.c.b16 %v768, %v760
      %v785 = vpack.c.b16 %v769, %v761
      %v786 = vpack.c.b16 %v770, %v762
      %v787 = vpack.c.b16 %v771, %v763
      %v788 = vpack.c.b16 %v772, %v764
      %v789 = vpack.c.b16 %v773, %v765
      %v790 = vpack.c.b16 %v774, %v766
      %v791 = vpack.c.b16 %v775, %v775
      %v792 = vpack.c.b16 %v776, %v776
      %v793 = vpack.c.b16 %v777, %v777
      %v794 = vpack.c.b16 %v778, %v778
      %v795 = vpack.c.b16 %v779, %v779
      %v796 = vpack.c.b16 %v780, %v780
      %v797 = vpack.c.b16 %v781, %v781
      %v798 = vpack.c.b16 %v782, %v782
      %v943 = vunpack.c.l.b16 %v601
      %v944 = vunpack.c.h.b16 %v601
      %v945 = vunpack.c.l.b16 %v602
      %v946 = vunpack.c.h.b16 %v602
      %v947 = vunpack.c.l.b16 %v603
      %v948 = vunpack.c.h.b16 %v603
      %v949 = vunpack.c.l.b16 %v604
      %v950 = vunpack.c.h.b16 %v604
      %v951 = vunpack.c.l.b16 %v605
      %v952 = vunpack.c.h.b16 %v605
      %v953 = vunpack.c.l.b16 %v606
      %v954 = vunpack.c.h.b16 %v606
      %v955 = vunpack.c.l.b16 %v607
      %v956 = vunpack.c.h.b16 %v607
      %v957 = vunpack.c.l.b16 %v608
      %v958 = vunpack.c.h.b16 %v608
      %v959 = vunpack.c.l.b16 %v609
      %v960 = vunpack.c.h.b16 %v609
      %v961 = vunpack.c.l.b16 %v610
      %v962 = vunpack.c.h.b16 %v610
      %v963 = vunpack.c.l.b16 %v611
      %v964 = vunpack.c.h.b16 %v611
      %v965 = vunpack.c.l.b16 %v612
      %v966 = vunpack.c.h.b16 %v612
      %v967 = vunpack.c.l.b16 %v613
      %v968 = vunpack.c.h.b16 %v613
      %v969 = vunpack.c.l.b16 %v614
      %v970 = vunpack.c.h.b16 %v614
      %v971 = vunpack.c.l.b16 %v615
      %v972 = vunpack.c.h.b16 %v615
      %v973 = vunpack.c.l.b16 %v616
      %v974 = vunpack.c.h.b16 %v616
      %v975 = vunpack.c.l.b16 %v617
      %v976 = vunpack.c.h.b16 %v617
      %v977 = vunpack.c.l.b16 %v618
      %v978 = vunpack.c.h.b16 %v618
      %v979 = vunpack.c.l.b16 %v619
      %v980 = vunpack.c.h.b16 %v619
      %v981 = vunpack.c.l.b16 %v620
      %v982 = vunpack.c.h.b16 %v620
      %v983 = vunpack.c.l.b16 %v621
      %v984 = vunpack.c.h.b16 %v621
      %v985 = vunpack.c.l.b16 %v622
      %v986 = vunpack.c.h.b16 %v622
      %v987 = vunpack.c.l.b16 %v623
      %v988 = vunpack.c.h.b16 %v623
      %v989 = vunpack.c.l.b16 %v624
      %v990 = vunpack.c.h.b16 %v624
      %v991 = vunpack.c.l.b16 %v625
      %v992 = vunpack.c.h.b16 %v625
      %v993 = vunpack.c.l.b16 %v626
      %v994 = vunpack.c.h.b16 %v626
      %v995 = vunpack.c.l.b16 %v627
      %v996 = vunpack.c.h.b16 %v627
      %v997 = vunpack.c.l.b16 %v628
      %v998 = vunpack.c.h.b16 %v628
      %v999 = vunpack.c.l.b16 %v629
      %v1000 = vunpack.c.h.b16 %v629
      %v1001 = vunpack.c.l.b16 %v630
      %v1002 = vunpack.c.h.b16 %v630
      %v1003 = vunpack.c.l.b16 %v631
      %v1004 = vunpack.c.h.b16 %v631
      %v1005 = vunpack.c.l.b16 %v632
      %v1006 = vunpack.c.h.b16 %v632
      %v1007 = vunpack.c.l.b16 %v633
      %v1008 = vunpack.c.h.b16 %v633
      %v1009 = vunpack.c.l.b16 %v634
      %v1010 = vunpack.c.h.b16 %v634
      %v1011 = vunpack.c.l.b16 %v635
      %v1012 = vunpack.c.h.b16 %v635
      %v1013 = vunpack.c.l.b16 %v636
      %v1014 = vunpack.c.h.b16 %v636
      %v1015 = vunpack.c.l.b16 %v637
      %v1016 = vunpack.c.h.b16 %v637
      %v1017 = vunpack.c.l.b16 %v638
      %v1018 = vunpack.c.h.b16 %v638
      %v1019 = vunpack.c.l.b16 %v639
      %v1020 = vunpack.c.h.b16 %v639
      %v1021 = vunpack.c.l.b16 %v640
      %v1022 = vunpack.c.h.b16 %v640
      %v1023 = vunpack.c.l.b16 %v641
      %v1024 = vunpack.c.h.b16 %v641
      %v1025 = vunpack.c.l.b16 %v642
      %v1026 = vunpack.c.h.b16 %v642
      %v1027 = vunpack.c.l.b16 %v643
      %v1028 = vunpack.c.h.b16 %v643
      %v1029 = vunpack.c.l.b16 %v644
      %v1030 = vunpack.c.h.b16 %v644
      %v1031 = vunpack.c.l.b16 %v645
      %v1032 = vunpack.c.h.b16 %v645
      %v1033 = vunpack.c.l.b16 %v646
      %v1034 = vunpack.c.h.b16 %v646
      %v1035 = vunpack.c.l.b16 %v647
      %v1036 = vunpack.c.h.b16 %v647
      %v1037 = vunpack.c.l.b16 %v648
      %v1038 = vunpack.c.h.b16 %v648
      %v1039 = vunpack.c.l.b16 %v649
      %v1040 = vunpack.c.h.b16 %v649
      %v1041 = vunpack.c.l.b16 %v650
      %v1042 = vunpack.c.h.b16 %v650
      %v1043 = vunpack.c.l.b16 %v651
      %v1044 = vunpack.c.h.b16 %v651
      %v1045 = vunpack.c.l.b16 %v652
      %v1046 = vunpack.c.h.b16 %v652
      %v1047 = vunpack.c.l.b16 %v653
      %v1048 = vunpack.c.h.b16 %v653
      %v1049 = vunpack.c.l.b16 %v654
      %v1050 = vunpack.c.h.b16 %v654
      %v1051 = vunpack.c.l.b16 %v655
      %v1052 = vunpack.c.h.b16 %v655
      %v1053 = vunpack.c.l.b16 %v656
      %v1054 = vunpack.c.h.b16 %v656
      %v1055 = vunpack.c.l.b16 %v657
      %v1056 = vunpack.c.h.b16 %v657
      %v1057 = vunpack.c.l.b16 %v658
      %v1058 = vunpack.c.h.b16 %v658
      %v1059 = vunpack.c.l.b16 %v659
      %v1060 = vunpack.c.h.b16 %v659
      %v1061 = vunpack.c.l.b16 %v660
      %v1062 = vunpack.c.h.b16 %v660
      %v1063 = vunpack.c.l.b16 %v661
      %v1064 = vunpack.c.h.b16 %v661
      %v1065 = vunpack.c.l.b16 %v662
      %v1066 = vunpack.c.h.b16 %v662
      %v1067 = vunpack.c.l.b16 %v663
      %v1068 = vunpack.c.h.b16 %v663
      %v1069 = vunpack.c.l.b16 %v664
      %v1070 = vunpack.c.h.b16 %v664
      %v1071 = vunpack.c.l.b16 %v665
      %v1072 = vunpack.c.h.b16 %v665
      %v1073 = vunpack.c.l.b16 %v666
      %v1074 = vunpack.c.h.b16 %v666
      %v1075 = vunpack.c.l.b16 %v667
      %v1076 = vunpack.c.h.b16 %v667
      %v1077 = vunpack.c.l.b16 %v668
      %v1078 = vunpack.c.h.b16 %v668
      %v1079 = vunpack.c.l.b16 %v669
      %v1080 = vunpack.c.h.b16 %v669
      %v1081 = vunpack.c.l.b16 %v670
      %v1082 = vunpack.c.h.b16 %v670
      %v1083 = vunpack.c.l.b16 %v671
      %v1084 = vunpack.c.h.b16 %v671
      %v1085 = vunpack.c.l.b16 %v672
      %v1086 = vunpack.c.h.b16 %v672
      %v1087 = vunpack.c.l.b16 %v673
      %v1088 = vunpack.c.h.b16 %v673
      %v1089 = vunpack.c.l.b16 %v674
      %v1090 = vunpack.c.h.b16 %v674
      %v1091 = vunpack.c.l.b16 %v675
      %v1092 = vunpack.c.h.b16 %v675
      %v1093 = vunpack.c.l.b16 %v676
      %v1094 = vunpack.c.h.b16 %v676
      %v1095 = vunpack.c.l.b16 %v677
      %v1096 = vunpack.c.h.b16 %v677
      %v1097 = vunpack.c.l.b16 %v678
      %v1098 = vunpack.c.h.b16 %v678
      %v1099 = vunpack.c.l.b16 %v679
      %v1100 = vunpack.c.h.b16 %v679
      %v1101 = vunpack.c.l.b16 %v680
      %v1102 = vunpack.c.h.b16 %v680
      %v1103 = vunpack.c.l.b16 %v681
      %v1104 = vunpack.c.h.b16 %v681
      %v1105 = vunpack.c.l.b16 %v682
      %v1106 = vunpack.c.h.b16 %v682
      %v1107 = vunpack.c.l.b16 %v683
      %v1108 = vunpack.c.h.b16 %v683
      %v1109 = vunpack.c.l.b16 %v684
      %v1110 = vunpack.c.h.b16 %v684
      %v1111 = vunpack.c.l.b16 %v685
      %v1112 = vunpack.c.h.b16 %v685
      %v1113 = vunpack.c.l.b16 %v686
      %v1114 = vunpack.c.h.b16 %v686
      %v1115 = vunpack.c.l.b16 %v687
      %v1116 = vunpack.c.h.b16 %v687
      %v1117 = vunpack.c.l.b16 %v688
      %v1118 = vunpack.c.h.b16 %v688
      %v1119 = vunpack.c.l.b16 %v689
      %v1120 = vunpack.c.h.b16 %v689
      %v1121 = vunpack.c.l.b16 %v690
      %v1122 = vunpack.c.h.b16 %v690
      %v1123 = vunpack.c.l.b16 %v691
      %v1124 = vunpack.c.h.b16 %v691
      %v1125 = vunpack.c.l.b16 %v692
      %v1126 = vunpack.c.h.b16 %v692
      %v1127 = vunpack.c.l.b16 %v693
      %v1128 = vunpack.c.h.b16 %v693
      %v1129 = vunpack.c.l.b16 %v694
      %v1130 = vunpack.c.h.b16 %v694
      %v1131 = vunpack.c.l.b16 %v695
      %v1132 = vunpack.c.h.b16 %v695
      %v1133 = vunpack.c.l.b16 %v696
      %v1134 = vunpack.c.h.b16 %v696
      %v1135 = vunpack.c.l.b16 %v697
      %v1136 = vunpack.c.h.b16 %v697
      %v1137 = vunpack.c.l.b16 %v698
      %v1138 = vunpack.c.h.b16 %v698
      %v1139 = vunpack.c.l.b16 %v699
      %v1140 = vunpack.c.h.b16 %v699
      %v1141 = vunpack.c.l.b16 %v700
      %v1142 = vunpack.c.h.b16 %v700
      %v1143 = vunpack.c.l.b16 %v701
      %v1144 = vunpack.c.h.b16 %v701
      %v1145 = vunpack.c.l.b16 %v702
      %v1146 = vunpack.c.h.b16 %v702
      %v1147 = vunpack.c.l.b16 %v703
      %v1148 = vunpack.c.h.b16 %v703
      %v1149 = vunpack.c.l.b16 %v704
      %v1150 = vunpack.c.h.b16 %v704
      %v1151 = vunpack.c.l.b16 %v705
      %v1152 = vunpack.c.h.b16 %v705
      %v1153 = vunpack.c.l.b16 %v706
      %v1154 = vunpack.c.h.b16 %v706
      %v1155 = vunpack.c.l.b16 %v707
      %v1156 = vunpack.c.h.b16 %v707
      %v1157 = vunpack.c.l.b16 %v708
      %v1158 = vunpack.c.h.b16 %v708
      %v1159 = vunpack.c.l.b16 %v709
      %v1160 = vunpack.c.h.b16 %v709
      %v1161 = vunpack.c.l.b16 %v710
      %v1162 = vunpack.c.h.b16 %v710
      %v1163 = vunpack.c.l.b16 %v711
      %v1164 = vunpack.c.h.b16 %v711
      %v1165 = vunpack.c.l.b16 %v712
      %v1166 = vunpack.c.h.b16 %v712
      %v1167 = vunpack.c.l.b16 %v713
      %v1168 = vunpack.c.h.b16 %v713
      %v1169 = vunpack.c.l.b16 %v714
      %v1170 = vunpack.c.h.b16 %v714
      %v1171 = vunpack.c.l.b16 %v715
      %v1172 = vunpack.c.h.b16 %v715
      %v1173 = vunpack.c.l.b16 %v716
      %v1174 = vunpack.c.h.b16 %v716
      %v1175 = vunpack.c.l.b16 %v717
      %v1176 = vunpack.c.h.b16 %v717
      %v1177 = vunpack.c.l.b16 %v718
      %v1178 = vunpack.c.h.b16 %v718
      %v1179 = vunpack.c.l.b16 %v719
      %v1180 = vunpack.c.h.b16 %v719
      %v1181 = vunpack.c.l.b16 %v720
      %v1182 = vunpack.c.h.b16 %v720
      %v1183 = vunpack.c.l.b16 %v721
      %v1184 = vunpack.c.h.b16 %v721
      %v1185 = vunpack.c.l.b16 %v722
      %v1186 = vunpack.c.h.b16 %v722
      %v1187 = vunpack.c.l.b16 %v723
      %v1188 = vunpack.c.h.b16 %v723
      %v1189 = vunpack.c.l.b16 %v724
      %v1190 = vunpack.c.h.b16 %v724
      %v1191 = vunpack.c.l.b16 %v725
      %v1192 = vunpack.c.h.b16 %v725
      %v1193 = vunpack.c.l.b16 %v726
      %v1194 = vunpack.c.h.b16 %v726
      %v1195 = vunpack.c.l.b16 %v727
      %v1196 = vunpack.c.h.b16 %v727
      %v1197 = vunpack.c.l.b16 %v728
      %v1198 = vunpack.c.h.b16 %v728
      %v1199 = vpack.c.b16 %v945, %v943
      %v1200 = vpack.c.b16 %v946, %v944
      %v1201 = vpack.c.b16 %v949, %v947
      %v1202 = vpack.c.b16 %v950, %v948
      %v1203 = vpack.c.b16 %v953, %v951
      %v1204 = vpack.c.b16 %v954, %v952
      %v1205 = vpack.c.b16 %v957, %v955
      %v1206 = vpack.c.b16 %v958, %v956
      %v1207 = vpack.c.b16 %v961, %v959
      %v1208 = vpack.c.b16 %v962, %v960
      %v1209 = vpack.c.b16 %v965, %v963
      %v1210 = vpack.c.b16 %v966, %v964
      %v1211 = vpack.c.b16 %v969, %v967
      %v1212 = vpack.c.b16 %v970, %v968
      %v1213 = vpack.c.b16 %v973, %v971
      %v1214 = vpack.c.b16 %v974, %v972
      %v1215 = vpack.c.b16 %v977, %v975
      %v1216 = vpack.c.b16 %v978, %v976
      %v1217 = vpack.c.b16 %v981, %v979
      %v1218 = vpack.c.b16 %v982, %v980
      %v1219 = vpack.c.b16 %v985, %v983
      %v1220 = vpack.c.b16 %v986, %v984
      %v1221 = vpack.c.b16 %v989, %v987
      %v1222 = vpack.c.b16 %v990, %v988
      %v1223 = vpack.c.b16 %v993, %v991
      %v1224 = vpack.c.b16 %v994, %v992
      %v1225 = vpack.c.b16 %v997, %v995
      %v1226 = vpack.c.b16 %v998, %v996
      %v1227 = vpack.c.b16 %v1001, %v999
      %v1228 = vpack.c.b16 %v1002, %v1000
      %v1229 = vpack.c.b16 %v1005, %v1003
      %v1230 = vpack.c.b16 %v1006, %v1004
      %v1231 = vpack.c.b16 %v1009, %v1007
      %v1232 = vpack.c.b16 %v1010, %v1008
      %v1233 = vpack.c.b16 %v1013, %v1011
      %v1234 = vpack.c.b16 %v1014, %v1012
      %v1235 = vpack.c.b16 %v1017, %v1015
      %v1236 = vpack.c.b16 %v1018, %v1016
      %v1237 = vpack.c.b16 %v1021, %v1019
      %v1238 = vpack.c.b16 %v1022, %v1020
      %v1239 = vpack.c.b16 %v1025, %v1023
      %v1240 = vpack.c.b16 %v1026, %v1024
      %v1241 = vpack.c.b16 %v1029, %v1027
      %v1242 = vpack.c.b16 %v1030, %v1028
      %v1243 = vpack.c.b16 %v1033, %v1031
      %v1244 = vpack.c.b16 %v1034, %v1032
      %v1245 = vpack.c.b16 %v1037, %v1035
      %v1246 = vpack.c.b16 %v1038, %v1036
      %v1247 = vpack.c.b16 %v1041, %v1039
      %v1248 = vpack.c.b16 %v1042, %v1040
      %v1249 = vpack.c.b16 %v1045, %v1043
      %v1250 = vpack.c.b16 %v1046, %v1044
      %v1251 = vpack.c.b16 %v1049, %v1047
      %v1252 = vpack.c.b16 %v1050, %v1048
      %v1253 = vpack.c.b16 %v1053, %v1051
      %v1254 = vpack.c.b16 %v1054, %v1052
      %v1255 = vpack.c.b16 %v1057, %v1055
      %v1256 = vpack.c.b16 %v1058, %v1056
      %v1257 = vpack.c.b16 %v1061, %v1059
      %v1258 = vpack.c.b16 %v1062, %v1060
      %v1259 = vpack.c.b16 %v1065, %v1063
      %v1260 = vpack.c.b16 %v1066, %v1064
      %v1261 = vpack.c.b16 %v1069, %v1067
      %v1262 = vpack.c.b16 %v1070, %v1068
      %v1263 = vpack.c.b16 %v1073, %v1071
      %v1264 = vpack.c.b16 %v1074, %v1072
      %v1265 = vpack.c.b16 %v1077, %v1075
      %v1266 = vpack.c.b16 %v1078, %v1076
      %v1267 = vpack.c.b16 %v1081, %v1079
      %v1268 = vpack.c.b16 %v1082, %v1080
      %v1269 = vpack.c.b16 %v1085, %v1083
      %v1270 = vpack.c.b16 %v1086, %v1084
      %v1271 = vpack.c.b16 %v1089, %v1087
      %v1272 = vpack.c.b16 %v1090, %v1088
      %v1273 = vpack.c.b16 %v1093, %v1091
      %v1274 = vpack.c.b16 %v1094, %v1092
      %v1275 = vpack.c.b16 %v1097, %v1095
      %v1276 = vpack.c.b16 %v1098, %v1096
      %v1277 = vpack.c.b16 %v1101, %v1099
      %v1278 = vpack.c.b16 %v1102, %v1100
      %v1279 = vpack.c.b16 %v1105, %v1103
      %v1280 = vpack.c.b16 %v1106, %v1104
      %v1281 = vpack.c.b16 %v1109, %v1107
      %v1282 = vpack.c.b16 %v1110, %v1108
      %v1283 = vpack.c.b16 %v1113, %v1111
      %v1284 = vpack.c.b16 %v1114, %v1112
      %v1285 = vpack.c.b16 %v1117, %v1115
      %v1286 = vpack.c.b16 %v1118, %v1116
      %v1287 = vpack.c.b16 %v1121, %v1119
      %v1288 = vpack.c.b16 %v1122, %v1120
      %v1289 = vpack.c.b16 %v1125, %v1123
      %v1290 = vpack.c.b16 %v1126, %v1124
      %v1291 = vpack.c.b16 %v1129, %v1127
      %v1292 = vpack.c.b16 %v1130, %v1128
      %v1293 = vpack.c.b16 %v1133, %v1131
      %v1294 = vpack.c.b16 %v1134, %v1132
      %v1295 = vpack.c.b16 %v1137, %v1135
      %v1296 = vpack.c.b16 %v1138, %v1136
      %v1297 = vpack.c.b16 %v1141, %v1139
      %v1298 = vpack.c.b16 %v1142, %v1140
      %v1299 = vpack.c.b16 %v1145, %v1143
      %v1300 = vpack.c.b16 %v1146, %v1144
      %v1301 = vpack.c.b16 %v1149, %v1147
      %v1302 = vpack.c.b16 %v1150, %v1148
      %v1303 = vpack.c.b16 %v1153, %v1151
      %v1304 = vpack.c.b16 %v1154, %v1152
      %v1305 = vpack.c.b16 %v1157, %v1155
      %v1306 = vpack.c.b16 %v1158, %v1156
      %v1307 = vpack.c.b16 %v1161, %v1159
      %v1308 = vpack.c.b16 %v1162, %v1160
      %v1309 = vpack.c.b16 %v1165, %v1163
      %v1310 = vpack.c.b16 %v1166, %v1164
      %v1311 = vpack.c.b16 %v1169, %v1167
      %v1312 = vpack.c.b16 %v1170, %v1168
      %v1313 = vpack.c.b16 %v1173, %v1171
      %v1314 = vpack.c.b16 %v1174, %v1172
      %v1315 = vpack.c.b16 %v1177, %v1175
      %v1316 = vpack.c.b16 %v1178, %v1176
      %v1317 = vpack.c.b16 %v1181, %v1179
      %v1318 = vpack.c.b16 %v1182, %v1180
      %v1319 = vpack.c.b16 %v1185, %v1183
      %v1320 = vpack.c.b16 %v1186, %v1184
      %v1321 = vpack.c.b16 %v1189, %v1187
      %v1322 = vpack.c.b16 %v1190, %v1188
      %v1323 = vpack.c.b16 %v1193, %v1191
      %v1324 = vpack.c.b16 %v1194, %v1192
      %v1325 = vpack.c.b16 %v1197, %v1195
      %v1326 = vpack.c.b16 %v1198, %v1196
      %1455 = vmatprep.subr.bf16.mxu0 %v1200
      %1456 = vmatpush1.bf16.msra.mxu0 %v1199
      %1457 = vmatprep.subr.bf16.mxu0 %v1202
      %1458 = vmatpush1.bf16.msra.mxu0 %v1201
      %1459 = vmatprep.subr.bf16.mxu0 %v1204
      %1460 = vmatpush1.bf16.msra.mxu0 %v1203
      %1461 = vmatprep.subr.bf16.mxu0 %v1206
      %1462 = vmatpush1.bf16.msra.mxu0 %v1205
      %1463 = vmatprep.subr.bf16.mxu0 %v1208
      %1464 = vmatpush1.bf16.msra.mxu0 %v1207
      %1465 = vmatprep.subr.bf16.mxu0 %v1210
      %1466 = vmatpush1.bf16.msra.mxu0 %v1209
      %1467 = vmatprep.subr.bf16.mxu0 %v1212
      %1468 = vmatpush1.bf16.msra.mxu0 %v1211
      %1469 = vmatprep.subr.bf16.mxu0 %v1214
      %1470 = vmatpush1.bf16.msra.mxu0 %v1213
      %1471 = vmatprep.subr.bf16.mxu0 %v1216
      %1472 = vmatpush1.bf16.msra.mxu0 %v1215
      %1473 = vmatprep.subr.bf16.mxu0 %v1218
      %1474 = vmatpush1.bf16.msra.mxu0 %v1217
      %1475 = vmatprep.subr.bf16.mxu0 %v1220
      %1476 = vmatpush1.bf16.msra.mxu0 %v1219
      %1477 = vmatprep.subr.bf16.mxu0 %v1222
      %1478 = vmatpush1.bf16.msra.mxu0 %v1221
      %1479 = vmatprep.subr.bf16.mxu0 %v1224
      %1480 = vmatpush1.bf16.msra.mxu0 %v1223
      %1481 = vmatprep.subr.bf16.mxu0 %v1226
      %1482 = vmatpush1.bf16.msra.mxu0 %v1225
      %1483 = vmatprep.subr.bf16.mxu0 %v1228
      %1484 = vmatpush1.bf16.msra.mxu0 %v1227
      %1485 = vmatprep.subr.bf16.mxu0 %v1230
      %1486 = vmatpush1.bf16.msra.mxu0 %v1229
      %1487 = vmatprep.mubr.bf16.mxu0 %v784
      %1488 = vmatmul.mubr.bf16.gmra.mrb[0].mxu0 %v783
      %v1489 = vpop.f32.mrb[0].mxu0
      %v1490 = vadd.f32 %v735, %v1489
      %v1491 = vpop.f32.mrb[0].mxu0
      %v1492 = vadd.f32 %v735, %v1491
      %v1493 = vpop.f32.mrb[0].mxu0
      %v1494 = vadd.f32 %v740, %v1493
      %v1495 = vpop.f32.mrb[0].mxu0
      %v1496 = vadd.f32 %v740, %v1495
      %1497 = vmatprep.mubr.bf16.mxu0 %v792
      %1498 = vmatmul.mubr.bf16.gmra.mrb[0].mxu0 %v791
      %v1499 = vpop.f32.mrb[0].mxu0
      %v1500 = vadd.f32 %v745, %v1499
      %v1501 = vpop.f32.mrb[0].mxu0
      %v1502 = vadd.f32 %v745, %v1501
      %v1503 = vpop.f32.mrb[0].mxu0
      %v1504 = vpop.f32.mrb[0].mxu0
      %1505 = vdwg.mxu0
      %1506 = vmatprep.subr.bf16.mxu0 %v1232
      %1507 = vmatpush1.bf16.msra.mxu0 %v1231
      %1508 = vmatprep.subr.bf16.mxu0 %v1234
      %1509 = vmatpush1.bf16.msra.mxu0 %v1233
      %1510 = vmatprep.subr.bf16.mxu0 %v1236
      %1511 = vmatpush1.bf16.msra.mxu0 %v1235
      %1512 = vmatprep.subr.bf16.mxu0 %v1238
      %1513 = vmatpush1.bf16.msra.mxu0 %v1237
      %1514 = vmatprep.subr.bf16.mxu0 %v1240
      %1515 = vmatpush1.bf16.msra.mxu0 %v1239
      %1516 = vmatprep.subr.bf16.mxu0 %v1242
      %1517 = vmatpush1.bf16.msra.mxu0 %v1241
      %1518 = vmatprep.subr.bf16.mxu0 %v1244
      %1519 = vmatpush1.bf16.msra.mxu0 %v1243
      %1520 = vmatprep.subr.bf16.mxu0 %v1246
      %1521 = vmatpush1.bf16.msra.mxu0 %v1245
      %1522 = vmatprep.subr.bf16.mxu0 %v1248
      %1523 = vmatpush1.bf16.msra.mxu0 %v1247
      %1524 = vmatprep.subr.bf16.mxu0 %v1250
      %1525 = vmatpush1.bf16.msra.mxu0 %v1249
      %1526 = vmatprep.subr.bf16.mxu0 %v1252
      %1527 = vmatpush1.bf16.msra.mxu0 %v1251
      %1528 = vmatprep.subr.bf16.mxu0 %v1254
      %1529 = vmatpush1.bf16.msra.mxu0 %v1253
      %1530 = vmatprep.subr.bf16.mxu0 %v1256
      %1531 = vmatpush1.bf16.msra.mxu0 %v1255
      %1532 = vmatprep.subr.bf16.mxu0 %v1258
      %1533 = vmatpush1.bf16.msra.mxu0 %v1257
      %1534 = vmatprep.subr.bf16.mxu0 %v1260
      %1535 = vmatpush1.bf16.msra.mxu0 %v1259
      %1536 = vmatprep.subr.bf16.mxu0 %v1262
      %1537 = vmatpush1.bf16.msra.mxu0 %v1261
      %1538 = vmatprep.mubr.bf16.mxu0 %v786
      %1539 = vmatmul.mubr.bf16.gmra.mrb[0].mxu0 %v785
      %v1540 = vpop.f32.mrb[0].mxu0
      %v1541 = vadd.f32 %v1490, %v1540
      %v1542 = vpop.f32.mrb[0].mxu0
      %v1543 = vadd.f32 %v1492, %v1542
      %v1544 = vpop.f32.mrb[0].mxu0
      %v1545 = vadd.f32 %v1494, %v1544
      %v1546 = vpop.f32.mrb[0].mxu0
      %v1547 = vadd.f32 %v1496, %v1546
      %1548 = vmatprep.mubr.bf16.mxu0 %v794
      %1549 = vmatmul.mubr.bf16.gmra.mrb[0].mxu0 %v793
      %v1550 = vpop.f32.mrb[0].mxu0
      %v1551 = vadd.f32 %v1500, %v1550
      %v1552 = vpop.f32.mrb[0].mxu0
      %v1553 = vadd.f32 %v1502, %v1552
      %v1554 = vpop.f32.mrb[0].mxu0
      %v1555 = vpop.f32.mrb[0].mxu0
      %1556 = vdwg.mxu0
      %1557 = vmatprep.subr.bf16.mxu0 %v1264
      %1558 = vmatpush1.bf16.msra.mxu0 %v1263
      %1559 = vmatprep.subr.bf16.mxu0 %v1266
      %1560 = vmatpush1.bf16.msra.mxu0 %v1265
      %1561 = vmatprep.subr.bf16.mxu0 %v1268
      %1562 = vmatpush1.bf16.msra.mxu0 %v1267
      %1563 = vmatprep.subr.bf16.mxu0 %v1270
      %1564 = vmatpush1.bf16.msra.mxu0 %v1269
      %1565 = vmatprep.subr.bf16.mxu0 %v1272
      %1566 = vmatpush1.bf16.msra.mxu0 %v1271
      %1567 = vmatprep.subr.bf16.mxu0 %v1274
      %1568 = vmatpush1.bf16.msra.mxu0 %v1273
      %1569 = vmatprep.subr.bf16.mxu0 %v1276
      %1570 = vmatpush1.bf16.msra.mxu0 %v1275
      %1571 = vmatprep.subr.bf16.mxu0 %v1278
      %1572 = vmatpush1.bf16.msra.mxu0 %v1277
      %1573 = vmatprep.subr.bf16.mxu0 %v1280
      %1574 = vmatpush1.bf16.msra.mxu0 %v1279
      %1575 = vmatprep.subr.bf16.mxu0 %v1282
      %1576 = vmatpush1.bf16.msra.mxu0 %v1281
      %1577 = vmatprep.subr.bf16.mxu0 %v1284
      %1578 = vmatpush1.bf16.msra.mxu0 %v1283
      %1579 = vmatprep.subr.bf16.mxu0 %v1286
      %1580 = vmatpush1.bf16.msra.mxu0 %v1285
      %1581 = vmatprep.subr.bf16.mxu0 %v1288
      %1582 = vmatpush1.bf16.msra.mxu0 %v1287
      %1583 = vmatprep.subr.bf16.mxu0 %v1290
      %1584 = vmatpush1.bf16.msra.mxu0 %v1289
      %1585 = vmatprep.subr.bf16.mxu0 %v1292
      %1586 = vmatpush1.bf16.msra.mxu0 %v1291
      %1587 = vmatprep.subr.bf16.mxu0 %v1294
      %1588 = vmatpush1.bf16.msra.mxu0 %v1293
      %1589 = vmatprep.mubr.bf16.mxu0 %v788
      %1590 = vmatmul.mubr.bf16.gmra.mrb[0].mxu0 %v787
      %v1591 = vpop.f32.mrb[0].mxu0
      %v1592 = vadd.f32 %v1541, %v1591
      %v1593 = vpop.f32.mrb[0].mxu0
      %v1594 = vadd.f32 %v1543, %v1593
      %v1595 = vpop.f32.mrb[0].mxu0
      %v1596 = vadd.f32 %v1545, %v1595
      %v1597 = vpop.f32.mrb[0].mxu0
      %v1598 = vadd.f32 %v1547, %v1597
      %1599 = vmatprep.mubr.bf16.mxu0 %v796
      %1600 = vmatmul.mubr.bf16.gmra.mrb[0].mxu0 %v795
      %v1601 = vpop.f32.mrb[0].mxu0
      %v1602 = vadd.f32 %v1551, %v1601
      %v1603 = vpop.f32.mrb[0].mxu0
      %v1604 = vadd.f32 %v1553, %v1603
      %v1605 = vpop.f32.mrb[0].mxu0
      %v1606 = vpop.f32.mrb[0].mxu0
      %1607 = vdwg.mxu0
      %1608 = vmatprep.subr.bf16.mxu0 %v1296
      %1609 = vmatpush1.bf16.msra.mxu0 %v1295
      %1610 = vmatprep.subr.bf16.mxu0 %v1298
      %1611 = vmatpush1.bf16.msra.mxu0 %v1297
      %1612 = vmatprep.subr.bf16.mxu0 %v1300
      %1613 = vmatpush1.bf16.msra.mxu0 %v1299
      %1614 = vmatprep.subr.bf16.mxu0 %v1302
      %1615 = vmatpush1.bf16.msra.mxu0 %v1301
      %1616 = vmatprep.subr.bf16.mxu0 %v1304
      %1617 = vmatpush1.bf16.msra.mxu0 %v1303
      %1618 = vmatprep.subr.bf16.mxu0 %v1306
      %1619 = vmatpush1.bf16.msra.mxu0 %v1305
      %1620 = vmatprep.subr.bf16.mxu0 %v1308
      %1621 = vmatpush1.bf16.msra.mxu0 %v1307
      %1622 = vmatprep.subr.bf16.mxu0 %v1310
      %1623 = vmatpush1.bf16.msra.mxu0 %v1309
      %1624 = vmatprep.subr.bf16.mxu0 %v1312
      %1625 = vmatpush1.bf16.msra.mxu0 %v1311
      %1626 = vmatprep.subr.bf16.mxu0 %v1314
      %1627 = vmatpush1.bf16.msra.mxu0 %v1313
      %1628 = vmatprep.subr.bf16.mxu0 %v1316
      %1629 = vmatpush1.bf16.msra.mxu0 %v1315
      %1630 = vmatprep.subr.bf16.mxu0 %v1318
      %1631 = vmatpush1.bf16.msra.mxu0 %v1317
      %1632 = vmatprep.subr.bf16.mxu0 %v1320
      %1633 = vmatpush1.bf16.msra.mxu0 %v1319
      %1634 = vmatprep.subr.bf16.mxu0 %v1322
      %1635 = vmatpush1.bf16.msra.mxu0 %v1321
      %1636 = vmatprep.subr.bf16.mxu0 %v1324
      %1637 = vmatpush1.bf16.msra.mxu0 %v1323
      %1638 = vmatprep.subr.bf16.mxu0 %v1326
      %1639 = vmatpush1.bf16.msra.mxu0 %v1325
      %1640 = vmatprep.mubr.bf16.mxu0 %v790
      %1641 = vmatmul.mubr.bf16.gmra.mrb[0].mxu0 %v789
      %v1642 = vpop.f32.mrb[0].mxu0
      %v1643 = vadd.f32 %v1592, %v1642
      %v1644 = vpop.f32.mrb[0].mxu0
      %v1645 = vadd.f32 %v1594, %v1644
      %v1646 = vpop.f32.mrb[0].mxu0
      %v1647 = vadd.f32 %v1596, %v1646
      %v1648 = vpop.f32.mrb[0].mxu0
      %v1649 = vadd.f32 %v1598, %v1648
      %1650 = vmatprep.mubr.bf16.mxu0 %v798
      %1651 = vmatmul.mubr.bf16.gmra.mrb[0].mxu0 %v797
      %v1652 = vpop.f32.mrb[0].mxu0
      %v1653 = vadd.f32 %v1602, %v1652
      %v1654 = vpop.f32.mrb[0].mxu0
      %v1655 = vadd.f32 %v1604, %v1654
      %v1656 = vpop.f32.mrb[0].mxu0
      %v1657 = vpop.f32.mrb[0].mxu0
      %1658 = vdwg.mxu0
      %v1659 = vadd.f32 %v1643, %v1645
      %1660 = vadd.xlane.f32.xlu0 %v1659
      %v1661 = vpop.xlane.xlu0 %1660
      %v1662 = vadd.f32 %v1647, %v1649
      %1663 = vadd.xlane.f32.xlu0 %v1662
      %v1664 = vpop.xlane.xlu0 %1663
      %v1665 = vadd.f32 %v1653, %v1655
      %1666 = vadd.xlane.f32.xlu0 %v1665
      %v1667 = vpop.xlane.xlu0 %1666
      %v1668 = vrcp.pop 256.0
      %v1669 = vmul.f32 %v1661, %v1668
      %v1670 = vmul.f32 %v1664, %v1668
      %v1671 = vmul.f32 %v1667, %v1668
      %v1672 = vpack.c.bf16 %v1647, %v1643
      %v1673 = vpack.c.bf16 %v1649, %v1645
      %v1674 = vpack.c.bf16 %v1653, %v1653
      %v1675 = vpack.c.bf16 %v1655, %v1655
      %v1680 = vunpack.c.l.b16 %v1672
      %v1681 = vunpack.c.l.b16 %v1673
      %v1682 = vunpack.c.h.b16 %v1672
      %v1683 = vunpack.c.h.b16 %v1673
      %v1684 = vunpack.c.l.b16 %v1674
      %v1685 = vunpack.c.l.b16 %v1675
      %v1686 = vpack.c.b16 %v1681, %v1680
      %v1687 = vpack.c.b16 %v1683, %v1682
      %v1688 = vpack.c.b16 %v1685, %v1684
      %1692 = vst [vmem:[#allocation2 + $0xc] sm:$0xff] %v1686
      %1693 = vst [vmem:[#allocation2 + $0x2c] sm:$0xff] %v1687
      %1694 = vst [vmem:[#allocation2 + $0x4c] sm:$0xff] %v1688
      %v1695 = vld [vmem:[%s4] sm:$0xf]
      %v1696 = vld [vmem:[%s4 + $0x4] sm:$0xf]
      %v1697 = vld [vmem:[%s4 + $0x8] sm:$0xf]
      %v1701 = vunpack.c.l.b16 %v1695
      %v1702 = vunpack.c.l.b16 %v1696
      %v1703 = vunpack.c.l.b16 %v1697
      %v1704 = vpack.c.b16 %v1702, %v1701
      %v1705 = vpack.c.b16 %v1703, %v1703
      %vm1706 = vcmask 195584
      %v1708 = vsel %vm1706, %v1704, 0
      %v1711 = vsel %vm1706, %v1705, 0
      %vm1713 = vcmask 1043456
      %v1715 = vsel %vm1713, %v1674, 0
      %v1718 = vsel %vm1713, %v1675, 0
      %1720 = vmatprep.subr.bf16.mxu0 %v1673
      %1721 = vmatpush1.bf16.msra.mxu0 %v1672
      %1722 = vmatprep.subr.bf16.mxu0 %v1718
      %1723 = vmatpush1.bf16.msra.mxu0 %v1715
      %1724 = vmatprep.subr.bf16.mxu0 0
      %1725 = vmatpush1.bf16.msra.mxu0 0
      %1726 = vmatprep.subr.bf16.mxu0 0
      %1727 = vmatpush1.bf16.msra.mxu0 0
      %1728 = vmatprep.subr.bf16.mxu0 0
      %1729 = vmatpush1.bf16.msra.mxu0 0
      %1730 = vmatprep.subr.bf16.mxu0 0
      %1731 = vmatpush1.bf16.msra.mxu0 0
      %1732 = vmatprep.subr.bf16.mxu0 0
      %1733 = vmatpush1.bf16.msra.mxu0 0
      %1734 = vmatprep.subr.bf16.mxu0 0
      %1735 = vmatpush1.bf16.msra.mxu0 0
      %1736 = vmatprep.subr.bf16.mxu0 0
      %1737 = vmatpush1.bf16.msra.mxu0 0
      %1738 = vmatprep.subr.bf16.mxu0 0
      %1739 = vmatpush1.bf16.msra.mxu0 0
      %1740 = vmatprep.subr.bf16.mxu0 0
      %1741 = vmatpush1.bf16.msra.mxu0 0
      %1742 = vmatprep.subr.bf16.mxu0 0
      %1743 = vmatpush1.bf16.msra.mxu0 0
      %1744 = vmatprep.subr.bf16.mxu0 0
      %1745 = vmatpush1.bf16.msra.mxu0 0
      %1746 = vmatprep.subr.bf16.mxu0 0
      %1747 = vmatpush1.bf16.msra.mxu0 0
      %1748 = vmatprep.subr.bf16.mxu0 0
      %1749 = vmatpush1.bf16.msra.mxu0 0
      %1750 = vmatprep.subr.bf16.mxu0 0
      %1751 = vmatpush1.bf16.msra.mxu0 0
      %1752 = vmatprep.mubr.bf16.mxu0 0
      %1753 = vmatmul.mubr.bf16.gmra.mrb[0].mxu0 %v1708
      %v1754 = vpop.f32.mrb[0].mxu0
      %v1755 = vadd.f32 0.0, %v1754
      %v1756 = vpop.f32.mrb[0].mxu0
      %v1757 = vadd.f32 0.0, %v1756
      %v1758 = vpop.f32.mrb[0].mxu0
      %v1759 = vadd.f32 0.0, %v1758
      %v1760 = vpop.f32.mrb[0].mxu0
      %v1761 = vadd.f32 0.0, %v1760
      %1762 = vmatprep.mubr.bf16.mxu0 0
      %1763 = vmatmul.mubr.bf16.gmra.mrb[0].mxu0 %v1711
      %v1764 = vpop.f32.mrb[0].mxu0
      %v1765 = vadd.f32 0.0, %v1764
      %v1766 = vpop.f32.mrb[0].mxu0
      %v1767 = vadd.f32 0.0, %v1766
      %v1768 = vpop.f32.mrb[0].mxu0
      %v1769 = vpop.f32.mrb[0].mxu0
      %1770 = vdwg.mxu0
      %v1771 = vmax.f32 %v1755, 0.0
      %v1772 = vmax.f32 %v1757, 0.0
      %v1773 = vmax.f32 %v1759, 0.0
      %v1774 = vmax.f32 %v1761, 0.0
      %v1775 = vmax.f32 %v1765, 0.0
      %v1776 = vmax.f32 %v1767, 0.0
      %v1777 = vld [vmem:[%s15] sm:$0xff]
      %v1778 = vld [vmem:[%s15 + $0x8] sm:$0xff]
      %v1779 = vld [vmem:[%s15 + $0x10] sm:$0xff]
      %v1780 = vld [vmem:[#allocation2 + $0x8] sm:$0xff]
      %v1781 = vld [vmem:[#allocation2 + $0x10] sm:$0xf]
      %v1782 = vld [vmem:[#allocation2 + $0x28] sm:$0xff]
      %v1783 = vld [vmem:[#allocation2 + $0x30] sm:$0xf]
      %v1784 = vld [vmem:[#allocation2 + $0x48] sm:$0xff]
      %v1785 = vld [vmem:[#allocation2 + $0x50] sm:$0xf]
      %v1786 = vld [vmem:[%s5] sm:$0xf]
      %v1787 = vld [vmem:[%s5 + $0x4] sm:$0xf]
      %v1788 = vld [vmem:[%s5 + $0x8] sm:$0xf]
      %v1792 = vunpack.c.l.b16 %v1786
      %v1793 = vunpack.c.l.b16 %v1787
      %v1794 = vunpack.c.l.b16 %v1788
      %v1795 = vpack.c.b16 %v1793, %v1792
      %v1796 = vpack.c.b16 %v1794, %v1794
      %v1803 = vunpack.c.l.b16 %v1780
      %v1804 = vunpack.c.h.b16 %v1780
      %v1805 = vunpack.c.l.b16 %v1781
      %v1806 = vunpack.c.l.b16 %v1782
      %v1807 = vunpack.c.h.b16 %v1782
      %v1808 = vunpack.c.l.b16 %v1783
      %v1809 = vunpack.c.l.b16 %v1784
      %v1810 = vunpack.c.h.b16 %v1784
      %v1811 = vunpack.c.l.b16 %v1785
      %v1812 = vpack.c.b16 %v1806, %v1803
      %v1813 = vpack.c.b16 %v1807, %v1804
      %v1814 = vpack.c.b16 %v1808, %v1805
      %v1815 = vpack.c.b16 %v1809, %v1809
      %v1816 = vpack.c.b16 %v1810, %v1810
      %v1817 = vpack.c.b16 %v1811, %v1811
      %1818 = vrot.lane.b32.xlu0 %v1812, 68
      %v1819 = vpop.permute.xlu0 %1818
      %1820 = vrot.lane.b32.xlu0 %v1813, 68
      %v1821 = vpop.permute.xlu0 %1820
      %1822 = vrot.lane.b32.xlu0 %v1814, 68
      %v1823 = vpop.permute.xlu0 %1822
      %1824 = vrot.lane.b32.xlu0 %v1815, 68
      %v1825 = vpop.permute.xlu0 %1824
      %1826 = vrot.lane.b32.xlu0 %v1816, 68
      %v1827 = vpop.permute.xlu0 %1826
      %1828 = vrot.lane.b32.xlu0 %v1817, 68
      %v1829 = vpop.permute.xlu0 %1828
      %vm1830 = vcmask 556032
      %v1831 = vsel %vm1830, %v1819, %v1821
      %v1832 = vsel %vm1830, %v1821, %v1823
      %v1833 = vsel %vm1830, %v1825, %v1827
      %v1834 = vsel %vm1830, %v1827, %v1829
      %v1838 = vsel %vm1706, %v1795, 0
      %v1841 = vsel %vm1706, %v1796, 0
      %v1844 = vsel %vm1713, %v1833, 0
      %v1847 = vsel %vm1713, %v1834, 0
      %1849 = vmatprep.subr.bf16.mxu0 %v1832
      %1850 = vmatpush1.bf16.msra.mxu0 %v1831
      %1851 = vmatprep.subr.bf16.mxu0 %v1847
      %1852 = vmatpush1.bf16.msra.mxu0 %v1844
      %1853 = vmatprep.subr.bf16.mxu0 0
      %1854 = vmatpush1.bf16.msra.mxu0 0
      %1855 = vmatprep.subr.bf16.mxu0 0
      %1856 = vmatpush1.bf16.msra.mxu0 0
      %1857 = vmatprep.subr.bf16.mxu0 0
      %1858 = vmatpush1.bf16.msra.mxu0 0
      %1859 = vmatprep.subr.bf16.mxu0 0
      %1860 = vmatpush1.bf16.msra.mxu0 0
      %1861 = vmatprep.subr.bf16.mxu0 0
      %1862 = vmatpush1.bf16.msra.mxu0 0
      %1863 = vmatprep.subr.bf16.mxu0 0
      %1864 = vmatpush1.bf16.msra.mxu0 0
      %1865 = vmatprep.subr.bf16.mxu0 0
      %1866 = vmatpush1.bf16.msra.mxu0 0
      %1867 = vmatprep.subr.bf16.mxu0 0
      %1868 = vmatpush1.bf16.msra.mxu0 0
      %1869 = vmatprep.subr.bf16.mxu0 0
      %1870 = vmatpush1.bf16.msra.mxu0 0
      %1871 = vmatprep.subr.bf16.mxu0 0
      %1872 = vmatpush1.bf16.msra.mxu0 0
      %1873 = vmatprep.subr.bf16.mxu0 0
      %1874 = vmatpush1.bf16.msra.mxu0 0
      %1875 = vmatprep.subr.bf16.mxu0 0
      %1876 = vmatpush1.bf16.msra.mxu0 0
      %1877 = vmatprep.subr.bf16.mxu0 0
      %1878 = vmatpush1.bf16.msra.mxu0 0
      %1879 = vmatprep.subr.bf16.mxu0 0
      %1880 = vmatpush1.bf16.msra.mxu0 0
      %1881 = vmatprep.mubr.bf16.mxu0 0
      %1882 = vmatmul.mubr.bf16.gmra.mrb[0].mxu0 %v1838
      %v1883 = vpop.f32.mrb[0].mxu0
      %v1884 = vadd.f32 0.0, %v1883
      %v1885 = vpop.f32.mrb[0].mxu0
      %v1886 = vadd.f32 0.0, %v1885
      %v1887 = vpop.f32.mrb[0].mxu0
      %v1888 = vadd.f32 0.0, %v1887
      %v1889 = vpop.f32.mrb[0].mxu0
      %v1890 = vadd.f32 0.0, %v1889
      %1891 = vmatprep.mubr.bf16.mxu0 0
      %1892 = vmatmul.mubr.bf16.gmra.mrb[0].mxu0 %v1841
      %v1893 = vpop.f32.mrb[0].mxu0
      %v1894 = vadd.f32 0.0, %v1893
      %v1895 = vpop.f32.mrb[0].mxu0
      %v1896 = vadd.f32 0.0, %v1895
      %v1897 = vpop.f32.mrb[0].mxu0
      %v1898 = vpop.f32.mrb[0].mxu0
      %1899 = vdwg.mxu0
      %v1900 = vld [vmem:[%s1] ss:$8 sm:$0x3]
      %v1902 = vlaneseq
      %v1903 = vshrl.u32 %v1902, 7
      %v1904 = vsub.s32 0, %v1903
      %v1905 = vrot.slane %v1900, %v1904
      %v1906 = vlaneseq
      %v1907 = vshrl.u32 %v1906, 7
      %v1908 = vsub.s32 1, %v1907
      %v1909 = vrot.slane %v1900, %v1908
      %v1912 = vmul.f32 %v1884, %v1905
      %v1913 = vmul.f32 %v1886, %v1909
      %v1914 = vmul.f32 %v1888, %v1905
      %v1915 = vmul.f32 %v1890, %v1909
      %v1916 = vmul.f32 %v1894, %v1905
      %v1917 = vmul.f32 %v1896, %v1909
      %s1918 = scalar_lea.vmem %s5, 12
      %v1919 = vld [vmem:[%s1918] sm:$0xf]
      %v1920 = vld [vmem:[%s1918 + $0x4] sm:$0xf]
      %v1921 = vld [vmem:[%s1918 + $0x8] sm:$0xf]
      %v1925 = vunpack.c.l.b16 %v1919
      %v1926 = vunpack.c.l.b16 %v1920
      %v1927 = vunpack.c.l.b16 %v1921
      %v1928 = vpack.c.b16 %v1926, %v1925
      %v1929 = vpack.c.b16 %v1927, %v1927
      %1930 = vrot.lane.b32.xlu0 %v1812, 64
      %v1931 = vpop.permute.xlu0 %1930
      %1932 = vrot.lane.b32.xlu0 %v1813, 64
      %v1933 = vpop.permute.xlu0 %1932
      %1934 = vrot.lane.b32.xlu0 %v1814, 64
      %v1935 = vpop.permute.xlu0 %1934
      %1936 = vrot.lane.b32.xlu0 %v1815, 64
      %v1937 = vpop.permute.xlu0 %1936
      %1938 = vrot.lane.b32.xlu0 %v1816, 64
      %v1939 = vpop.permute.xlu0 %1938
      %1940 = vrot.lane.b32.xlu0 %v1817, 64
      %v1941 = vpop.permute.xlu0 %1940
      %vm1942 = vcmask 523264
      %v1943 = vsel %vm1942, %v1931, %v1933
      %v1944 = vsel %vm1942, %v1933, %v1935
      %v1945 = vsel %vm1942, %v1937, %v1939
      %v1946 = vsel %vm1942, %v1939, %v1941
      %v1950 = vsel %vm1706, %v1928, 0
      %v1953 = vsel %vm1706, %v1929, 0
      %v1956 = vsel %vm1713, %v1945, 0
      %v1959 = vsel %vm1713, %v1946, 0
      %1961 = vmatprep.subr.bf16.mxu0 %v1944
      %1962 = vmatpush1.bf16.msra.mxu0 %v1943
      %1963 = vmatprep.subr.bf16.mxu0 %v1959
      %1964 = vmatpush1.bf16.msra.mxu0 %v1956
      %1965 = vmatprep.subr.bf16.mxu0 0
      %1966 = vmatpush1.bf16.msra.mxu0 0
      %1967 = vmatprep.subr.bf16.mxu0 0
      %1968 = vmatpush1.bf16.msra.mxu0 0
      %1969 = vmatprep.subr.bf16.mxu0 0
      %1970 = vmatpush1.bf16.msra.mxu0 0
      %1971 = vmatprep.subr.bf16.mxu0 0
      %1972 = vmatpush1.bf16.msra.mxu0 0
      %1973 = vmatprep.subr.bf16.mxu0 0
      %1974 = vmatpush1.bf16.msra.mxu0 0
      %1975 = vmatprep.subr.bf16.mxu0 0
      %1976 = vmatpush1.bf16.msra.mxu0 0
      %1977 = vmatprep.subr.bf16.mxu0 0
      %1978 = vmatpush1.bf16.msra.mxu0 0
      %1979 = vmatprep.subr.bf16.mxu0 0
      %1980 = vmatpush1.bf16.msra.mxu0 0
      %1981 = vmatprep.subr.bf16.mxu0 0
      %1982 = vmatpush1.bf16.msra.mxu0 0
      %1983 = vmatprep.subr.bf16.mxu0 0
      %1984 = vmatpush1.bf16.msra.mxu0 0
      %1985 = vmatprep.subr.bf16.mxu0 0
      %1986 = vmatpush1.bf16.msra.mxu0 0
      %1987 = vmatprep.subr.bf16.mxu0 0
      %1988 = vmatpush1.bf16.msra.mxu0 0
      %1989 = vmatprep.subr.bf16.mxu0 0
      %1990 = vmatpush1.bf16.msra.mxu0 0
      %1991 = vmatprep.subr.bf16.mxu0 0
      %1992 = vmatpush1.bf16.msra.mxu0 0
      %1993 = vmatprep.mubr.bf16.mxu0 0
      %1994 = vmatmul.mubr.bf16.gmra.mrb[0].mxu0 %v1950
      %v1995 = vpop.f32.mrb[0].mxu0
      %v1996 = vadd.f32 0.0, %v1995
      %v1997 = vpop.f32.mrb[0].mxu0
      %v1998 = vadd.f32 0.0, %v1997
      %v1999 = vpop.f32.mrb[0].mxu0
      %v2000 = vadd.f32 0.0, %v1999
      %v2001 = vpop.f32.mrb[0].mxu0
      %v2002 = vadd.f32 0.0, %v2001
      %2003 = vmatprep.mubr.bf16.mxu0 0
      %2004 = vmatmul.mubr.bf16.gmra.mrb[0].mxu0 %v1953
      %v2005 = vpop.f32.mrb[0].mxu0
      %v2006 = vadd.f32 0.0, %v2005
      %v2007 = vpop.f32.mrb[0].mxu0
      %v2008 = vadd.f32 0.0, %v2007
      %v2009 = vpop.f32.mrb[0].mxu0
      %v2010 = vpop.f32.mrb[0].mxu0
      %2011 = vdwg.mxu0
      %v2012 = vadd.f32 %v1912, %v1996
      %v2013 = vadd.f32 %v1913, %v1998
      %v2014 = vadd.f32 %v1914, %v2000
      %v2015 = vadd.f32 %v1915, %v2002
      %v2016 = vadd.f32 %v1916, %v2006
      %v2017 = vadd.f32 %v1917, %v2008
      %s2018 = scalar_lea.vmem %s5, 24
      %v2019 = vld [vmem:[%s2018] sm:$0xf]
      %v2020 = vld [vmem:[%s2018 + $0x4] sm:$0xf]
      %v2021 = vld [vmem:[%s2018 + $0x8] sm:$0xf]
      %v2025 = vunpack.c.l.b16 %v2019
      %v2026 = vunpack.c.l.b16 %v2020
      %v2027 = vunpack.c.l.b16 %v2021
      %v2028 = vpack.c.b16 %v2026, %v2025
      %v2029 = vpack.c.b16 %v2027, %v2027
      %2030 = vrot.lane.b32.xlu0 %v1812, 60
      %v2031 = vpop.permute.xlu0 %2030
      %2032 = vrot.lane.b32.xlu0 %v1813, 60
      %v2033 = vpop.permute.xlu0 %2032
      %2034 = vrot.lane.b32.xlu0 %v1814, 60
      %v2035 = vpop.permute.xlu0 %2034
      %2036 = vrot.lane.b32.xlu0 %v1815, 60
      %v2037 = vpop.permute.xlu0 %2036
      %2038 = vrot.lane.b32.xlu0 %v1816, 60
      %v2039 = vpop.permute.xlu0 %2038
      %2040 = vrot.lane.b32.xlu0 %v1817, 60
      %v2041 = vpop.permute.xlu0 %2040
      %vm2042 = vcmask 490496
      %v2043 = vsel %vm2042, %v2031, %v2033
      %v2044 = vsel %vm2042, %v2033, %v2035
      %v2045 = vsel %vm2042, %v2037, %v2039
      %v2046 = vsel %vm2042, %v2039, %v2041
      %v2050 = vsel %vm1706, %v2028, 0
      %v2053 = vsel %vm1706, %v2029, 0
      %v2056 = vsel %vm1713, %v2045, 0
      %v2059 = vsel %vm1713, %v2046, 0
      %2061 = vmatprep.subr.bf16.mxu0 %v2044
      %2062 = vmatpush1.bf16.msra.mxu0 %v2043
      %2063 = vmatprep.subr.bf16.mxu0 %v2059
      %2064 = vmatpush1.bf16.msra.mxu0 %v2056
      %2065 = vmatprep.subr.bf16.mxu0 0
      %2066 = vmatpush1.bf16.msra.mxu0 0
      %2067 = vmatprep.subr.bf16.mxu0 0
      %2068 = vmatpush1.bf16.msra.mxu0 0
      %2069 = vmatprep.subr.bf16.mxu0 0
      %2070 = vmatpush1.bf16.msra.mxu0 0
      %2071 = vmatprep.subr.bf16.mxu0 0
      %2072 = vmatpush1.bf16.msra.mxu0 0
      %2073 = vmatprep.subr.bf16.mxu0 0
      %2074 = vmatpush1.bf16.msra.mxu0 0
      %2075 = vmatprep.subr.bf16.mxu0 0
      %2076 = vmatpush1.bf16.msra.mxu0 0
      %2077 = vmatprep.subr.bf16.mxu0 0
      %2078 = vmatpush1.bf16.msra.mxu0 0
      %2079 = vmatprep.subr.bf16.mxu0 0
      %2080 = vmatpush1.bf16.msra.mxu0 0
      %2081 = vmatprep.subr.bf16.mxu0 0
      %2082 = vmatpush1.bf16.msra.mxu0 0
      %2083 = vmatprep.subr.bf16.mxu0 0
      %2084 = vmatpush1.bf16.msra.mxu0 0
      %2085 = vmatprep.subr.bf16.mxu0 0
      %2086 = vmatpush1.bf16.msra.mxu0 0
      %2087 = vmatprep.subr.bf16.mxu0 0
      %2088 = vmatpush1.bf16.msra.mxu0 0
      %2089 = vmatprep.subr.bf16.mxu0 0
      %2090 = vmatpush1.bf16.msra.mxu0 0
      %2091 = vmatprep.subr.bf16.mxu0 0
      %2092 = vmatpush1.bf16.msra.mxu0 0
      %2093 = vmatprep.mubr.bf16.mxu0 0
      %2094 = vmatmul.mubr.bf16.gmra.mrb[0].mxu0 %v2050
      %v2095 = vpop.f32.mrb[0].mxu0
      %v2096 = vadd.f32 0.0, %v2095
      %v2097 = vpop.f32.mrb[0].mxu0
      %v2098 = vadd.f32 0.0, %v2097
      %v2099 = vpop.f32.mrb[0].mxu0
      %v2100 = vadd.f32 0.0, %v2099
      %v2101 = vpop.f32.mrb[0].mxu0
      %v2102 = vadd.f32 0.0, %v2101
      %2103 = vmatprep.mubr.bf16.mxu0 0
      %2104 = vmatmul.mubr.bf16.gmra.mrb[0].mxu0 %v2053
      %v2105 = vpop.f32.mrb[0].mxu0
      %v2106 = vadd.f32 0.0, %v2105
      %v2107 = vpop.f32.mrb[0].mxu0
      %v2108 = vadd.f32 0.0, %v2107
      %v2109 = vpop.f32.mrb[0].mxu0
      %v2110 = vpop.f32.mrb[0].mxu0
      %2111 = vdwg.mxu0
      %s2112 = scalar_lea.vmem %s1, 1
      %v2113 = vld [vmem:[%s2112] ss:$8 sm:$0x3]
      %v2115 = vlaneseq
      %v2116 = vshrl.u32 %v2115, 7
      %v2117 = vsub.s32 0, %v2116
      %v2118 = vrot.slane %v2113, %v2117
      %v2119 = vlaneseq
      %v2120 = vshrl.u32 %v2119, 7
      %v2121 = vsub.s32 1, %v2120
      %v2122 = vrot.slane %v2113, %v2121
      %v2125 = vmul.f32 %v2096, %v2118
      %v2126 = vmul.f32 %v2098, %v2122
      %v2127 = vmul.f32 %v2100, %v2118
      %v2128 = vmul.f32 %v2102, %v2122
      %v2129 = vmul.f32 %v2106, %v2118
      %v2130 = vmul.f32 %v2108, %v2122
      %v2131 = vadd.f32 %v2012, %v2125
      %v2132 = vadd.f32 %v2013, %v2126
      %v2133 = vadd.f32 %v2014, %v2127
      %v2134 = vadd.f32 %v2015, %v2128
      %v2135 = vadd.f32 %v2016, %v2129
      %v2136 = vadd.f32 %v2017, %v2130
      %s2137 = scalar_lea.vmem %s5, 36
      %v2138 = vld [vmem:[%s2137] sm:$0xf]
      %v2139 = vld [vmem:[%s2137 + $0x4] sm:$0xf]
      %v2140 = vld [vmem:[%s2137 + $0x8] sm:$0xf]
      %v2144 = vunpack.c.l.b16 %v2138
      %v2145 = vunpack.c.l.b16 %v2139
      %v2146 = vunpack.c.l.b16 %v2140
      %v2147 = vpack.c.b16 %v2145, %v2144
      %v2148 = vpack.c.b16 %v2146, %v2146
      %2149 = vrot.lane.b32.xlu0 %v1812, 4
      %v2150 = vpop.permute.xlu0 %2149
      %2151 = vrot.lane.b32.xlu0 %v1813, 4
      %v2152 = vpop.permute.xlu0 %2151
      %2153 = vrot.lane.b32.xlu0 %v1814, 4
      %v2154 = vpop.permute.xlu0 %2153
      %2155 = vrot.lane.b32.xlu0 %v1815, 4
      %v2156 = vpop.permute.xlu0 %2155
      %2157 = vrot.lane.b32.xlu0 %v1816, 4
      %v2158 = vpop.permute.xlu0 %2157
      %2159 = vrot.lane.b32.xlu0 %v1817, 4
      %v2160 = vpop.permute.xlu0 %2159
      %vm2161 = vcmask 31744
      %v2162 = vsel %vm2161, %v2150, %v2152
      %v2163 = vsel %vm2161, %v2152, %v2154
      %v2164 = vsel %vm2161, %v2156, %v2158
      %v2165 = vsel %vm2161, %v2158, %v2160
      %v2169 = vsel %vm1706, %v2147, 0
      %v2172 = vsel %vm1706, %v2148, 0
      %v2175 = vsel %vm1713, %v2164, 0
      %v2178 = vsel %vm1713, %v2165, 0
      %2180 = vmatprep.subr.bf16.mxu0 %v2163
      %2181 = vmatpush1.bf16.msra.mxu0 %v2162
      %2182 = vmatprep.subr.bf16.mxu0 %v2178
      %2183 = vmatpush1.bf16.msra.mxu0 %v2175
      %2184 = vmatprep.subr.bf16.mxu0 0
      %2185 = vmatpush1.bf16.msra.mxu0 0
      %2186 = vmatprep.subr.bf16.mxu0 0
      %2187 = vmatpush1.bf16.msra.mxu0 0
      %2188 = vmatprep.subr.bf16.mxu0 0
      %2189 = vmatpush1.bf16.msra.mxu0 0
      %2190 = vmatprep.subr.bf16.mxu0 0
      %2191 = vmatpush1.bf16.msra.mxu0 0
      %2192 = vmatprep.subr.bf16.mxu0 0
      %2193 = vmatpush1.bf16.msra.mxu0 0
      %2194 = vmatprep.subr.bf16.mxu0 0
      %2195 = vmatpush1.bf16.msra.mxu0 0
      %2196 = vmatprep.subr.bf16.mxu0 0
      %2197 = vmatpush1.bf16.msra.mxu0 0
      %2198 = vmatprep.subr.bf16.mxu0 0
      %2199 = vmatpush1.bf16.msra.mxu0 0
      %2200 = vmatprep.subr.bf16.mxu0 0
      %2201 = vmatpush1.bf16.msra.mxu0 0
      %2202 = vmatprep.subr.bf16.mxu0 0
      %2203 = vmatpush1.bf16.msra.mxu0 0
      %2204 = vmatprep.subr.bf16.mxu0 0
      %2205 = vmatpush1.bf16.msra.mxu0 0
      %2206 = vmatprep.subr.bf16.mxu0 0
      %2207 = vmatpush1.bf16.msra.mxu0 0
      %2208 = vmatprep.subr.bf16.mxu0 0
      %2209 = vmatpush1.bf16.msra.mxu0 0
      %2210 = vmatprep.subr.bf16.mxu0 0
      %2211 = vmatpush1.bf16.msra.mxu0 0
      %2212 = vmatprep.mubr.bf16.mxu0 0
      %2213 = vmatmul.mubr.bf16.gmra.mrb[0].mxu0 %v2169
      %v2214 = vpop.f32.mrb[0].mxu0
      %v2215 = vadd.f32 0.0, %v2214
      %v2216 = vpop.f32.mrb[0].mxu0
      %v2217 = vadd.f32 0.0, %v2216
      %v2218 = vpop.f32.mrb[0].mxu0
      %v2219 = vadd.f32 0.0, %v2218
      %v2220 = vpop.f32.mrb[0].mxu0
      %v2221 = vadd.f32 0.0, %v2220
      %2222 = vmatprep.mubr.bf16.mxu0 0
      %2223 = vmatmul.mubr.bf16.gmra.mrb[0].mxu0 %v2172
      %v2224 = vpop.f32.mrb[0].mxu0
      %v2225 = vadd.f32 0.0, %v2224
      %v2226 = vpop.f32.mrb[0].mxu0
      %v2227 = vadd.f32 0.0, %v2226
      %v2228 = vpop.f32.mrb[0].mxu0
      %v2229 = vpop.f32.mrb[0].mxu0
      %2230 = vdwg.mxu0
      %v2231 = vmul.f32 %v2215, %v1905
      %v2232 = vmul.f32 %v2217, %v1909
      %v2233 = vmul.f32 %v2219, %v1905
      %v2234 = vmul.f32 %v2221, %v1909
      %v2235 = vmul.f32 %v2225, %v1905
      %v2236 = vmul.f32 %v2227, %v1909
      %v2237 = vadd.f32 %v2131, %v2231
      %v2238 = vadd.f32 %v2132, %v2232
      %v2239 = vadd.f32 %v2133, %v2233
      %v2240 = vadd.f32 %v2134, %v2234
      %v2241 = vadd.f32 %v2135, %v2235
      %v2242 = vadd.f32 %v2136, %v2236
      %s2243 = scalar_lea.vmem %s5, 48
      %v2244 = vld [vmem:[%s2243] sm:$0xf]
      %v2245 = vld [vmem:[%s2243 + $0x4] sm:$0xf]
      %v2246 = vld [vmem:[%s2243 + $0x8] sm:$0xf]
      %v2250 = vunpack.c.l.b16 %v2244
      %v2251 = vunpack.c.l.b16 %v2245
      %v2252 = vunpack.c.l.b16 %v2246
      %v2253 = vpack.c.b16 %v2251, %v2250
      %v2254 = vpack.c.b16 %v2252, %v2252
      %v2256 = vsel %vm1706, %v2253, 0
      %v2259 = vsel %vm1706, %v2254, 0
      %2261 = vmatprep.subr.bf16.mxu0 %v1673
      %2262 = vmatpush1.bf16.msra.mxu0 %v1672
      %2263 = vmatprep.subr.bf16.mxu0 %v1718
      %2264 = vmatpush1.bf16.msra.mxu0 %v1715
      %2265 = vmatprep.subr.bf16.mxu0 0
      %2266 = vmatpush1.bf16.msra.mxu0 0
      %2267 = vmatprep.subr.bf16.mxu0 0
      %2268 = vmatpush1.bf16.msra.mxu0 0
      %2269 = vmatprep.subr.bf16.mxu0 0
      %2270 = vmatpush1.bf16.msra.mxu0 0
      %2271 = vmatprep.subr.bf16.mxu0 0
      %2272 = vmatpush1.bf16.msra.mxu0 0
      %2273 = vmatprep.subr.bf16.mxu0 0
      %2274 = vmatpush1.bf16.msra.mxu0 0
      %2275 = vmatprep.subr.bf16.mxu0 0
      %2276 = vmatpush1.bf16.msra.mxu0 0
      %2277 = vmatprep.subr.bf16.mxu0 0
      %2278 = vmatpush1.bf16.msra.mxu0 0
      %2279 = vmatprep.subr.bf16.mxu0 0
      %2280 = vmatpush1.bf16.msra.mxu0 0
      %2281 = vmatprep.subr.bf16.mxu0 0
      %2282 = vmatpush1.bf16.msra.mxu0 0
      %2283 = vmatprep.subr.bf16.mxu0 0
      %2284 = vmatpush1.bf16.msra.mxu0 0
      %2285 = vmatprep.subr.bf16.mxu0 0
      %2286 = vmatpush1.bf16.msra.mxu0 0
      %2287 = vmatprep.subr.bf16.mxu0 0
      %2288 = vmatpush1.bf16.msra.mxu0 0
      %2289 = vmatprep.subr.bf16.mxu0 0
      %2290 = vmatpush1.bf16.msra.mxu0 0
      %2291 = vmatprep.subr.bf16.mxu0 0
      %2292 = vmatpush1.bf16.msra.mxu0 0
      %2293 = vmatprep.mubr.bf16.mxu0 0
      %2294 = vmatmul.mubr.bf16.gmra.mrb[0].mxu0 %v2256
      %v2295 = vpop.f32.mrb[0].mxu0
      %v2296 = vadd.f32 0.0, %v2295
      %v2297 = vpop.f32.mrb[0].mxu0
      %v2298 = vadd.f32 0.0, %v2297
      %v2299 = vpop.f32.mrb[0].mxu0
      %v2300 = vadd.f32 0.0, %v2299
      %v2301 = vpop.f32.mrb[0].mxu0
      %v2302 = vadd.f32 0.0, %v2301
      %2303 = vmatprep.mubr.bf16.mxu0 0
      %2304 = vmatmul.mubr.bf16.gmra.mrb[0].mxu0 %v2259
      %v2305 = vpop.f32.mrb[0].mxu0
      %v2306 = vadd.f32 0.0, %v2305
      %v2307 = vpop.f32.mrb[0].mxu0
      %v2308 = vadd.f32 0.0, %v2307
      %v2309 = vpop.f32.mrb[0].mxu0
      %v2310 = vpop.f32.mrb[0].mxu0
      %2311 = vdwg.mxu0
      %v2312 = vadd.f32 %v2237, %v2296
      %v2313 = vadd.f32 %v2238, %v2298
      %v2314 = vadd.f32 %v2239, %v2300
      %v2315 = vadd.f32 %v2240, %v2302
      %v2316 = vadd.f32 %v2241, %v2306
      %v2317 = vadd.f32 %v2242, %v2308
      %v2318 = vld [vmem:[#allocation2 + $0xc] sm:$0xff]
      %v2319 = vld [vmem:[#allocation2 + $0x14] sm:$0xf]
      %v2320 = vld [vmem:[#allocation2 + $0x2c] sm:$0xff]
      %v2321 = vld [vmem:[#allocation2 + $0x34] sm:$0xf]
      %v2322 = vld [vmem:[#allocation2 + $0x4c] sm:$0xff]
      %v2323 = vld [vmem:[#allocation2 + $0x54] sm:$0xf]
      %s2324 = scalar_lea.vmem %s5, 60
      %v2325 = vld [vmem:[%s2324] sm:$0xf]
      %v2326 = vld [vmem:[%s2324 + $0x4] sm:$0xf]
      %v2327 = vld [vmem:[%s2324 + $0x8] sm:$0xf]
      %v2331 = vunpack.c.l.b16 %v2325
      %v2332 = vunpack.c.l.b16 %v2326
      %v2333 = vunpack.c.l.b16 %v2327
      %v2334 = vpack.c.b16 %v2332, %v2331
      %v2335 = vpack.c.b16 %v2333, %v2333
      %v2342 = vunpack.c.l.b16 %v2318
      %v2343 = vunpack.c.h.b16 %v2318
      %v2344 = vunpack.c.l.b16 %v2319
      %v2345 = vunpack.c.l.b16 %v2320
      %v2346 = vunpack.c.h.b16 %v2320
      %v2347 = vunpack.c.l.b16 %v2321
      %v2348 = vunpack.c.l.b16 %v2322
      %v2349 = vunpack.c.h.b16 %v2322
      %v2350 = vunpack.c.l.b16 %v2323
      %v2351 = vpack.c.b16 %v2345, %v2342
      %v2352 = vpack.c.b16 %v2346, %v2343
      %v2353 = vpack.c.b16 %v2347, %v2344
      %v2354 = vpack.c.b16 %v2348, %v2348
      %v2355 = vpack.c.b16 %v2349, %v2349
      %v2356 = vpack.c.b16 %v2350, %v2350
      %2357 = vrot.lane.b32.xlu0 %v2351, 124
      %v2358 = vpop.permute.xlu0 %2357
      %2359 = vrot.lane.b32.xlu0 %v2352, 124
      %v2360 = vpop.permute.xlu0 %2359
      %2361 = vrot.lane.b32.xlu0 %v2353, 124
      %v2362 = vpop.permute.xlu0 %2361
      %2363 = vrot.lane.b32.xlu0 %v2354, 124
      %v2364 = vpop.permute.xlu0 %2363
      %2365 = vrot.lane.b32.xlu0 %v2355, 124
      %v2366 = vpop.permute.xlu0 %2365
      %2367 = vrot.lane.b32.xlu0 %v2356, 124
      %v2368 = vpop.permute.xlu0 %2367
      %vm2369 = vcmask 1014784
      %v2370 = vsel %vm2369, %v2358, %v2360
      %v2371 = vsel %vm2369, %v2360, %v2362
      %v2372 = vsel %vm2369, %v2364, %v2366
      %v2373 = vsel %vm2369, %v2366, %v2368
      %v2377 = vsel %vm1706, %v2334, 0
      %v2380 = vsel %vm1706, %v2335, 0
      %v2383 = vsel %vm1713, %v2372, 0
      %v2386 = vsel %vm1713, %v2373, 0
      %2388 = vmatprep.subr.bf16.mxu0 %v2371
      %2389 = vmatpush1.bf16.msra.mxu0 %v2370
      %2390 = vmatprep.subr.bf16.mxu0 %v2386
      %2391 = vmatpush1.bf16.msra.mxu0 %v2383
      %2392 = vmatprep.subr.bf16.mxu0 0
      %2393 = vmatpush1.bf16.msra.mxu0 0
      %2394 = vmatprep.subr.bf16.mxu0 0
      %2395 = vmatpush1.bf16.msra.mxu0 0
      %2396 = vmatprep.subr.bf16.mxu0 0
      %2397 = vmatpush1.bf16.msra.mxu0 0
      %2398 = vmatprep.subr.bf16.mxu0 0
      %2399 = vmatpush1.bf16.msra.mxu0 0
      %2400 = vmatprep.subr.bf16.mxu0 0
      %2401 = vmatpush1.bf16.msra.mxu0 0
      %2402 = vmatprep.subr.bf16.mxu0 0
      %2403 = vmatpush1.bf16.msra.mxu0 0
      %2404 = vmatprep.subr.bf16.mxu0 0
      %2405 = vmatpush1.bf16.msra.mxu0 0
      %2406 = vmatprep.subr.bf16.mxu0 0
      %2407 = vmatpush1.bf16.msra.mxu0 0
      %2408 = vmatprep.subr.bf16.mxu0 0
      %2409 = vmatpush1.bf16.msra.mxu0 0
      %2410 = vmatprep.subr.bf16.mxu0 0
      %2411 = vmatpush1.bf16.msra.mxu0 0
      %2412 = vmatprep.subr.bf16.mxu0 0
      %2413 = vmatpush1.bf16.msra.mxu0 0
      %2414 = vmatprep.subr.bf16.mxu0 0
      %2415 = vmatpush1.bf16.msra.mxu0 0
      %2416 = vmatprep.subr.bf16.mxu0 0
      %2417 = vmatpush1.bf16.msra.mxu0 0
      %2418 = vmatprep.subr.bf16.mxu0 0
      %2419 = vmatpush1.bf16.msra.mxu0 0
      %2420 = vmatprep.mubr.bf16.mxu0 0
      %2421 = vmatmul.mubr.bf16.gmra.mrb[0].mxu0 %v2377
      %v2422 = vpop.f32.mrb[0].mxu0
      %v2423 = vadd.f32 0.0, %v2422
      %v2424 = vpop.f32.mrb[0].mxu0
      %v2425 = vadd.f32 0.0, %v2424
      %v2426 = vpop.f32.mrb[0].mxu0
      %v2427 = vadd.f32 0.0, %v2426
      %v2428 = vpop.f32.mrb[0].mxu0
      %v2429 = vadd.f32 0.0, %v2428
      %2430 = vmatprep.mubr.bf16.mxu0 0
      %2431 = vmatmul.mubr.bf16.gmra.mrb[0].mxu0 %v2380
      %v2432 = vpop.f32.mrb[0].mxu0
      %v2433 = vadd.f32 0.0, %v2432
      %v2434 = vpop.f32.mrb[0].mxu0
      %v2435 = vadd.f32 0.0, %v2434
      %v2436 = vpop.f32.mrb[0].mxu0
      %v2437 = vpop.f32.mrb[0].mxu0
      %2438 = vdwg.mxu0
      %v2439 = vmul.f32 %v2423, %v2118
      %v2440 = vmul.f32 %v2425, %v2122
      %v2441 = vmul.f32 %v2427, %v2118
      %v2442 = vmul.f32 %v2429, %v2122
      %v2443 = vmul.f32 %v2433, %v2118
      %v2444 = vmul.f32 %v2435, %v2122
      %v2445 = vadd.f32 %v2312, %v2439
      %v2446 = vadd.f32 %v2313, %v2440
      %v2447 = vadd.f32 %v2314, %v2441
      %v2448 = vadd.f32 %v2315, %v2442
      %v2449 = vadd.f32 %v2316, %v2443
      %v2450 = vadd.f32 %v2317, %v2444
      %s2451 = scalar_lea.vmem %s5, 72
      %v2452 = vld [vmem:[%s2451] sm:$0xf]
      %v2453 = vld [vmem:[%s2451 + $0x4] sm:$0xf]
      %v2454 = vld [vmem:[%s2451 + $0x8] sm:$0xf]
      %v2458 = vunpack.c.l.b16 %v2452
      %v2459 = vunpack.c.l.b16 %v2453
      %v2460 = vunpack.c.l.b16 %v2454
      %v2461 = vpack.c.b16 %v2459, %v2458
      %v2462 = vpack.c.b16 %v2460, %v2460
      %2463 = vrot.lane.b32.xlu0 %v2351, 68
      %v2464 = vpop.permute.xlu0 %2463
      %2465 = vrot.lane.b32.xlu0 %v2352, 68
      %v2466 = vpop.permute.xlu0 %2465
      %2467 = vrot.lane.b32.xlu0 %v2353, 68
      %v2468 = vpop.permute.xlu0 %2467
      %2469 = vrot.lane.b32.xlu0 %v2354, 68
      %v2470 = vpop.permute.xlu0 %2469
      %2471 = vrot.lane.b32.xlu0 %v2355, 68
      %v2472 = vpop.permute.xlu0 %2471
      %2473 = vrot.lane.b32.xlu0 %v2356, 68
      %v2474 = vpop.permute.xlu0 %2473
      %v2475 = vsel %vm1830, %v2464, %v2466
      %v2476 = vsel %vm1830, %v2466, %v2468
      %v2477 = vsel %vm1830, %v2470, %v2472
      %v2478 = vsel %vm1830, %v2472, %v2474
      %v2482 = vsel %vm1706, %v2461, 0
      %v2485 = vsel %vm1706, %v2462, 0
      %v2488 = vsel %vm1713, %v2477, 0
      %v2491 = vsel %vm1713, %v2478, 0
      %2493 = vmatprep.subr.bf16.mxu0 %v2476
      %2494 = vmatpush1.bf16.msra.mxu0 %v2475
      %2495 = vmatprep.subr.bf16.mxu0 %v2491
      %2496 = vmatpush1.bf16.msra.mxu0 %v2488
      %2497 = vmatprep.subr.bf16.mxu0 0
      %2498 = vmatpush1.bf16.msra.mxu0 0
      %2499 = vmatprep.subr.bf16.mxu0 0
      %2500 = vmatpush1.bf16.msra.mxu0 0
      %2501 = vmatprep.subr.bf16.mxu0 0
      %2502 = vmatpush1.bf16.msra.mxu0 0
      %2503 = vmatprep.subr.bf16.mxu0 0
      %2504 = vmatpush1.bf16.msra.mxu0 0
      %2505 = vmatprep.subr.bf16.mxu0 0
      %2506 = vmatpush1.bf16.msra.mxu0 0
      %2507 = vmatprep.subr.bf16.mxu0 0
      %2508 = vmatpush1.bf16.msra.mxu0 0
      %2509 = vmatprep.subr.bf16.mxu0 0
      %2510 = vmatpush1.bf16.msra.mxu0 0
      %2511 = vmatprep.subr.bf16.mxu0 0
      %2512 = vmatpush1.bf16.msra.mxu0 0
      %2513 = vmatprep.subr.bf16.mxu0 0
      %2514 = vmatpush1.bf16.msra.mxu0 0
      %2515 = vmatprep.subr.bf16.mxu0 0
      %2516 = vmatpush1.bf16.msra.mxu0 0
      %2517 = vmatprep.subr.bf16.mxu0 0
      %2518 = vmatpush1.bf16.msra.mxu0 0
      %2519 = vmatprep.subr.bf16.mxu0 0
      %2520 = vmatpush1.bf16.msra.mxu0 0
      %2521 = vmatprep.subr.bf16.mxu0 0
      %2522 = vmatpush1.bf16.msra.mxu0 0
      %2523 = vmatprep.subr.bf16.mxu0 0
      %2524 = vmatpush1.bf16.msra.mxu0 0
      %2525 = vmatprep.mubr.bf16.mxu0 0
      %2526 = vmatmul.mubr.bf16.gmra.mrb[0].mxu0 %v2482
      %v2527 = vpop.f32.mrb[0].mxu0
      %v2528 = vadd.f32 0.0, %v2527
      %v2529 = vpop.f32.mrb[0].mxu0
      %v2530 = vadd.f32 0.0, %v2529
      %v2531 = vpop.f32.mrb[0].mxu0
      %v2532 = vadd.f32 0.0, %v2531
      %v2533 = vpop.f32.mrb[0].mxu0
      %v2534 = vadd.f32 0.0, %v2533
      %2535 = vmatprep.mubr.bf16.mxu0 0
      %2536 = vmatmul.mubr.bf16.gmra.mrb[0].mxu0 %v2485
      %v2537 = vpop.f32.mrb[0].mxu0
      %v2538 = vadd.f32 0.0, %v2537
      %v2539 = vpop.f32.mrb[0].mxu0
      %v2540 = vadd.f32 0.0, %v2539
      %v2541 = vpop.f32.mrb[0].mxu0
      %v2542 = vpop.f32.mrb[0].mxu0
      %2543 = vdwg.mxu0
      %v2544 = vmul.f32 %v2528, %v1905
      %v2545 = vmul.f32 %v2530, %v1909
      %v2546 = vmul.f32 %v2532, %v1905
      %v2547 = vmul.f32 %v2534, %v1909
      %v2548 = vmul.f32 %v2538, %v1905
      %v2549 = vmul.f32 %v2540, %v1909
      %v2550 = vadd.f32 %v2445, %v2544
      %v2551 = vadd.f32 %v2446, %v2545
      %v2552 = vadd.f32 %v2447, %v2546
      %v2553 = vadd.f32 %v2448, %v2547
      %v2554 = vadd.f32 %v2449, %v2548
      %v2555 = vadd.f32 %v2450, %v2549
      %s2556 = scalar_lea.vmem %s5, 84
      %v2557 = vld [vmem:[%s2556] sm:$0xf]
      %v2558 = vld [vmem:[%s2556 + $0x4] sm:$0xf]
      %v2559 = vld [vmem:[%s2556 + $0x8] sm:$0xf]
      %v2563 = vunpack.c.l.b16 %v2557
      %v2564 = vunpack.c.l.b16 %v2558
      %v2565 = vunpack.c.l.b16 %v2559
      %v2566 = vpack.c.b16 %v2564, %v2563
      %v2567 = vpack.c.b16 %v2565, %v2565
      %2568 = vrot.lane.b32.xlu0 %v2351, 64
      %v2569 = vpop.permute.xlu0 %2568
      %2570 = vrot.lane.b32.xlu0 %v2352, 64
      %v2571 = vpop.permute.xlu0 %2570
      %2572 = vrot.lane.b32.xlu0 %v2353, 64
      %v2573 = vpop.permute.xlu0 %2572
      %2574 = vrot.lane.b32.xlu0 %v2354, 64
      %v2575 = vpop.permute.xlu0 %2574
      %2576 = vrot.lane.b32.xlu0 %v2355, 64
      %v2577 = vpop.permute.xlu0 %2576
      %2578 = vrot.lane.b32.xlu0 %v2356, 64
      %v2579 = vpop.permute.xlu0 %2578
      %v2580 = vsel %vm1942, %v2569, %v2571
      %v2581 = vsel %vm1942, %v2571, %v2573
      %v2582 = vsel %vm1942, %v2575, %v2577
      %v2583 = vsel %vm1942, %v2577, %v2579
      %v2587 = vsel %vm1706, %v2566, 0
      %v2590 = vsel %vm1706, %v2567, 0
      %v2593 = vsel %vm1713, %v2582, 0
      %v2596 = vsel %vm1713, %v2583, 0
      %2598 = vmatprep.subr.bf16.mxu0 %v2581
      %2599 = vmatpush1.bf16.msra.mxu0 %v2580
      %2600 = vmatprep.subr.bf16.mxu0 %v2596
      %2601 = vmatpush1.bf16.msra.mxu0 %v2593
      %2602 = vmatprep.subr.bf16.mxu0 0
      %2603 = vmatpush1.bf16.msra.mxu0 0
      %2604 = vmatprep.subr.bf16.mxu0 0
      %2605 = vmatpush1.bf16.msra.mxu0 0
      %2606 = vmatprep.subr.bf16.mxu0 0
      %2607 = vmatpush1.bf16.msra.mxu0 0
      %2608 = vmatprep.subr.bf16.mxu0 0
      %2609 = vmatpush1.bf16.msra.mxu0 0
      %2610 = vmatprep.subr.bf16.mxu0 0
      %2611 = vmatpush1.bf16.msra.mxu0 0
      %2612 = vmatprep.subr.bf16.mxu0 0
      %2613 = vmatpush1.bf16.msra.mxu0 0
      %2614 = vmatprep.subr.bf16.mxu0 0
      %2615 = vmatpush1.bf16.msra.mxu0 0
      %2616 = vmatprep.subr.bf16.mxu0 0
      %2617 = vmatpush1.bf16.msra.mxu0 0
      %2618 = vmatprep.subr.bf16.mxu0 0
      %2619 = vmatpush1.bf16.msra.mxu0 0
      %2620 = vmatprep.subr.bf16.mxu0 0
      %2621 = vmatpush1.bf16.msra.mxu0 0
      %2622 = vmatprep.subr.bf16.mxu0 0
      %2623 = vmatpush1.bf16.msra.mxu0 0
      %2624 = vmatprep.subr.bf16.mxu0 0
      %2625 = vmatpush1.bf16.msra.mxu0 0
      %2626 = vmatprep.subr.bf16.mxu0 0
      %2627 = vmatpush1.bf16.msra.mxu0 0
      %2628 = vmatprep.subr.bf16.mxu0 0
      %2629 = vmatpush1.bf16.msra.mxu0 0
      %2630 = vmatprep.mubr.bf16.mxu0 0
      %2631 = vmatmul.mubr.bf16.gmra.mrb[0].mxu0 %v2587
      %v2632 = vpop.f32.mrb[0].mxu0
      %v2633 = vadd.f32 0.0, %v2632
      %v2634 = vpop.f32.mrb[0].mxu0
      %v2635 = vadd.f32 0.0, %v2634
      %v2636 = vpop.f32.mrb[0].mxu0
      %v2637 = vadd.f32 0.0, %v2636
      %v2638 = vpop.f32.mrb[0].mxu0
      %v2639 = vadd.f32 0.0, %v2638
      %2640 = vmatprep.mubr.bf16.mxu0 0
      %2641 = vmatmul.mubr.bf16.gmra.mrb[0].mxu0 %v2590
      %v2642 = vpop.f32.mrb[0].mxu0
      %v2643 = vadd.f32 0.0, %v2642
      %v2644 = vpop.f32.mrb[0].mxu0
      %v2645 = vadd.f32 0.0, %v2644
      %v2646 = vpop.f32.mrb[0].mxu0
      %v2647 = vpop.f32.mrb[0].mxu0
      %2648 = vdwg.mxu0
      %v2649 = vadd.f32 %v2550, %v2633
      %v2650 = vadd.f32 %v2551, %v2635
      %v2651 = vadd.f32 %v2552, %v2637
      %v2652 = vadd.f32 %v2553, %v2639
      %v2653 = vadd.f32 %v2554, %v2643
      %v2654 = vadd.f32 %v2555, %v2645
      %s2655 = scalar_lea.vmem %s5, 96
      %v2656 = vld [vmem:[%s2655] sm:$0xf]
      %v2657 = vld [vmem:[%s2655 + $0x4] sm:$0xf]
      %v2658 = vld [vmem:[%s2655 + $0x8] sm:$0xf]
      %v2662 = vunpack.c.l.b16 %v2656
      %v2663 = vunpack.c.l.b16 %v2657
      %v2664 = vunpack.c.l.b16 %v2658
      %v2665 = vpack.c.b16 %v2663, %v2662
      %v2666 = vpack.c.b16 %v2664, %v2664
      %2667 = vrot.lane.b32.xlu0 %v2351, 60
      %v2668 = vpop.permute.xlu0 %2667
      %2669 = vrot.lane.b32.xlu0 %v2352, 60
      %v2670 = vpop.permute.xlu0 %2669
      %2671 = vrot.lane.b32.xlu0 %v2353, 60
      %v2672 = vpop.permute.xlu0 %2671
      %2673 = vrot.lane.b32.xlu0 %v2354, 60
      %v2674 = vpop.permute.xlu0 %2673
      %2675 = vrot.lane.b32.xlu0 %v2355, 60
      %v2676 = vpop.permute.xlu0 %2675
      %2677 = vrot.lane.b32.xlu0 %v2356, 60
      %v2678 = vpop.permute.xlu0 %2677
      %v2679 = vsel %vm2042, %v2668, %v2670
      %v2680 = vsel %vm2042, %v2670, %v2672
      %v2681 = vsel %vm2042, %v2674, %v2676
      %v2682 = vsel %vm2042, %v2676, %v2678
      %v2686 = vsel %vm1706, %v2665, 0
      %v2689 = vsel %vm1706, %v2666, 0
      %v2692 = vsel %vm1713, %v2681, 0
      %v2695 = vsel %vm1713, %v2682, 0
      %2697 = vmatprep.subr.bf16.mxu0 %v2680
      %2698 = vmatpush1.bf16.msra.mxu0 %v2679
      %2699 = vmatprep.subr.bf16.mxu0 %v2695
      %2700 = vmatpush1.bf16.msra.mxu0 %v2692
      %2701 = vmatprep.subr.bf16.mxu0 0
      %2702 = vmatpush1.bf16.msra.mxu0 0
      %2703 = vmatprep.subr.bf16.mxu0 0
      %2704 = vmatpush1.bf16.msra.mxu0 0
      %2705 = vmatprep.subr.bf16.mxu0 0
      %2706 = vmatpush1.bf16.msra.mxu0 0
      %2707 = vmatprep.subr.bf16.mxu0 0
      %2708 = vmatpush1.bf16.msra.mxu0 0
      %2709 = vmatprep.subr.bf16.mxu0 0
      %2710 = vmatpush1.bf16.msra.mxu0 0
      %2711 = vmatprep.subr.bf16.mxu0 0
      %2712 = vmatpush1.bf16.msra.mxu0 0
      %2713 = vmatprep.subr.bf16.mxu0 0
      %2714 = vmatpush1.bf16.msra.mxu0 0
      %2715 = vmatprep.subr.bf16.mxu0 0
      %2716 = vmatpush1.bf16.msra.mxu0 0
      %2717 = vmatprep.subr.bf16.mxu0 0
      %2718 = vmatpush1.bf16.msra.mxu0 0
      %2719 = vmatprep.subr.bf16.mxu0 0
      %2720 = vmatpush1.bf16.msra.mxu0 0
      %2721 = vmatprep.subr.bf16.mxu0 0
      %2722 = vmatpush1.bf16.msra.mxu0 0
      %2723 = vmatprep.subr.bf16.mxu0 0
      %2724 = vmatpush1.bf16.msra.mxu0 0
      %2725 = vmatprep.subr.bf16.mxu0 0
      %2726 = vmatpush1.bf16.msra.mxu0 0
      %2727 = vmatprep.subr.bf16.mxu0 0
      %2728 = vmatpush1.bf16.msra.mxu0 0
      %2729 = vmatprep.mubr.bf16.mxu0 0
      %2730 = vmatmul.mubr.bf16.gmra.mrb[0].mxu0 %v2686
      %v2731 = vpop.f32.mrb[0].mxu0
      %v2732 = vadd.f32 0.0, %v2731
      %v2733 = vpop.f32.mrb[0].mxu0
      %v2734 = vadd.f32 0.0, %v2733
      %v2735 = vpop.f32.mrb[0].mxu0
      %v2736 = vadd.f32 0.0, %v2735
      %v2737 = vpop.f32.mrb[0].mxu0
      %v2738 = vadd.f32 0.0, %v2737
      %2739 = vmatprep.mubr.bf16.mxu0 0
      %2740 = vmatmul.mubr.bf16.gmra.mrb[0].mxu0 %v2689
      %v2741 = vpop.f32.mrb[0].mxu0
      %v2742 = vadd.f32 0.0, %v2741
      %v2743 = vpop.f32.mrb[0].mxu0
      %v2744 = vadd.f32 0.0, %v2743
      %v2745 = vpop.f32.mrb[0].mxu0
      %v2746 = vpop.f32.mrb[0].mxu0
      %2747 = vdwg.mxu0
      %v2748 = vmul.f32 %v2732, %v2118
      %v2749 = vmul.f32 %v2734, %v2122
      %v2750 = vmul.f32 %v2736, %v2118
      %v2751 = vmul.f32 %v2738, %v2122
      %v2752 = vmul.f32 %v2742, %v2118
      %v2753 = vmul.f32 %v2744, %v2122
      %v2754 = vadd.f32 %v2649, %v2748
      %v2755 = vadd.f32 %v2650, %v2749
      %v2756 = vadd.f32 %v2651, %v2750
      %v2757 = vadd.f32 %v2652, %v2751
      %v2758 = vadd.f32 %v2653, %v2752
      %v2759 = vadd.f32 %v2654, %v2753
      %v2760 = vld [vmem:[%s9] sm:$0xff]
      %v2761 = vld [vmem:[%s9 + $0x8] sm:$0xff]
      %v2762 = vld [vmem:[%s9 + $0x10] sm:$0xff]
      %2764 = vset.pattern.permute.xlu0 0
      %2765 = vperm.xlu0 %2764, %v2760
      %v2766 = vpop.permute.xlu0 %2765
      %2769 = vset.pattern.permute.xlu0 0
      %2770 = vperm.xlu0 %2769, %v2761
      %v2771 = vpop.permute.xlu0 %2770
      %2774 = vset.pattern.permute.xlu0 0
      %2775 = vperm.xlu0 %2774, %v2762
      %v2776 = vpop.permute.xlu0 %2775
      %v2778 = vadd.f32 %v2754, %v2766
      %v2779 = vadd.f32 %v2755, %v2766
      %v2780 = vadd.f32 %v2756, %v2771
      %v2781 = vadd.f32 %v2757, %v2771
      %v2782 = vadd.f32 %v2758, %v2776
      %v2783 = vadd.f32 %v2759, %v2776
      %v2784 = vmax.f32 %v2778, 0.0
      %v2785 = vmax.f32 %v2779, 0.0
      %v2786 = vmax.f32 %v2780, 0.0
      %v2787 = vmax.f32 %v2781, 0.0
      %v2788 = vmax.f32 %v2782, 0.0
      %v2789 = vmax.f32 %v2783, 0.0
      %s2790 = scalar_lea.vmem %s15, 24
      %v2791 = vld [vmem:[%s2790] sm:$0xff]
      %v2792 = vld [vmem:[%s2790 + $0x8] sm:$0xff]
      %v2793 = vld [vmem:[%s2790 + $0x10] sm:$0xff]
      %v2795 = vsel %vm1706, %v2791, 0
      %v2798 = vsel %vm1706, %v2792, 0
      %v2801 = vsel %vm1706, %v2793, 0
      %2803 = vmatprep.subr.mxu0 %v2785
      %2804 = vmatpush1.msra.mxu0 %v2784
      %2805 = vmatprep.subr.mxu0 %v2787
      %2806 = vmatpush1.msra.mxu0 %v2786
      %2807 = vmatprep.subr.mxu0 %v2789
      %2808 = vmatpush1.msra.mxu0 %v2788
      %2809 = vmatprep.subr.mxu0 0.0
      %2810 = vmatpush1.msra.mxu0 0.0
      %2811 = vmatprep.subr.mxu0 0.0
      %2812 = vmatpush1.msra.mxu0 0.0
      %2813 = vmatprep.subr.mxu0 0.0
      %2814 = vmatpush1.msra.mxu0 0.0
      %2815 = vmatprep.subr.mxu0 0.0
      %2816 = vmatpush1.msra.mxu0 0.0
      %2817 = vmatprep.subr.mxu0 0.0
      %2818 = vmatpush1.msra.mxu0 0.0
      %2819 = vmatprep.subr.mxu0 0.0
      %2820 = vmatpush1.msra.mxu0 0.0
      %2821 = vmatprep.subr.mxu0 0.0
      %2822 = vmatpush1.msra.mxu0 0.0
      %2823 = vmatprep.subr.mxu0 0.0
      %2824 = vmatpush1.msra.mxu0 0.0
      %2825 = vmatprep.subr.mxu0 0.0
      %2826 = vmatpush1.msra.mxu0 0.0
      %2827 = vmatprep.subr.mxu0 0.0
      %2828 = vmatpush1.msra.mxu0 0.0
      %2829 = vmatprep.subr.mxu0 0.0
      %2830 = vmatpush1.msra.mxu0 0.0
      %2831 = vmatprep.subr.mxu0 0.0
      %2832 = vmatpush1.msra.mxu0 0.0
      %2833 = vmatprep.subr.mxu0 0.0
      %2834 = vmatpush1.msra.mxu0 0.0
      %2835 = vmatprep.subr.mxu0 0.0
      %2836 = vmatpush1.msra.mxu0 0.0
      %2837 = vmatprep.subr.mxu0 0.0
      %2838 = vmatpush1.msra.mxu0 0.0
      %2839 = vmatprep.subr.mxu0 0.0
      %2840 = vmatpush1.msra.mxu0 0.0
      %2841 = vmatprep.subr.mxu0 0.0
      %2842 = vmatpush1.msra.mxu0 0.0
      %2843 = vmatprep.subr.mxu0 0.0
      %2844 = vmatpush1.msra.mxu0 0.0
      %2845 = vmatprep.subr.mxu0 0.0
      %2846 = vmatpush1.msra.mxu0 0.0
      %2847 = vmatprep.subr.mxu0 0.0
      %2848 = vmatpush1.msra.mxu0 0.0
      %2849 = vmatprep.subr.mxu0 0.0
      %2850 = vmatpush1.msra.mxu0 0.0
      %2851 = vmatprep.subr.mxu0 0.0
      %2852 = vmatpush1.msra.mxu0 0.0
      %2853 = vmatprep.subr.mxu0 0.0
      %2854 = vmatpush1.msra.mxu0 0.0
      %2855 = vmatprep.subr.mxu0 0.0
      %2856 = vmatpush1.msra.mxu0 0.0
      %2857 = vmatprep.subr.mxu0 0.0
      %2858 = vmatpush1.msra.mxu0 0.0
      %2859 = vmatprep.subr.mxu0 0.0
      %2860 = vmatpush1.msra.mxu0 0.0
      %2861 = vmatprep.subr.mxu0 0.0
      %2862 = vmatpush1.msra.mxu0 0.0
      %2863 = vmatprep.subr.mxu0 0.0
      %2864 = vmatpush1.msra.mxu0 0.0
      %2865 = vmatprep.subr.mxu0 0.0
      %2866 = vmatpush1.msra.mxu0 0.0
      %2867 = vmatprep.mubr.f32.mxu0 0.0
      %2868 = vmatmul.mubr.f32.gmra.mrb[0].mxu0 %v2795
      %v2869 = vpop.f32.mrb[0].mxu0
      %v2870 = vadd.f32 0.0, %v2869
      %v2871 = vpop.f32.mrb[0].mxu0
      %v2872 = vadd.f32 0.0, %v2871
      %2873 = vmatprep.mubr.f32.mxu0 0.0
      %2874 = vmatmul.mubr.f32.gmra.mrb[0].mxu0 %v2798
      %v2875 = vpop.f32.mrb[0].mxu0
      %v2876 = vadd.f32 0.0, %v2875
      %v2877 = vpop.f32.mrb[0].mxu0
      %v2878 = vadd.f32 0.0, %v2877
      %2879 = vmatprep.mubr.f32.mxu0 0.0
      %2880 = vmatmul.mubr.f32.gmra.mrb[0].mxu0 %v2801
      %v2881 = vpop.f32.mrb[0].mxu0
      %v2882 = vadd.f32 0.0, %v2881
      %v2883 = vpop.f32.mrb[0].mxu0
      %v2884 = vadd.f32 0.0, %v2883
      %2885 = vdwg.mxu0
      %v2887 = vsel %vm1706, %v1777, 0
      %v2890 = vsel %vm1706, %v1778, 0
      %v2893 = vsel %vm1706, %v1779, 0
      %2895 = vmatprep.subr.mxu0 %v1772
      %2896 = vmatpush1.msra.mxu0 %v1771
      %2897 = vmatprep.subr.mxu0 %v1774
      %2898 = vmatpush1.msra.mxu0 %v1773
      %2899 = vmatprep.subr.mxu0 %v1776
      %2900 = vmatpush1.msra.mxu0 %v1775
      %2901 = vmatprep.subr.mxu0 0.0
      %2902 = vmatpush1.msra.mxu0 0.0
      %2903 = vmatprep.subr.mxu0 0.0
      %2904 = vmatpush1.msra.mxu0 0.0
      %2905 = vmatprep.subr.mxu0 0.0
      %2906 = vmatpush1.msra.mxu0 0.0
      %2907 = vmatprep.subr.mxu0 0.0
      %2908 = vmatpush1.msra.mxu0 0.0
      %2909 = vmatprep.subr.mxu0 0.0
      %2910 = vmatpush1.msra.mxu0 0.0
      %2911 = vmatprep.subr.mxu0 0.0
      %2912 = vmatpush1.msra.mxu0 0.0
      %2913 = vmatprep.subr.mxu0 0.0
      %2914 = vmatpush1.msra.mxu0 0.0
      %2915 = vmatprep.subr.mxu0 0.0
      %2916 = vmatpush1.msra.mxu0 0.0
      %2917 = vmatprep.subr.mxu0 0.0
      %2918 = vmatpush1.msra.mxu0 0.0
      %2919 = vmatprep.subr.mxu0 0.0
      %2920 = vmatpush1.msra.mxu0 0.0
      %2921 = vmatprep.subr.mxu0 0.0
      %2922 = vmatpush1.msra.mxu0 0.0
      %2923 = vmatprep.subr.mxu0 0.0
      %2924 = vmatpush1.msra.mxu0 0.0
      %2925 = vmatprep.subr.mxu0 0.0
      %2926 = vmatpush1.msra.mxu0 0.0
      %2927 = vmatprep.subr.mxu0 0.0
      %2928 = vmatpush1.msra.mxu0 0.0
      %2929 = vmatprep.subr.mxu0 0.0
      %2930 = vmatpush1.msra.mxu0 0.0
      %2931 = vmatprep.subr.mxu0 0.0
      %2932 = vmatpush1.msra.mxu0 0.0
      %2933 = vmatprep.subr.mxu0 0.0
      %2934 = vmatpush1.msra.mxu0 0.0
      %2935 = vmatprep.subr.mxu0 0.0
      %2936 = vmatpush1.msra.mxu0 0.0
      %2937 = vmatprep.subr.mxu0 0.0
      %2938 = vmatpush1.msra.mxu0 0.0
      %2939 = vmatprep.subr.mxu0 0.0
      %2940 = vmatpush1.msra.mxu0 0.0
      %2941 = vmatprep.subr.mxu0 0.0
      %2942 = vmatpush1.msra.mxu0 0.0
      %2943 = vmatprep.subr.mxu0 0.0
      %2944 = vmatpush1.msra.mxu0 0.0
      %2945 = vmatprep.subr.mxu0 0.0
      %2946 = vmatpush1.msra.mxu0 0.0
      %2947 = vmatprep.subr.mxu0 0.0
      %2948 = vmatpush1.msra.mxu0 0.0
      %2949 = vmatprep.subr.mxu0 0.0
      %2950 = vmatpush1.msra.mxu0 0.0
      %2951 = vmatprep.subr.mxu0 0.0
      %2952 = vmatpush1.msra.mxu0 0.0
      %2953 = vmatprep.subr.mxu0 0.0
      %2954 = vmatpush1.msra.mxu0 0.0
      %2955 = vmatprep.subr.mxu0 0.0
      %2956 = vmatpush1.msra.mxu0 0.0
      %2957 = vmatprep.subr.mxu0 0.0
      %2958 = vmatpush1.msra.mxu0 0.0
      %2959 = vmatprep.mubr.f32.mxu0 0.0
      %2960 = vmatmul.mubr.f32.gmra.mrb[0].mxu0 %v2887
      %v2961 = vpop.f32.mrb[0].mxu0
      %v2962 = vadd.f32 %v2870, %v2961
      %v2963 = vpop.f32.mrb[0].mxu0
      %v2964 = vadd.f32 %v2872, %v2963
      %2965 = vmatprep.mubr.f32.mxu0 0.0
      %2966 = vmatmul.mubr.f32.gmra.mrb[0].mxu0 %v2890
      %v2967 = vpop.f32.mrb[0].mxu0
      %v2968 = vadd.f32 %v2876, %v2967
      %v2969 = vpop.f32.mrb[0].mxu0
      %v2970 = vadd.f32 %v2878, %v2969
      %2971 = vmatprep.mubr.f32.mxu0 0.0
      %2972 = vmatmul.mubr.f32.gmra.mrb[0].mxu0 %v2893
      %v2973 = vpop.f32.mrb[0].mxu0
      %v2974 = vadd.f32 %v2882, %v2973
      %v2975 = vpop.f32.mrb[0].mxu0
      %v2976 = vadd.f32 %v2884, %v2975
      %2977 = vdwg.mxu0
      %v2978 = vld [vmem:[#allocation2 + $0x4] sm:$0xff]
      %v2979 = vld [vmem:[#allocation2 + $0xc] sm:$0xf]
      %v2980 = vld [vmem:[#allocation2 + $0x24] sm:$0xff]
      %v2981 = vld [vmem:[#allocation2 + $0x2c] sm:$0xf]
      %v2982 = vld [vmem:[#allocation2 + $0x44] sm:$0xff]
      %v2983 = vld [vmem:[#allocation2 + $0x4c] sm:$0xf]
      %v2984 = vld [vmem:[%s6] sm:$0xf]
      %v2985 = vld [vmem:[%s6 + $0x4] sm:$0xf]
      %v2986 = vld [vmem:[%s6 + $0x8] sm:$0xf]
      %v2990 = vunpack.c.l.b16 %v2984
      %v2991 = vunpack.c.l.b16 %v2985
      %v2992 = vunpack.c.l.b16 %v2986
      %v2993 = vpack.c.b16 %v2991, %v2990
      %v2994 = vpack.c.b16 %v2992, %v2992
      %v3001 = vunpack.c.l.b16 %v2978
      %v3002 = vunpack.c.h.b16 %v2978
      %v3003 = vunpack.c.l.b16 %v2979
      %v3004 = vunpack.c.l.b16 %v2980
      %v3005 = vunpack.c.h.b16 %v2980
      %v3006 = vunpack.c.l.b16 %v2981
      %v3007 = vunpack.c.l.b16 %v2982
      %v3008 = vunpack.c.h.b16 %v2982
      %v3009 = vunpack.c.l.b16 %v2983
      %v3010 = vpack.c.b16 %v3004, %v3001
      %v3011 = vpack.c.b16 %v3005, %v3002
      %v3012 = vpack.c.b16 %v3006, %v3003
      %v3013 = vpack.c.b16 %v3007, %v3007
      %v3014 = vpack.c.b16 %v3008, %v3008
      %v3015 = vpack.c.b16 %v3009, %v3009
      %3016 = vrot.lane.b32.xlu0 %v3010, 8
      %v3017 = vpop.permute.xlu0 %3016
      %3018 = vrot.lane.b32.xlu0 %v3011, 8
      %v3019 = vpop.permute.xlu0 %3018
      %3020 = vrot.lane.b32.xlu0 %v3012, 8
      %v3021 = vpop.permute.xlu0 %3020
      %3022 = vrot.lane.b32.xlu0 %v3013, 8
      %v3023 = vpop.permute.xlu0 %3022
      %3024 = vrot.lane.b32.xlu0 %v3014, 8
      %v3025 = vpop.permute.xlu0 %3024
      %3026 = vrot.lane.b32.xlu0 %v3015, 8
      %v3027 = vpop.permute.xlu0 %3026
      %vm3028 = vcmask 64512
      %v3029 = vsel %vm3028, %v3017, %v3019
      %v3030 = vsel %vm3028, %v3019, %v3021
      %v3031 = vsel %vm3028, %v3023, %v3025
      %v3032 = vsel %vm3028, %v3025, %v3027
      %v3036 = vsel %vm1706, %v2993, 0
      %v3039 = vsel %vm1706, %v2994, 0
      %v3042 = vsel %vm1713, %v3031, 0
      %v3045 = vsel %vm1713, %v3032, 0
      %3047 = vmatprep.subr.bf16.mxu0 %v3030
      %3048 = vmatpush1.bf16.msra.mxu0 %v3029
      %3049 = vmatprep.subr.bf16.mxu0 %v3045
      %3050 = vmatpush1.bf16.msra.mxu0 %v3042
      %3051 = vmatprep.subr.bf16.mxu0 0
      %3052 = vmatpush1.bf16.msra.mxu0 0
      %3053 = vmatprep.subr.bf16.mxu0 0
      %3054 = vmatpush1.bf16.msra.mxu0 0
      %3055 = vmatprep.subr.bf16.mxu0 0
      %3056 = vmatpush1.bf16.msra.mxu0 0
      %3057 = vmatprep.subr.bf16.mxu0 0
      %3058 = vmatpush1.bf16.msra.mxu0 0
      %3059 = vmatprep.subr.bf16.mxu0 0
      %3060 = vmatpush1.bf16.msra.mxu0 0
      %3061 = vmatprep.subr.bf16.mxu0 0
      %3062 = vmatpush1.bf16.msra.mxu0 0
      %3063 = vmatprep.subr.bf16.mxu0 0
      %3064 = vmatpush1.bf16.msra.mxu0 0
      %3065 = vmatprep.subr.bf16.mxu0 0
      %3066 = vmatpush1.bf16.msra.mxu0 0
      %3067 = vmatprep.subr.bf16.mxu0 0
      %3068 = vmatpush1.bf16.msra.mxu0 0
      %3069 = vmatprep.subr.bf16.mxu0 0
      %3070 = vmatpush1.bf16.msra.mxu0 0
      %3071 = vmatprep.subr.bf16.mxu0 0
      %3072 = vmatpush1.bf16.msra.mxu0 0
      %3073 = vmatprep.subr.bf16.mxu0 0
      %3074 = vmatpush1.bf16.msra.mxu0 0
      %3075 = vmatprep.subr.bf16.mxu0 0
      %3076 = vmatpush1.bf16.msra.mxu0 0
      %3077 = vmatprep.subr.bf16.mxu0 0
      %3078 = vmatpush1.bf16.msra.mxu0 0
      %3079 = vmatprep.mubr.bf16.mxu0 0
      %3080 = vmatmul.mubr.bf16.gmra.mrb[0].mxu0 %v3036
      %v3081 = vpop.f32.mrb[0].mxu0
      %v3082 = vadd.f32 0.0, %v3081
      %v3083 = vpop.f32.mrb[0].mxu0
      %v3084 = vadd.f32 0.0, %v3083
      %v3085 = vpop.f32.mrb[0].mxu0
      %v3086 = vadd.f32 0.0, %v3085
      %v3087 = vpop.f32.mrb[0].mxu0
      %v3088 = vadd.f32 0.0, %v3087
      %3089 = vmatprep.mubr.bf16.mxu0 0
      %3090 = vmatmul.mubr.bf16.gmra.mrb[0].mxu0 %v3039
      %v3091 = vpop.f32.mrb[0].mxu0
      %v3092 = vadd.f32 0.0, %v3091
      %v3093 = vpop.f32.mrb[0].mxu0
      %v3094 = vadd.f32 0.0, %v3093
      %v3095 = vpop.f32.mrb[0].mxu0
      %v3096 = vpop.f32.mrb[0].mxu0
      %3097 = vdwg.mxu0
      %s3098 = scalar_lea.vmem %s1, 2
      %v3099 = vld [vmem:[%s3098] ss:$8 sm:$0x3]
      %v3101 = vlaneseq
      %v3102 = vshrl.u32 %v3101, 7
      %v3103 = vsub.s32 0, %v3102
      %v3104 = vrot.slane %v3099, %v3103
      %v3105 = vlaneseq
      %v3106 = vshrl.u32 %v3105, 7
      %v3107 = vsub.s32 1, %v3106
      %v3108 = vrot.slane %v3099, %v3107
      %v3111 = vmul.f32 %v3082, %v3104
      %v3112 = vmul.f32 %v3084, %v3108
      %v3113 = vmul.f32 %v3086, %v3104
      %v3114 = vmul.f32 %v3088, %v3108
      %v3115 = vmul.f32 %v3092, %v3104
      %v3116 = vmul.f32 %v3094, %v3108
      %v3117 = vld [vmem:[#allocation2 + $0x8] sm:$0xff]
      %v3118 = vld [vmem:[#allocation2 + $0x28] sm:$0xff]
      %v3119 = vld [vmem:[#allocation2 + $0x48] sm:$0xff]
      %s3120 = scalar_lea.vmem %s6, 12
      %v3121 = vld [vmem:[%s3120] sm:$0xf]
      %v3122 = vld [vmem:[%s3120 + $0x4] sm:$0xf]
      %v3123 = vld [vmem:[%s3120 + $0x8] sm:$0xf]
      %v3127 = vunpack.c.l.b16 %v3121
      %v3128 = vunpack.c.l.b16 %v3122
      %v3129 = vunpack.c.l.b16 %v3123
      %v3130 = vpack.c.b16 %v3128, %v3127
      %v3131 = vpack.c.b16 %v3129, %v3129
      %v3135 = vunpack.c.l.b16 %v3117
      %v3136 = vunpack.c.h.b16 %v3117
      %v3137 = vunpack.c.l.b16 %v3118
      %v3138 = vunpack.c.h.b16 %v3118
      %v3139 = vunpack.c.l.b16 %v3119
      %v3140 = vunpack.c.h.b16 %v3119
      %v3141 = vpack.c.b16 %v3137, %v3135
      %v3142 = vpack.c.b16 %v3138, %v3136
      %v3143 = vpack.c.b16 %v3139, %v3139
      %v3144 = vpack.c.b16 %v3140, %v3140
      %v3148 = vsel %vm1706, %v3130, 0
      %v3151 = vsel %vm1706, %v3131, 0
      %v3154 = vsel %vm1713, %v3143, 0
      %v3157 = vsel %vm1713, %v3144, 0
      %3159 = vmatprep.subr.bf16.mxu0 %v3142
      %3160 = vmatpush1.bf16.msra.mxu0 %v3141
      %3161 = vmatprep.subr.bf16.mxu0 %v3157
      %3162 = vmatpush1.bf16.msra.mxu0 %v3154
      %3163 = vmatprep.subr.bf16.mxu0 0
      %3164 = vmatpush1.bf16.msra.mxu0 0
      %3165 = vmatprep.subr.bf16.mxu0 0
      %3166 = vmatpush1.bf16.msra.mxu0 0
      %3167 = vmatprep.subr.bf16.mxu0 0
      %3168 = vmatpush1.bf16.msra.mxu0 0
      %3169 = vmatprep.subr.bf16.mxu0 0
      %3170 = vmatpush1.bf16.msra.mxu0 0
      %3171 = vmatprep.subr.bf16.mxu0 0
      %3172 = vmatpush1.bf16.msra.mxu0 0
      %3173 = vmatprep.subr.bf16.mxu0 0
      %3174 = vmatpush1.bf16.msra.mxu0 0
      %3175 = vmatprep.subr.bf16.mxu0 0
      %3176 = vmatpush1.bf16.msra.mxu0 0
      %3177 = vmatprep.subr.bf16.mxu0 0
      %3178 = vmatpush1.bf16.msra.mxu0 0
      %3179 = vmatprep.subr.bf16.mxu0 0
      %3180 = vmatpush1.bf16.msra.mxu0 0
      %3181 = vmatprep.subr.bf16.mxu0 0
      %3182 = vmatpush1.bf16.msra.mxu0 0
      %3183 = vmatprep.subr.bf16.mxu0 0
      %3184 = vmatpush1.bf16.msra.mxu0 0
      %3185 = vmatprep.subr.bf16.mxu0 0
      %3186 = vmatpush1.bf16.msra.mxu0 0
      %3187 = vmatprep.subr.bf16.mxu0 0
      %3188 = vmatpush1.bf16.msra.mxu0 0
      %3189 = vmatprep.subr.bf16.mxu0 0
      %3190 = vmatpush1.bf16.msra.mxu0 0
      %3191 = vmatprep.mubr.bf16.mxu0 0
      %3192 = vmatmul.mubr.bf16.gmra.mrb[0].mxu0 %v3148
      %v3193 = vpop.f32.mrb[0].mxu0
      %v3194 = vadd.f32 0.0, %v3193
      %v3195 = vpop.f32.mrb[0].mxu0
      %v3196 = vadd.f32 0.0, %v3195
      %v3197 = vpop.f32.mrb[0].mxu0
      %v3198 = vadd.f32 0.0, %v3197
      %v3199 = vpop.f32.mrb[0].mxu0
      %v3200 = vadd.f32 0.0, %v3199
      %3201 = vmatprep.mubr.bf16.mxu0 0
      %3202 = vmatmul.mubr.bf16.gmra.mrb[0].mxu0 %v3151
      %v3203 = vpop.f32.mrb[0].mxu0
      %v3204 = vadd.f32 0.0, %v3203
      %v3205 = vpop.f32.mrb[0].mxu0
      %v3206 = vadd.f32 0.0, %v3205
      %v3207 = vpop.f32.mrb[0].mxu0
      %v3208 = vpop.f32.mrb[0].mxu0
      %3209 = vdwg.mxu0
      %v3210 = vadd.f32 %v3111, %v3194
      %v3211 = vadd.f32 %v3112, %v3196
      %v3212 = vadd.f32 %v3113, %v3198
      %v3213 = vadd.f32 %v3114, %v3200
      %v3214 = vadd.f32 %v3115, %v3204
      %v3215 = vadd.f32 %v3116, %v3206
      %s3216 = scalar_lea.vmem %s6, 24
      %v3217 = vld [vmem:[%s3216] sm:$0xf]
      %v3218 = vld [vmem:[%s3216 + $0x4] sm:$0xf]
      %v3219 = vld [vmem:[%s3216 + $0x8] sm:$0xf]
      %v3223 = vunpack.c.l.b16 %v3217
      %v3224 = vunpack.c.l.b16 %v3218
      %v3225 = vunpack.c.l.b16 %v3219
      %v3226 = vpack.c.b16 %v3224, %v3223
      %v3227 = vpack.c.b16 %v3225, %v3225
      %3228 = vrot.lane.b32.xlu0 %v1812, 120
      %v3229 = vpop.permute.xlu0 %3228
      %3230 = vrot.lane.b32.xlu0 %v1813, 120
      %v3231 = vpop.permute.xlu0 %3230
      %3232 = vrot.lane.b32.xlu0 %v1814, 120
      %v3233 = vpop.permute.xlu0 %3232
      %3234 = vrot.lane.b32.xlu0 %v1815, 120
      %v3235 = vpop.permute.xlu0 %3234
      %3236 = vrot.lane.b32.xlu0 %v1816, 120
      %v3237 = vpop.permute.xlu0 %3236
      %3238 = vrot.lane.b32.xlu0 %v1817, 120
      %v3239 = vpop.permute.xlu0 %3238
      %vm3240 = vcmask 982016
      %v3241 = vsel %vm3240, %v3229, %v3231
      %v3242 = vsel %vm3240, %v3231, %v3233
      %v3243 = vsel %vm3240, %v3235, %v3237
      %v3244 = vsel %vm3240, %v3237, %v3239
      %v3248 = vsel %vm1706, %v3226, 0
      %v3251 = vsel %vm1706, %v3227, 0
      %v3254 = vsel %vm1713, %v3243, 0
      %v3257 = vsel %vm1713, %v3244, 0
      %3259 = vmatprep.subr.bf16.mxu0 %v3242
      %3260 = vmatpush1.bf16.msra.mxu0 %v3241
      %3261 = vmatprep.subr.bf16.mxu0 %v3257
      %3262 = vmatpush1.bf16.msra.mxu0 %v3254
      %3263 = vmatprep.subr.bf16.mxu0 0
      %3264 = vmatpush1.bf16.msra.mxu0 0
      %3265 = vmatprep.subr.bf16.mxu0 0
      %3266 = vmatpush1.bf16.msra.mxu0 0
      %3267 = vmatprep.subr.bf16.mxu0 0
      %3268 = vmatpush1.bf16.msra.mxu0 0
      %3269 = vmatprep.subr.bf16.mxu0 0
      %3270 = vmatpush1.bf16.msra.mxu0 0
      %3271 = vmatprep.subr.bf16.mxu0 0
      %3272 = vmatpush1.bf16.msra.mxu0 0
      %3273 = vmatprep.subr.bf16.mxu0 0
      %3274 = vmatpush1.bf16.msra.mxu0 0
      %3275 = vmatprep.subr.bf16.mxu0 0
      %3276 = vmatpush1.bf16.msra.mxu0 0
      %3277 = vmatprep.subr.bf16.mxu0 0
      %3278 = vmatpush1.bf16.msra.mxu0 0
      %3279 = vmatprep.subr.bf16.mxu0 0
      %3280 = vmatpush1.bf16.msra.mxu0 0
      %3281 = vmatprep.subr.bf16.mxu0 0
      %3282 = vmatpush1.bf16.msra.mxu0 0
      %3283 = vmatprep.subr.bf16.mxu0 0
      %3284 = vmatpush1.bf16.msra.mxu0 0
      %3285 = vmatprep.subr.bf16.mxu0 0
      %3286 = vmatpush1.bf16.msra.mxu0 0
      %3287 = vmatprep.subr.bf16.mxu0 0
      %3288 = vmatpush1.bf16.msra.mxu0 0
      %3289 = vmatprep.subr.bf16.mxu0 0
      %3290 = vmatpush1.bf16.msra.mxu0 0
      %3291 = vmatprep.mubr.bf16.mxu0 0
      %3292 = vmatmul.mubr.bf16.gmra.mrb[0].mxu0 %v3248
      %v3293 = vpop.f32.mrb[0].mxu0
      %v3294 = vadd.f32 0.0, %v3293
      %v3295 = vpop.f32.mrb[0].mxu0
      %v3296 = vadd.f32 0.0, %v3295
      %v3297 = vpop.f32.mrb[0].mxu0
      %v3298 = vadd.f32 0.0, %v3297
      %v3299 = vpop.f32.mrb[0].mxu0
      %v3300 = vadd.f32 0.0, %v3299
      %3301 = vmatprep.mubr.bf16.mxu0 0
      %3302 = vmatmul.mubr.bf16.gmra.mrb[0].mxu0 %v3251
      %v3303 = vpop.f32.mrb[0].mxu0
      %v3304 = vadd.f32 0.0, %v3303
      %v3305 = vpop.f32.mrb[0].mxu0
      %v3306 = vadd.f32 0.0, %v3305
      %v3307 = vpop.f32.mrb[0].mxu0
      %v3308 = vpop.f32.mrb[0].mxu0
      %3309 = vdwg.mxu0
      %s3310 = scalar_lea.vmem %s1, 3
      %v3311 = vld [vmem:[%s3310] ss:$8 sm:$0x3]
      %v3313 = vlaneseq
      %v3314 = vshrl.u32 %v3313, 7
      %v3315 = vsub.s32 0, %v3314
      %v3316 = vrot.slane %v3311, %v3315
      %v3317 = vlaneseq
      %v3318 = vshrl.u32 %v3317, 7
      %v3319 = vsub.s32 1, %v3318
      %v3320 = vrot.slane %v3311, %v3319
      %v3323 = vmul.f32 %v3294, %v3316
      %v3324 = vmul.f32 %v3296, %v3320
      %v3325 = vmul.f32 %v3298, %v3316
      %v3326 = vmul.f32 %v3300, %v3320
      %v3327 = vmul.f32 %v3304, %v3316
      %v3328 = vmul.f32 %v3306, %v3320
      %v3329 = vadd.f32 %v3210, %v3323
      %v3330 = vadd.f32 %v3211, %v3324
      %v3331 = vadd.f32 %v3212, %v3325
      %v3332 = vadd.f32 %v3213, %v3326
      %v3333 = vadd.f32 %v3214, %v3327
      %v3334 = vadd.f32 %v3215, %v3328
      %s3335 = scalar_lea.vmem %s6, 36
      %v3336 = vld [vmem:[%s3335] sm:$0xf]
      %v3337 = vld [vmem:[%s3335 + $0x4] sm:$0xf]
      %v3338 = vld [vmem:[%s3335 + $0x8] sm:$0xf]
      %v3342 = vunpack.c.l.b16 %v3336
      %v3343 = vunpack.c.l.b16 %v3337
      %v3344 = vunpack.c.l.b16 %v3338
      %v3345 = vpack.c.b16 %v3343, %v3342
      %v3346 = vpack.c.b16 %v3344, %v3344
      %3347 = vrot.lane.b32.xlu0 %v1812, 8
      %v3348 = vpop.permute.xlu0 %3347
      %3349 = vrot.lane.b32.xlu0 %v1813, 8
      %v3350 = vpop.permute.xlu0 %3349
      %3351 = vrot.lane.b32.xlu0 %v1814, 8
      %v3352 = vpop.permute.xlu0 %3351
      %3353 = vrot.lane.b32.xlu0 %v1815, 8
      %v3354 = vpop.permute.xlu0 %3353
      %3355 = vrot.lane.b32.xlu0 %v1816, 8
      %v3356 = vpop.permute.xlu0 %3355
      %3357 = vrot.lane.b32.xlu0 %v1817, 8
      %v3358 = vpop.permute.xlu0 %3357
      %v3359 = vsel %vm3028, %v3348, %v3350
      %v3360 = vsel %vm3028, %v3350, %v3352
      %v3361 = vsel %vm3028, %v3354, %v3356
      %v3362 = vsel %vm3028, %v3356, %v3358
      %v3366 = vsel %vm1706, %v3345, 0
      %v3369 = vsel %vm1706, %v3346, 0
      %v3372 = vsel %vm1713, %v3361, 0
      %v3375 = vsel %vm1713, %v3362, 0
      %3377 = vmatprep.subr.bf16.mxu0 %v3360
      %3378 = vmatpush1.bf16.msra.mxu0 %v3359
      %3379 = vmatprep.subr.bf16.mxu0 %v3375
      %3380 = vmatpush1.bf16.msra.mxu0 %v3372
      %3381 = vmatprep.subr.bf16.mxu0 0
      %3382 = vmatpush1.bf16.msra.mxu0 0
      %3383 = vmatprep.subr.bf16.mxu0 0
      %3384 = vmatpush1.bf16.msra.mxu0 0
      %3385 = vmatprep.subr.bf16.mxu0 0
      %3386 = vmatpush1.bf16.msra.mxu0 0
      %3387 = vmatprep.subr.bf16.mxu0 0
      %3388 = vmatpush1.bf16.msra.mxu0 0
      %3389 = vmatprep.subr.bf16.mxu0 0
      %3390 = vmatpush1.bf16.msra.mxu0 0
      %3391 = vmatprep.subr.bf16.mxu0 0
      %3392 = vmatpush1.bf16.msra.mxu0 0
      %3393 = vmatprep.subr.bf16.mxu0 0
      %3394 = vmatpush1.bf16.msra.mxu0 0
      %3395 = vmatprep.subr.bf16.mxu0 0
      %3396 = vmatpush1.bf16.msra.mxu0 0
      %3397 = vmatprep.subr.bf16.mxu0 0
      %3398 = vmatpush1.bf16.msra.mxu0 0
      %3399 = vmatprep.subr.bf16.mxu0 0
      %3400 = vmatpush1.bf16.msra.mxu0 0
      %3401 = vmatprep.subr.bf16.mxu0 0
      %3402 = vmatpush1.bf16.msra.mxu0 0
      %3403 = vmatprep.subr.bf16.mxu0 0
      %3404 = vmatpush1.bf16.msra.mxu0 0
      %3405 = vmatprep.subr.bf16.mxu0 0
      %3406 = vmatpush1.bf16.msra.mxu0 0
      %3407 = vmatprep.subr.bf16.mxu0 0
      %3408 = vmatpush1.bf16.msra.mxu0 0
      %3409 = vmatprep.mubr.bf16.mxu0 0
      %3410 = vmatmul.mubr.bf16.gmra.mrb[0].mxu0 %v3366
      %v3411 = vpop.f32.mrb[0].mxu0
      %v3412 = vadd.f32 0.0, %v3411
      %v3413 = vpop.f32.mrb[0].mxu0
      %v3414 = vadd.f32 0.0, %v3413
      %v3415 = vpop.f32.mrb[0].mxu0
      %v3416 = vadd.f32 0.0, %v3415
      %v3417 = vpop.f32.mrb[0].mxu0
      %v3418 = vadd.f32 0.0, %v3417
      %3419 = vmatprep.mubr.bf16.mxu0 0
      %3420 = vmatmul.mubr.bf16.gmra.mrb[0].mxu0 %v3369
      %v3421 = vpop.f32.mrb[0].mxu0
      %v3422 = vadd.f32 0.0, %v3421
      %v3423 = vpop.f32.mrb[0].mxu0
      %v3424 = vadd.f32 0.0, %v3423
      %v3425 = vpop.f32.mrb[0].mxu0
      %v3426 = vpop.f32.mrb[0].mxu0
      %3427 = vdwg.mxu0
      %v3428 = vmul.f32 %v3412, %v3104
      %v3429 = vmul.f32 %v3414, %v3108
      %v3430 = vmul.f32 %v3416, %v3104
      %v3431 = vmul.f32 %v3418, %v3108
      %v3432 = vmul.f32 %v3422, %v3104
      %v3433 = vmul.f32 %v3424, %v3108
      %v3434 = vadd.f32 %v3329, %v3428
      %v3435 = vadd.f32 %v3330, %v3429
      %v3436 = vadd.f32 %v3331, %v3430
      %v3437 = vadd.f32 %v3332, %v3431
      %v3438 = vadd.f32 %v3333, %v3432
      %v3439 = vadd.f32 %v3334, %v3433
      %s3440 = scalar_lea.vmem %s6, 48
      %v3441 = vld [vmem:[%s3440] sm:$0xf]
      %v3442 = vld [vmem:[%s3440 + $0x4] sm:$0xf]
      %v3443 = vld [vmem:[%s3440 + $0x8] sm:$0xf]
      %v3447 = vunpack.c.l.b16 %v3441
      %v3448 = vunpack.c.l.b16 %v3442
      %v3449 = vunpack.c.l.b16 %v3443
      %v3450 = vpack.c.b16 %v3448, %v3447
      %v3451 = vpack.c.b16 %v3449, %v3449
      %v3453 = vsel %vm1706, %v3450, 0
      %v3456 = vsel %vm1706, %v3451, 0
      %3458 = vmatprep.subr.bf16.mxu0 %v1673
      %3459 = vmatpush1.bf16.msra.mxu0 %v1672
      %3460 = vmatprep.subr.bf16.mxu0 %v1718
      %3461 = vmatpush1.bf16.msra.mxu0 %v1715
      %3462 = vmatprep.subr.bf16.mxu0 0
      %3463 = vmatpush1.bf16.msra.mxu0 0
      %3464 = vmatprep.subr.bf16.mxu0 0
      %3465 = vmatpush1.bf16.msra.mxu0 0
      %3466 = vmatprep.subr.bf16.mxu0 0
      %3467 = vmatpush1.bf16.msra.mxu0 0
      %3468 = vmatprep.subr.bf16.mxu0 0
      %3469 = vmatpush1.bf16.msra.mxu0 0
      %3470 = vmatprep.subr.bf16.mxu0 0
      %3471 = vmatpush1.bf16.msra.mxu0 0
      %3472 = vmatprep.subr.bf16.mxu0 0
      %3473 = vmatpush1.bf16.msra.mxu0 0
      %3474 = vmatprep.subr.bf16.mxu0 0
      %3475 = vmatpush1.bf16.msra.mxu0 0
      %3476 = vmatprep.subr.bf16.mxu0 0
      %3477 = vmatpush1.bf16.msra.mxu0 0
      %3478 = vmatprep.subr.bf16.mxu0 0
      %3479 = vmatpush1.bf16.msra.mxu0 0
      %3480 = vmatprep.subr.bf16.mxu0 0
      %3481 = vmatpush1.bf16.msra.mxu0 0
      %3482 = vmatprep.subr.bf16.mxu0 0
      %3483 = vmatpush1.bf16.msra.mxu0 0
      %3484 = vmatprep.subr.bf16.mxu0 0
      %3485 = vmatpush1.bf16.msra.mxu0 0
      %3486 = vmatprep.subr.bf16.mxu0 0
      %3487 = vmatpush1.bf16.msra.mxu0 0
      %3488 = vmatprep.subr.bf16.mxu0 0
      %3489 = vmatpush1.bf16.msra.mxu0 0
      %3490 = vmatprep.mubr.bf16.mxu0 0
      %3491 = vmatmul.mubr.bf16.gmra.mrb[0].mxu0 %v3453
      %v3492 = vpop.f32.mrb[0].mxu0
      %v3493 = vadd.f32 0.0, %v3492
      %v3494 = vpop.f32.mrb[0].mxu0
      %v3495 = vadd.f32 0.0, %v3494
      %v3496 = vpop.f32.mrb[0].mxu0
      %v3497 = vadd.f32 0.0, %v3496
      %v3498 = vpop.f32.mrb[0].mxu0
      %v3499 = vadd.f32 0.0, %v3498
      %3500 = vmatprep.mubr.bf16.mxu0 0
      %3501 = vmatmul.mubr.bf16.gmra.mrb[0].mxu0 %v3456
      %v3502 = vpop.f32.mrb[0].mxu0
      %v3503 = vadd.f32 0.0, %v3502
      %v3504 = vpop.f32.mrb[0].mxu0
      %v3505 = vadd.f32 0.0, %v3504
      %v3506 = vpop.f32.mrb[0].mxu0
      %v3507 = vpop.f32.mrb[0].mxu0
      %3508 = vdwg.mxu0
      %v3509 = vadd.f32 %v3434, %v3493
      %v3510 = vadd.f32 %v3435, %v3495
      %v3511 = vadd.f32 %v3436, %v3497
      %v3512 = vadd.f32 %v3437, %v3499
      %v3513 = vadd.f32 %v3438, %v3503
      %v3514 = vadd.f32 %v3439, %v3505
      %s3515 = scalar_lea.vmem %s6, 60
      %v3516 = vld [vmem:[%s3515] sm:$0xf]
      %v3517 = vld [vmem:[%s3515 + $0x4] sm:$0xf]
      %v3518 = vld [vmem:[%s3515 + $0x8] sm:$0xf]
      %v3522 = vunpack.c.l.b16 %v3516
      %v3523 = vunpack.c.l.b16 %v3517
      %v3524 = vunpack.c.l.b16 %v3518
      %v3525 = vpack.c.b16 %v3523, %v3522
      %v3526 = vpack.c.b16 %v3524, %v3524
      %3527 = vrot.lane.b32.xlu0 %v2351, 120
      %v3528 = vpop.permute.xlu0 %3527
      %3529 = vrot.lane.b32.xlu0 %v2352, 120
      %v3530 = vpop.permute.xlu0 %3529
      %3531 = vrot.lane.b32.xlu0 %v2353, 120
      %v3532 = vpop.permute.xlu0 %3531
      %3533 = vrot.lane.b32.xlu0 %v2354, 120
      %v3534 = vpop.permute.xlu0 %3533
      %3535 = vrot.lane.b32.xlu0 %v2355, 120
      %v3536 = vpop.permute.xlu0 %3535
      %3537 = vrot.lane.b32.xlu0 %v2356, 120
      %v3538 = vpop.permute.xlu0 %3537
      %v3539 = vsel %vm3240, %v3528, %v3530
      %v3540 = vsel %vm3240, %v3530, %v3532
      %v3541 = vsel %vm3240, %v3534, %v3536
      %v3542 = vsel %vm3240, %v3536, %v3538
      %v3546 = vsel %vm1706, %v3525, 0
      %v3549 = vsel %vm1706, %v3526, 0
      %v3552 = vsel %vm1713, %v3541, 0
      %v3555 = vsel %vm1713, %v3542, 0
      %3557 = vmatprep.subr.bf16.mxu0 %v3540
      %3558 = vmatpush1.bf16.msra.mxu0 %v3539
      %3559 = vmatprep.subr.bf16.mxu0 %v3555
      %3560 = vmatpush1.bf16.msra.mxu0 %v3552
      %3561 = vmatprep.subr.bf16.mxu0 0
      %3562 = vmatpush1.bf16.msra.mxu0 0
      %3563 = vmatprep.subr.bf16.mxu0 0
      %3564 = vmatpush1.bf16.msra.mxu0 0
      %3565 = vmatprep.subr.bf16.mxu0 0
      %3566 = vmatpush1.bf16.msra.mxu0 0
      %3567 = vmatprep.subr.bf16.mxu0 0
      %3568 = vmatpush1.bf16.msra.mxu0 0
      %3569 = vmatprep.subr.bf16.mxu0 0
      %3570 = vmatpush1.bf16.msra.mxu0 0
      %3571 = vmatprep.subr.bf16.mxu0 0
      %3572 = vmatpush1.bf16.msra.mxu0 0
      %3573 = vmatprep.subr.bf16.mxu0 0
      %3574 = vmatpush1.bf16.msra.mxu0 0
      %3575 = vmatprep.subr.bf16.mxu0 0
      %3576 = vmatpush1.bf16.msra.mxu0 0
      %3577 = vmatprep.subr.bf16.mxu0 0
      %3578 = vmatpush1.bf16.msra.mxu0 0
      %3579 = vmatprep.subr.bf16.mxu0 0
      %3580 = vmatpush1.bf16.msra.mxu0 0
      %3581 = vmatprep.subr.bf16.mxu0 0
      %3582 = vmatpush1.bf16.msra.mxu0 0
      %3583 = vmatprep.subr.bf16.mxu0 0
      %3584 = vmatpush1.bf16.msra.mxu0 0
      %3585 = vmatprep.subr.bf16.mxu0 0
      %3586 = vmatpush1.bf16.msra.mxu0 0
      %3587 = vmatprep.subr.bf16.mxu0 0
      %3588 = vmatpush1.bf16.msra.mxu0 0
      %3589 = vmatprep.mubr.bf16.mxu0 0
      %3590 = vmatmul.mubr.bf16.gmra.mrb[0].mxu0 %v3546
      %v3591 = vpop.f32.mrb[0].mxu0
      %v3592 = vadd.f32 0.0, %v3591
      %v3593 = vpop.f32.mrb[0].mxu0
      %v3594 = vadd.f32 0.0, %v3593
      %v3595 = vpop.f32.mrb[0].mxu0
      %v3596 = vadd.f32 0.0, %v3595
      %v3597 = vpop.f32.mrb[0].mxu0
      %v3598 = vadd.f32 0.0, %v3597
      %3599 = vmatprep.mubr.bf16.mxu0 0
      %3600 = vmatmul.mubr.bf16.gmra.mrb[0].mxu0 %v3549
      %v3601 = vpop.f32.mrb[0].mxu0
      %v3602 = vadd.f32 0.0, %v3601
      %v3603 = vpop.f32.mrb[0].mxu0
      %v3604 = vadd.f32 0.0, %v3603
      %v3605 = vpop.f32.mrb[0].mxu0
      %v3606 = vpop.f32.mrb[0].mxu0
      %3607 = vdwg.mxu0
      %v3608 = vmul.f32 %v3592, %v3316
      %v3609 = vmul.f32 %v3594, %v3320
      %v3610 = vmul.f32 %v3596, %v3316
      %v3611 = vmul.f32 %v3598, %v3320
      %v3612 = vmul.f32 %v3602, %v3316
      %v3613 = vmul.f32 %v3604, %v3320
      %v3614 = vadd.f32 %v3509, %v3608
      %v3615 = vadd.f32 %v3510, %v3609
      %v3616 = vadd.f32 %v3511, %v3610
      %v3617 = vadd.f32 %v3512, %v3611
      %v3618 = vadd.f32 %v3513, %v3612
      %v3619 = vadd.f32 %v3514, %v3613
      %s3620 = scalar_lea.vmem %s6, 72
      %v3621 = vld [vmem:[%s3620] sm:$0xf]
      %v3622 = vld [vmem:[%s3620 + $0x4] sm:$0xf]
      %v3623 = vld [vmem:[%s3620 + $0x8] sm:$0xf]
      %v3627 = vunpack.c.l.b16 %v3621
      %v3628 = vunpack.c.l.b16 %v3622
      %v3629 = vunpack.c.l.b16 %v3623
      %v3630 = vpack.c.b16 %v3628, %v3627
      %v3631 = vpack.c.b16 %v3629, %v3629
      %3632 = vrot.lane.b32.xlu0 %v2351, 8
      %v3633 = vpop.permute.xlu0 %3632
      %3634 = vrot.lane.b32.xlu0 %v2352, 8
      %v3635 = vpop.permute.xlu0 %3634
      %3636 = vrot.lane.b32.xlu0 %v2353, 8
      %v3637 = vpop.permute.xlu0 %3636
      %3638 = vrot.lane.b32.xlu0 %v2354, 8
      %v3639 = vpop.permute.xlu0 %3638
      %3640 = vrot.lane.b32.xlu0 %v2355, 8
      %v3641 = vpop.permute.xlu0 %3640
      %3642 = vrot.lane.b32.xlu0 %v2356, 8
      %v3643 = vpop.permute.xlu0 %3642
      %v3644 = vsel %vm3028, %v3633, %v3635
      %v3645 = vsel %vm3028, %v3635, %v3637
      %v3646 = vsel %vm3028, %v3639, %v3641
      %v3647 = vsel %vm3028, %v3641, %v3643
      %v3651 = vsel %vm1706, %v3630, 0
      %v3654 = vsel %vm1706, %v3631, 0
      %v3657 = vsel %vm1713, %v3646, 0
      %v3660 = vsel %vm1713, %v3647, 0
      %3662 = vmatprep.subr.bf16.mxu0 %v3645
      %3663 = vmatpush1.bf16.msra.mxu0 %v3644
      %3664 = vmatprep.subr.bf16.mxu0 %v3660
      %3665 = vmatpush1.bf16.msra.mxu0 %v3657
      %3666 = vmatprep.subr.bf16.mxu0 0
      %3667 = vmatpush1.bf16.msra.mxu0 0
      %3668 = vmatprep.subr.bf16.mxu0 0
      %3669 = vmatpush1.bf16.msra.mxu0 0
      %3670 = vmatprep.subr.bf16.mxu0 0
      %3671 = vmatpush1.bf16.msra.mxu0 0
      %3672 = vmatprep.subr.bf16.mxu0 0
      %3673 = vmatpush1.bf16.msra.mxu0 0
      %3674 = vmatprep.subr.bf16.mxu0 0
      %3675 = vmatpush1.bf16.msra.mxu0 0
      %3676 = vmatprep.subr.bf16.mxu0 0
      %3677 = vmatpush1.bf16.msra.mxu0 0
      %3678 = vmatprep.subr.bf16.mxu0 0
      %3679 = vmatpush1.bf16.msra.mxu0 0
      %3680 = vmatprep.subr.bf16.mxu0 0
      %3681 = vmatpush1.bf16.msra.mxu0 0
      %3682 = vmatprep.subr.bf16.mxu0 0
      %3683 = vmatpush1.bf16.msra.mxu0 0
      %3684 = vmatprep.subr.bf16.mxu0 0
      %3685 = vmatpush1.bf16.msra.mxu0 0
      %3686 = vmatprep.subr.bf16.mxu0 0
      %3687 = vmatpush1.bf16.msra.mxu0 0
      %3688 = vmatprep.subr.bf16.mxu0 0
      %3689 = vmatpush1.bf16.msra.mxu0 0
      %3690 = vmatprep.subr.bf16.mxu0 0
      %3691 = vmatpush1.bf16.msra.mxu0 0
      %3692 = vmatprep.subr.bf16.mxu0 0
      %3693 = vmatpush1.bf16.msra.mxu0 0
      %3694 = vmatprep.mubr.bf16.mxu0 0
      %3695 = vmatmul.mubr.bf16.gmra.mrb[0].mxu0 %v3651
      %v3696 = vpop.f32.mrb[0].mxu0
      %v3697 = vadd.f32 0.0, %v3696
      %v3698 = vpop.f32.mrb[0].mxu0
      %v3699 = vadd.f32 0.0, %v3698
      %v3700 = vpop.f32.mrb[0].mxu0
      %v3701 = vadd.f32 0.0, %v3700
      %v3702 = vpop.f32.mrb[0].mxu0
      %v3703 = vadd.f32 0.0, %v3702
      %3704 = vmatprep.mubr.bf16.mxu0 0
      %3705 = vmatmul.mubr.bf16.gmra.mrb[0].mxu0 %v3654
      %v3706 = vpop.f32.mrb[0].mxu0
      %v3707 = vadd.f32 0.0, %v3706
      %v3708 = vpop.f32.mrb[0].mxu0
      %v3709 = vadd.f32 0.0, %v3708
      %v3710 = vpop.f32.mrb[0].mxu0
      %v3711 = vpop.f32.mrb[0].mxu0
      %3712 = vdwg.mxu0
      %v3713 = vmul.f32 %v3697, %v3104
      %v3714 = vmul.f32 %v3699, %v3108
      %v3715 = vmul.f32 %v3701, %v3104
      %v3716 = vmul.f32 %v3703, %v3108
      %v3717 = vmul.f32 %v3707, %v3104
      %v3718 = vmul.f32 %v3709, %v3108
      %v3719 = vadd.f32 %v3614, %v3713
      %v3720 = vadd.f32 %v3615, %v3714
      %v3721 = vadd.f32 %v3616, %v3715
      %v3722 = vadd.f32 %v3617, %v3716
      %v3723 = vadd.f32 %v3618, %v3717
      %v3724 = vadd.f32 %v3619, %v3718
      %v3725 = vld [vmem:[#allocation2 + $0x10] sm:$0xff]
      %v3726 = vld [vmem:[#allocation2 + $0x30] sm:$0xff]
      %v3727 = vld [vmem:[#allocation2 + $0x50] sm:$0xff]
      %s3728 = scalar_lea.vmem %s6, 84
      %v3729 = vld [vmem:[%s3728] sm:$0xf]
      %v3730 = vld [vmem:[%s3728 + $0x4] sm:$0xf]
      %v3731 = vld [vmem:[%s3728 + $0x8] sm:$0xf]
      %v3735 = vunpack.c.l.b16 %v3729
      %v3736 = vunpack.c.l.b16 %v3730
      %v3737 = vunpack.c.l.b16 %v3731
      %v3738 = vpack.c.b16 %v3736, %v3735
      %v3739 = vpack.c.b16 %v3737, %v3737
      %v3743 = vunpack.c.l.b16 %v3725
      %v3744 = vunpack.c.h.b16 %v3725
      %v3745 = vunpack.c.l.b16 %v3726
      %v3746 = vunpack.c.h.b16 %v3726
      %v3747 = vunpack.c.l.b16 %v3727
      %v3748 = vunpack.c.h.b16 %v3727
      %v3749 = vpack.c.b16 %v3745, %v3743
      %v3750 = vpack.c.b16 %v3746, %v3744
      %v3751 = vpack.c.b16 %v3747, %v3747
      %v3752 = vpack.c.b16 %v3748, %v3748
      %v3756 = vsel %vm1706, %v3738, 0
      %v3759 = vsel %vm1706, %v3739, 0
      %v3762 = vsel %vm1713, %v3751, 0
      %v3765 = vsel %vm1713, %v3752, 0
      %3767 = vmatprep.subr.bf16.mxu0 %v3750
      %3768 = vmatpush1.bf16.msra.mxu0 %v3749
      %3769 = vmatprep.subr.bf16.mxu0 %v3765
      %3770 = vmatpush1.bf16.msra.mxu0 %v3762
      %3771 = vmatprep.subr.bf16.mxu0 0
      %3772 = vmatpush1.bf16.msra.mxu0 0
      %3773 = vmatprep.subr.bf16.mxu0 0
      %3774 = vmatpush1.bf16.msra.mxu0 0
      %3775 = vmatprep.subr.bf16.mxu0 0
      %3776 = vmatpush1.bf16.msra.mxu0 0
      %3777 = vmatprep.subr.bf16.mxu0 0
      %3778 = vmatpush1.bf16.msra.mxu0 0
      %3779 = vmatprep.subr.bf16.mxu0 0
      %3780 = vmatpush1.bf16.msra.mxu0 0
      %3781 = vmatprep.subr.bf16.mxu0 0
      %3782 = vmatpush1.bf16.msra.mxu0 0
      %3783 = vmatprep.subr.bf16.mxu0 0
      %3784 = vmatpush1.bf16.msra.mxu0 0
      %3785 = vmatprep.subr.bf16.mxu0 0
      %3786 = vmatpush1.bf16.msra.mxu0 0
      %3787 = vmatprep.subr.bf16.mxu0 0
      %3788 = vmatpush1.bf16.msra.mxu0 0
      %3789 = vmatprep.subr.bf16.mxu0 0
      %3790 = vmatpush1.bf16.msra.mxu0 0
      %3791 = vmatprep.subr.bf16.mxu0 0
      %3792 = vmatpush1.bf16.msra.mxu0 0
      %3793 = vmatprep.subr.bf16.mxu0 0
      %3794 = vmatpush1.bf16.msra.mxu0 0
      %3795 = vmatprep.subr.bf16.mxu0 0
      %3796 = vmatpush1.bf16.msra.mxu0 0
      %3797 = vmatprep.subr.bf16.mxu0 0
      %3798 = vmatpush1.bf16.msra.mxu0 0
      %3799 = vmatprep.mubr.bf16.mxu0 0
      %3800 = vmatmul.mubr.bf16.gmra.mrb[0].mxu0 %v3756
      %v3801 = vpop.f32.mrb[0].mxu0
      %v3802 = vadd.f32 0.0, %v3801
      %v3803 = vpop.f32.mrb[0].mxu0
      %v3804 = vadd.f32 0.0, %v3803
      %v3805 = vpop.f32.mrb[0].mxu0
      %v3806 = vadd.f32 0.0, %v3805
      %v3807 = vpop.f32.mrb[0].mxu0
      %v3808 = vadd.f32 0.0, %v3807
      %3809 = vmatprep.mubr.bf16.mxu0 0
      %3810 = vmatmul.mubr.bf16.gmra.mrb[0].mxu0 %v3759
      %v3811 = vpop.f32.mrb[0].mxu0
      %v3812 = vadd.f32 0.0, %v3811
      %v3813 = vpop.f32.mrb[0].mxu0
      %v3814 = vadd.f32 0.0, %v3813
      %v3815 = vpop.f32.mrb[0].mxu0
      %v3816 = vpop.f32.mrb[0].mxu0
      %3817 = vdwg.mxu0
      %v3818 = vadd.f32 %v3719, %v3802
      %v3819 = vadd.f32 %v3720, %v3804
      %v3820 = vadd.f32 %v3721, %v3806
      %v3821 = vadd.f32 %v3722, %v3808
      %v3822 = vadd.f32 %v3723, %v3812
      %v3823 = vadd.f32 %v3724, %v3814
      %v3824 = vld [vmem:[#allocation2 + $0x10] sm:$0xff]
      %v3825 = vld [vmem:[#allocation2 + $0x18] sm:$0xf]
      %v3826 = vld [vmem:[#allocation2 + $0x30] sm:$0xff]
      %v3827 = vld [vmem:[#allocation2 + $0x38] sm:$0xf]
      %v3828 = vld [vmem:[#allocation2 + $0x50] sm:$0xff]
      %v3829 = vld [vmem:[#allocation2 + $0x58] sm:$0xf]
      %s3830 = scalar_lea.vmem %s6, 96
      %v3831 = vld [vmem:[%s3830] sm:$0xf]
      %v3832 = vld [vmem:[%s3830 + $0x4] sm:$0xf]
      %v3833 = vld [vmem:[%s3830 + $0x8] sm:$0xf]
      %v3837 = vunpack.c.l.b16 %v3831
      %v3838 = vunpack.c.l.b16 %v3832
      %v3839 = vunpack.c.l.b16 %v3833
      %v3840 = vpack.c.b16 %v3838, %v3837
      %v3841 = vpack.c.b16 %v3839, %v3839
      %v3848 = vunpack.c.l.b16 %v3824
      %v3849 = vunpack.c.h.b16 %v3824
      %v3850 = vunpack.c.l.b16 %v3825
      %v3851 = vunpack.c.l.b16 %v3826
      %v3852 = vunpack.c.h.b16 %v3826
      %v3853 = vunpack.c.l.b16 %v3827
      %v3854 = vunpack.c.l.b16 %v3828
      %v3855 = vunpack.c.h.b16 %v3828
      %v3856 = vunpack.c.l.b16 %v3829
      %v3857 = vpack.c.b16 %v3851, %v3848
      %v3858 = vpack.c.b16 %v3852, %v3849
      %v3859 = vpack.c.b16 %v3853, %v3850
      %v3860 = vpack.c.b16 %v3854, %v3854
      %v3861 = vpack.c.b16 %v3855, %v3855
      %v3862 = vpack.c.b16 %v3856, %v3856
      %3863 = vrot.lane.b32.xlu0 %v3857, 120
      %v3864 = vpop.permute.xlu0 %3863
      %3865 = vrot.lane.b32.xlu0 %v3858, 120
      %v3866 = vpop.permute.xlu0 %3865
      %3867 = vrot.lane.b32.xlu0 %v3859, 120
      %v3868 = vpop.permute.xlu0 %3867
      %3869 = vrot.lane.b32.xlu0 %v3860, 120
      %v3870 = vpop.permute.xlu0 %3869
      %3871 = vrot.lane.b32.xlu0 %v3861, 120
      %v3872 = vpop.permute.xlu0 %3871
      %3873 = vrot.lane.b32.xlu0 %v3862, 120
      %v3874 = vpop.permute.xlu0 %3873
      %v3875 = vsel %vm3240, %v3864, %v3866
      %v3876 = vsel %vm3240, %v3866, %v3868
      %v3877 = vsel %vm3240, %v3870, %v3872
      %v3878 = vsel %vm3240, %v3872, %v3874
      %v3882 = vsel %vm1706, %v3840, 0
      %v3885 = vsel %vm1706, %v3841, 0
      %v3888 = vsel %vm1713, %v3877, 0
      %v3891 = vsel %vm1713, %v3878, 0
      %3893 = vmatprep.subr.bf16.mxu0 %v3876
      %3894 = vmatpush1.bf16.msra.mxu0 %v3875
      %3895 = vmatprep.subr.bf16.mxu0 %v3891
      %3896 = vmatpush1.bf16.msra.mxu0 %v3888
      %3897 = vmatprep.subr.bf16.mxu0 0
      %3898 = vmatpush1.bf16.msra.mxu0 0
      %3899 = vmatprep.subr.bf16.mxu0 0
      %3900 = vmatpush1.bf16.msra.mxu0 0
      %3901 = vmatprep.subr.bf16.mxu0 0
      %3902 = vmatpush1.bf16.msra.mxu0 0
      %3903 = vmatprep.subr.bf16.mxu0 0
      %3904 = vmatpush1.bf16.msra.mxu0 0
      %3905 = vmatprep.subr.bf16.mxu0 0
      %3906 = vmatpush1.bf16.msra.mxu0 0
      %3907 = vmatprep.subr.bf16.mxu0 0
      %3908 = vmatpush1.bf16.msra.mxu0 0
      %3909 = vmatprep.subr.bf16.mxu0 0
      %3910 = vmatpush1.bf16.msra.mxu0 0
      %3911 = vmatprep.subr.bf16.mxu0 0
      %3912 = vmatpush1.bf16.msra.mxu0 0
      %3913 = vmatprep.subr.bf16.mxu0 0
      %3914 = vmatpush1.bf16.msra.mxu0 0
      %3915 = vmatprep.subr.bf16.mxu0 0
      %3916 = vmatpush1.bf16.msra.mxu0 0
      %3917 = vmatprep.subr.bf16.mxu0 0
      %3918 = vmatpush1.bf16.msra.mxu0 0
      %3919 = vmatprep.subr.bf16.mxu0 0
      %3920 = vmatpush1.bf16.msra.mxu0 0
      %3921 = vmatprep.subr.bf16.mxu0 0
      %3922 = vmatpush1.bf16.msra.mxu0 0
      %3923 = vmatprep.subr.bf16.mxu0 0
      %3924 = vmatpush1.bf16.msra.mxu0 0
      %3925 = vmatprep.mubr.bf16.mxu0 0
      %3926 = vmatmul.mubr.bf16.gmra.mrb[0].mxu0 %v3882
      %v3927 = vpop.f32.mrb[0].mxu0
      %v3928 = vadd.f32 0.0, %v3927
      %v3929 = vpop.f32.mrb[0].mxu0
      %v3930 = vadd.f32 0.0, %v3929
      %v3931 = vpop.f32.mrb[0].mxu0
      %v3932 = vadd.f32 0.0, %v3931
      %v3933 = vpop.f32.mrb[0].mxu0
      %v3934 = vadd.f32 0.0, %v3933
      %3935 = vmatprep.mubr.bf16.mxu0 0
      %3936 = vmatmul.mubr.bf16.gmra.mrb[0].mxu0 %v3885
      %v3937 = vpop.f32.mrb[0].mxu0
      %v3938 = vadd.f32 0.0, %v3937
      %v3939 = vpop.f32.mrb[0].mxu0
      %v3940 = vadd.f32 0.0, %v3939
      %v3941 = vpop.f32.mrb[0].mxu0
      %v3942 = vpop.f32.mrb[0].mxu0
      %3943 = vdwg.mxu0
      %v3944 = vmul.f32 %v3928, %v3316
      %v3945 = vmul.f32 %v3930, %v3320
      %v3946 = vmul.f32 %v3932, %v3316
      %v3947 = vmul.f32 %v3934, %v3320
      %v3948 = vmul.f32 %v3938, %v3316
      %v3949 = vmul.f32 %v3940, %v3320
      %v3950 = vadd.f32 %v3818, %v3944
      %v3951 = vadd.f32 %v3819, %v3945
      %v3952 = vadd.f32 %v3820, %v3946
      %v3953 = vadd.f32 %v3821, %v3947
      %v3954 = vadd.f32 %v3822, %v3948
      %v3955 = vadd.f32 %v3823, %v3949
      %v3956 = vld [vmem:[%s10] sm:$0xff]
      %v3957 = vld [vmem:[%s10 + $0x8] sm:$0xff]
      %v3958 = vld [vmem:[%s10 + $0x10] sm:$0xff]
      %3960 = vset.pattern.permute.xlu0 0
      %3961 = vperm.xlu0 %3960, %v3956
      %v3962 = vpop.permute.xlu0 %3961
      %3965 = vset.pattern.permute.xlu0 0
      %3966 = vperm.xlu0 %3965, %v3957
      %v3967 = vpop.permute.xlu0 %3966
      %3970 = vset.pattern.permute.xlu0 0
      %3971 = vperm.xlu0 %3970, %v3958
      %v3972 = vpop.permute.xlu0 %3971
      %v3974 = vadd.f32 %v3950, %v3962
      %v3975 = vadd.f32 %v3951, %v3962
      %v3976 = vadd.f32 %v3952, %v3967
      %v3977 = vadd.f32 %v3953, %v3967
      %v3978 = vadd.f32 %v3954, %v3972
      %v3979 = vadd.f32 %v3955, %v3972
      %v3980 = vmax.f32 %v3974, 0.0
      %v3981 = vmax.f32 %v3975, 0.0
      %v3982 = vmax.f32 %v3976, 0.0
      %v3983 = vmax.f32 %v3977, 0.0
      %v3984 = vmax.f32 %v3978, 0.0
      %v3985 = vmax.f32 %v3979, 0.0
      %s3986 = scalar_lea.vmem %s15, 48
      %v3987 = vld [vmem:[%s3986] sm:$0xff]
      %v3988 = vld [vmem:[%s3986 + $0x8] sm:$0xff]
      %v3989 = vld [vmem:[%s3986 + $0x10] sm:$0xff]
      %v3991 = vsel %vm1706, %v3987, 0
      %v3994 = vsel %vm1706, %v3988, 0
      %v3997 = vsel %vm1706, %v3989, 0
      %3999 = vmatprep.subr.mxu0 %v3981
      %4000 = vmatpush1.msra.mxu0 %v3980
      %4001 = vmatprep.subr.mxu0 %v3983
      %4002 = vmatpush1.msra.mxu0 %v3982
      %4003 = vmatprep.subr.mxu0 %v3985
      %4004 = vmatpush1.msra.mxu0 %v3984
      %4005 = vmatprep.subr.mxu0 0.0
      %4006 = vmatpush1.msra.mxu0 0.0
      %4007 = vmatprep.subr.mxu0 0.0
      %4008 = vmatpush1.msra.mxu0 0.0
      %4009 = vmatprep.subr.mxu0 0.0
      %4010 = vmatpush1.msra.mxu0 0.0
      %4011 = vmatprep.subr.mxu0 0.0
      %4012 = vmatpush1.msra.mxu0 0.0
      %4013 = vmatprep.subr.mxu0 0.0
      %4014 = vmatpush1.msra.mxu0 0.0
      %4015 = vmatprep.subr.mxu0 0.0
      %4016 = vmatpush1.msra.mxu0 0.0
      %4017 = vmatprep.subr.mxu0 0.0
      %4018 = vmatpush1.msra.mxu0 0.0
      %4019 = vmatprep.subr.mxu0 0.0
      %4020 = vmatpush1.msra.mxu0 0.0
      %4021 = vmatprep.subr.mxu0 0.0
      %4022 = vmatpush1.msra.mxu0 0.0
      %4023 = vmatprep.subr.mxu0 0.0
      %4024 = vmatpush1.msra.mxu0 0.0
      %4025 = vmatprep.subr.mxu0 0.0
      %4026 = vmatpush1.msra.mxu0 0.0
      %4027 = vmatprep.subr.mxu0 0.0
      %4028 = vmatpush1.msra.mxu0 0.0
      %4029 = vmatprep.subr.mxu0 0.0
      %4030 = vmatpush1.msra.mxu0 0.0
      %4031 = vmatprep.subr.mxu0 0.0
      %4032 = vmatpush1.msra.mxu0 0.0
      %4033 = vmatprep.subr.mxu0 0.0
      %4034 = vmatpush1.msra.mxu0 0.0
      %4035 = vmatprep.subr.mxu0 0.0
      %4036 = vmatpush1.msra.mxu0 0.0
      %4037 = vmatprep.subr.mxu0 0.0
      %4038 = vmatpush1.msra.mxu0 0.0
      %4039 = vmatprep.subr.mxu0 0.0
      %4040 = vmatpush1.msra.mxu0 0.0
      %4041 = vmatprep.subr.mxu0 0.0
      %4042 = vmatpush1.msra.mxu0 0.0
      %4043 = vmatprep.subr.mxu0 0.0
      %4044 = vmatpush1.msra.mxu0 0.0
      %4045 = vmatprep.subr.mxu0 0.0
      %4046 = vmatpush1.msra.mxu0 0.0
      %4047 = vmatprep.subr.mxu0 0.0
      %4048 = vmatpush1.msra.mxu0 0.0
      %4049 = vmatprep.subr.mxu0 0.0
      %4050 = vmatpush1.msra.mxu0 0.0
      %4051 = vmatprep.subr.mxu0 0.0
      %4052 = vmatpush1.msra.mxu0 0.0
      %4053 = vmatprep.subr.mxu0 0.0
      %4054 = vmatpush1.msra.mxu0 0.0
      %4055 = vmatprep.subr.mxu0 0.0
      %4056 = vmatpush1.msra.mxu0 0.0
      %4057 = vmatprep.subr.mxu0 0.0
      %4058 = vmatpush1.msra.mxu0 0.0
      %4059 = vmatprep.subr.mxu0 0.0
      %4060 = vmatpush1.msra.mxu0 0.0
      %4061 = vmatprep.subr.mxu0 0.0
      %4062 = vmatpush1.msra.mxu0 0.0
      %4063 = vmatprep.mubr.f32.mxu0 0.0
      %4064 = vmatmul.mubr.f32.gmra.mrb[0].mxu0 %v3991
      %v4065 = vpop.f32.mrb[0].mxu0
      %v4066 = vadd.f32 0.0, %v4065
      %v4067 = vpop.f32.mrb[0].mxu0
      %v4068 = vadd.f32 0.0, %v4067
      %4069 = vmatprep.mubr.f32.mxu0 0.0
      %4070 = vmatmul.mubr.f32.gmra.mrb[0].mxu0 %v3994
      %v4071 = vpop.f32.mrb[0].mxu0
      %v4072 = vadd.f32 0.0, %v4071
      %v4073 = vpop.f32.mrb[0].mxu0
      %v4074 = vadd.f32 0.0, %v4073
      %4075 = vmatprep.mubr.f32.mxu0 0.0
      %4076 = vmatmul.mubr.f32.gmra.mrb[0].mxu0 %v3997
      %v4077 = vpop.f32.mrb[0].mxu0
      %v4078 = vadd.f32 0.0, %v4077
      %v4079 = vpop.f32.mrb[0].mxu0
      %v4080 = vadd.f32 0.0, %v4079
      %4081 = vdwg.mxu0
      %v4082 = vadd.f32 %v2962, %v4066
      %v4083 = vadd.f32 %v2964, %v4068
      %v4084 = vadd.f32 %v2968, %v4072
      %v4085 = vadd.f32 %v2970, %v4074
      %v4086 = vadd.f32 %v2974, %v4078
      %v4087 = vadd.f32 %v2976, %v4080
      %v4088 = vld [vmem:[%s7] sm:$0xf]
      %v4089 = vld [vmem:[%s7 + $0x4] sm:$0xf]
      %v4090 = vld [vmem:[%s7 + $0x8] sm:$0xf]
      %v4094 = vunpack.c.l.b16 %v4088
      %v4095 = vunpack.c.l.b16 %v4089
      %v4096 = vunpack.c.l.b16 %v4090
      %v4097 = vpack.c.b16 %v4095, %v4094
      %v4098 = vpack.c.b16 %v4096, %v4096
      %4099 = vrot.lane.b32.xlu0 %v3010, 76
      %v4100 = vpop.permute.xlu0 %4099
      %4101 = vrot.lane.b32.xlu0 %v3011, 76
      %v4102 = vpop.permute.xlu0 %4101
      %4103 = vrot.lane.b32.xlu0 %v3012, 76
      %v4104 = vpop.permute.xlu0 %4103
      %4105 = vrot.lane.b32.xlu0 %v3013, 76
      %v4106 = vpop.permute.xlu0 %4105
      %4107 = vrot.lane.b32.xlu0 %v3014, 76
      %v4108 = vpop.permute.xlu0 %4107
      %4109 = vrot.lane.b32.xlu0 %v3015, 76
      %v4110 = vpop.permute.xlu0 %4109
      %vm4111 = vcmask 621568
      %v4112 = vsel %vm4111, %v4100, %v4102
      %v4113 = vsel %vm4111, %v4102, %v4104
      %v4114 = vsel %vm4111, %v4106, %v4108
      %v4115 = vsel %vm4111, %v4108, %v4110
      %v4119 = vsel %vm1706, %v4097, 0
      %v4122 = vsel %vm1706, %v4098, 0
      %v4125 = vsel %vm1713, %v4114, 0
      %v4128 = vsel %vm1713, %v4115, 0
      %4130 = vmatprep.subr.bf16.mxu0 %v4113
      %4131 = vmatpush1.bf16.msra.mxu0 %v4112
      %4132 = vmatprep.subr.bf16.mxu0 %v4128
      %4133 = vmatpush1.bf16.msra.mxu0 %v4125
      %4134 = vmatprep.subr.bf16.mxu0 0
      %4135 = vmatpush1.bf16.msra.mxu0 0
      %4136 = vmatprep.subr.bf16.mxu0 0
      %4137 = vmatpush1.bf16.msra.mxu0 0
      %4138 = vmatprep.subr.bf16.mxu0 0
      %4139 = vmatpush1.bf16.msra.mxu0 0
      %4140 = vmatprep.subr.bf16.mxu0 0
      %4141 = vmatpush1.bf16.msra.mxu0 0
      %4142 = vmatprep.subr.bf16.mxu0 0
      %4143 = vmatpush1.bf16.msra.mxu0 0
      %4144 = vmatprep.subr.bf16.mxu0 0
      %4145 = vmatpush1.bf16.msra.mxu0 0
      %4146 = vmatprep.subr.bf16.mxu0 0
      %4147 = vmatpush1.bf16.msra.mxu0 0
      %4148 = vmatprep.subr.bf16.mxu0 0
      %4149 = vmatpush1.bf16.msra.mxu0 0
      %4150 = vmatprep.subr.bf16.mxu0 0
      %4151 = vmatpush1.bf16.msra.mxu0 0
      %4152 = vmatprep.subr.bf16.mxu0 0
      %4153 = vmatpush1.bf16.msra.mxu0 0
      %4154 = vmatprep.subr.bf16.mxu0 0
      %4155 = vmatpush1.bf16.msra.mxu0 0
      %4156 = vmatprep.subr.bf16.mxu0 0
      %4157 = vmatpush1.bf16.msra.mxu0 0
      %4158 = vmatprep.subr.bf16.mxu0 0
      %4159 = vmatpush1.bf16.msra.mxu0 0
      %4160 = vmatprep.subr.bf16.mxu0 0
      %4161 = vmatpush1.bf16.msra.mxu0 0
      %4162 = vmatprep.mubr.bf16.mxu0 0
      %4163 = vmatmul.mubr.bf16.gmra.mrb[0].mxu0 %v4119
      %v4164 = vpop.f32.mrb[0].mxu0
      %v4165 = vadd.f32 0.0, %v4164
      %v4166 = vpop.f32.mrb[0].mxu0
      %v4167 = vadd.f32 0.0, %v4166
      %v4168 = vpop.f32.mrb[0].mxu0
      %v4169 = vadd.f32 0.0, %v4168
      %v4170 = vpop.f32.mrb[0].mxu0
      %v4171 = vadd.f32 0.0, %v4170
      %4172 = vmatprep.mubr.bf16.mxu0 0
      %4173 = vmatmul.mubr.bf16.gmra.mrb[0].mxu0 %v4122
      %v4174 = vpop.f32.mrb[0].mxu0
      %v4175 = vadd.f32 0.0, %v4174
      %v4176 = vpop.f32.mrb[0].mxu0
      %v4177 = vadd.f32 0.0, %v4176
      %v4178 = vpop.f32.mrb[0].mxu0
      %v4179 = vpop.f32.mrb[0].mxu0
      %4180 = vdwg.mxu0
      %s4181 = scalar_lea.vmem %s1, 4
      %v4182 = vld [vmem:[%s4181] ss:$8 sm:$0x3]
      %v4184 = vlaneseq
      %v4185 = vshrl.u32 %v4184, 7
      %v4186 = vsub.s32 0, %v4185
      %v4187 = vrot.slane %v4182, %v4186
      %v4188 = vlaneseq
      %v4189 = vshrl.u32 %v4188, 7
      %v4190 = vsub.s32 1, %v4189
      %v4191 = vrot.slane %v4182, %v4190
      %v4194 = vmul.f32 %v4165, %v4187
      %v4195 = vmul.f32 %v4167, %v4191
      %v4196 = vmul.f32 %v4169, %v4187
      %v4197 = vmul.f32 %v4171, %v4191
      %v4198 = vmul.f32 %v4175, %v4187
      %v4199 = vmul.f32 %v4177, %v4191
      %s4200 = scalar_lea.vmem %s7, 12
      %v4201 = vld [vmem:[%s4200] sm:$0xf]
      %v4202 = vld [vmem:[%s4200 + $0x4] sm:$0xf]
      %v4203 = vld [vmem:[%s4200 + $0x8] sm:$0xf]
      %v4207 = vunpack.c.l.b16 %v4201
      %v4208 = vunpack.c.l.b16 %v4202
      %v4209 = vunpack.c.l.b16 %v4203
      %v4210 = vpack.c.b16 %v4208, %v4207
      %v4211 = vpack.c.b16 %v4209, %v4209
      %4212 = vrot.lane.b32.xlu0 %v3010, 64
      %v4213 = vpop.permute.xlu0 %4212
      %4214 = vrot.lane.b32.xlu0 %v3011, 64
      %v4215 = vpop.permute.xlu0 %4214
      %4216 = vrot.lane.b32.xlu0 %v3012, 64
      %v4217 = vpop.permute.xlu0 %4216
      %4218 = vrot.lane.b32.xlu0 %v3013, 64
      %v4219 = vpop.permute.xlu0 %4218
      %4220 = vrot.lane.b32.xlu0 %v3014, 64
      %v4221 = vpop.permute.xlu0 %4220
      %4222 = vrot.lane.b32.xlu0 %v3015, 64
      %v4223 = vpop.permute.xlu0 %4222
      %v4224 = vsel %vm1942, %v4213, %v4215
      %v4225 = vsel %vm1942, %v4215, %v4217
      %v4226 = vsel %vm1942, %v4219, %v4221
      %v4227 = vsel %vm1942, %v4221, %v4223
      %v4231 = vsel %vm1706, %v4210, 0
      %v4234 = vsel %vm1706, %v4211, 0
      %v4237 = vsel %vm1713, %v4226, 0
      %v4240 = vsel %vm1713, %v4227, 0
      %4242 = vmatprep.subr.bf16.mxu0 %v4225
      %4243 = vmatpush1.bf16.msra.mxu0 %v4224
      %4244 = vmatprep.subr.bf16.mxu0 %v4240
      %4245 = vmatpush1.bf16.msra.mxu0 %v4237
      %4246 = vmatprep.subr.bf16.mxu0 0
      %4247 = vmatpush1.bf16.msra.mxu0 0
      %4248 = vmatprep.subr.bf16.mxu0 0
      %4249 = vmatpush1.bf16.msra.mxu0 0
      %4250 = vmatprep.subr.bf16.mxu0 0
      %4251 = vmatpush1.bf16.msra.mxu0 0
      %4252 = vmatprep.subr.bf16.mxu0 0
      %4253 = vmatpush1.bf16.msra.mxu0 0
      %4254 = vmatprep.subr.bf16.mxu0 0
      %4255 = vmatpush1.bf16.msra.mxu0 0
      %4256 = vmatprep.subr.bf16.mxu0 0
      %4257 = vmatpush1.bf16.msra.mxu0 0
      %4258 = vmatprep.subr.bf16.mxu0 0
      %4259 = vmatpush1.bf16.msra.mxu0 0
      %4260 = vmatprep.subr.bf16.mxu0 0
      %4261 = vmatpush1.bf16.msra.mxu0 0
      %4262 = vmatprep.subr.bf16.mxu0 0
      %4263 = vmatpush1.bf16.msra.mxu0 0
      %4264 = vmatprep.subr.bf16.mxu0 0
      %4265 = vmatpush1.bf16.msra.mxu0 0
      %4266 = vmatprep.subr.bf16.mxu0 0
      %4267 = vmatpush1.bf16.msra.mxu0 0
      %4268 = vmatprep.subr.bf16.mxu0 0
      %4269 = vmatpush1.bf16.msra.mxu0 0
      %4270 = vmatprep.subr.bf16.mxu0 0
      %4271 = vmatpush1.bf16.msra.mxu0 0
      %4272 = vmatprep.subr.bf16.mxu0 0
      %4273 = vmatpush1.bf16.msra.mxu0 0
      %4274 = vmatprep.mubr.bf16.mxu0 0
      %4275 = vmatmul.mubr.bf16.gmra.mrb[0].mxu0 %v4231
      %v4276 = vpop.f32.mrb[0].mxu0
      %v4277 = vadd.f32 0.0, %v4276
      %v4278 = vpop.f32.mrb[0].mxu0
      %v4279 = vadd.f32 0.0, %v4278
      %v4280 = vpop.f32.mrb[0].mxu0
      %v4281 = vadd.f32 0.0, %v4280
      %v4282 = vpop.f32.mrb[0].mxu0
      %v4283 = vadd.f32 0.0, %v4282
      %4284 = vmatprep.mubr.bf16.mxu0 0
      %4285 = vmatmul.mubr.bf16.gmra.mrb[0].mxu0 %v4234
      %v4286 = vpop.f32.mrb[0].mxu0
      %v4287 = vadd.f32 0.0, %v4286
      %v4288 = vpop.f32.mrb[0].mxu0
      %v4289 = vadd.f32 0.0, %v4288
      %v4290 = vpop.f32.mrb[0].mxu0
      %v4291 = vpop.f32.mrb[0].mxu0
      %4292 = vdwg.mxu0
      %v4293 = vadd.f32 %v4194, %v4277
      %v4294 = vadd.f32 %v4195, %v4279
      %v4295 = vadd.f32 %v4196, %v4281
      %v4296 = vadd.f32 %v4197, %v4283
      %v4297 = vadd.f32 %v4198, %v4287
      %v4298 = vadd.f32 %v4199, %v4289
      %s4299 = scalar_lea.vmem %s7, 24
      %v4300 = vld [vmem:[%s4299] sm:$0xf]
      %v4301 = vld [vmem:[%s4299 + $0x4] sm:$0xf]
      %v4302 = vld [vmem:[%s4299 + $0x8] sm:$0xf]
      %v4306 = vunpack.c.l.b16 %v4300
      %v4307 = vunpack.c.l.b16 %v4301
      %v4308 = vunpack.c.l.b16 %v4302
      %v4309 = vpack.c.b16 %v4307, %v4306
      %v4310 = vpack.c.b16 %v4308, %v4308
      %4311 = vrot.lane.b32.xlu0 %v3010, 52
      %v4312 = vpop.permute.xlu0 %4311
      %4313 = vrot.lane.b32.xlu0 %v3011, 52
      %v4314 = vpop.permute.xlu0 %4313
      %4315 = vrot.lane.b32.xlu0 %v3012, 52
      %v4316 = vpop.permute.xlu0 %4315
      %4317 = vrot.lane.b32.xlu0 %v3013, 52
      %v4318 = vpop.permute.xlu0 %4317
      %4319 = vrot.lane.b32.xlu0 %v3014, 52
      %v4320 = vpop.permute.xlu0 %4319
      %4321 = vrot.lane.b32.xlu0 %v3015, 52
      %v4322 = vpop.permute.xlu0 %4321
      %vm4323 = vcmask 424960
      %v4324 = vsel %vm4323, %v4312, %v4314
      %v4325 = vsel %vm4323, %v4314, %v4316
      %v4326 = vsel %vm4323, %v4318, %v4320
      %v4327 = vsel %vm4323, %v4320, %v4322
      %v4331 = vsel %vm1706, %v4309, 0
      %v4334 = vsel %vm1706, %v4310, 0
      %v4337 = vsel %vm1713, %v4326, 0
      %v4340 = vsel %vm1713, %v4327, 0
      %4342 = vmatprep.subr.bf16.mxu0 %v4325
      %4343 = vmatpush1.bf16.msra.mxu0 %v4324
      %4344 = vmatprep.subr.bf16.mxu0 %v4340
      %4345 = vmatpush1.bf16.msra.mxu0 %v4337
      %4346 = vmatprep.subr.bf16.mxu0 0
      %4347 = vmatpush1.bf16.msra.mxu0 0
      %4348 = vmatprep.subr.bf16.mxu0 0
      %4349 = vmatpush1.bf16.msra.mxu0 0
      %4350 = vmatprep.subr.bf16.mxu0 0
      %4351 = vmatpush1.bf16.msra.mxu0 0
      %4352 = vmatprep.subr.bf16.mxu0 0
      %4353 = vmatpush1.bf16.msra.mxu0 0
      %4354 = vmatprep.subr.bf16.mxu0 0
      %4355 = vmatpush1.bf16.msra.mxu0 0
      %4356 = vmatprep.subr.bf16.mxu0 0
      %4357 = vmatpush1.bf16.msra.mxu0 0
      %4358 = vmatprep.subr.bf16.mxu0 0
      %4359 = vmatpush1.bf16.msra.mxu0 0
      %4360 = vmatprep.subr.bf16.mxu0 0
      %4361 = vmatpush1.bf16.msra.mxu0 0
      %4362 = vmatprep.subr.bf16.mxu0 0
      %4363 = vmatpush1.bf16.msra.mxu0 0
      %4364 = vmatprep.subr.bf16.mxu0 0
      %4365 = vmatpush1.bf16.msra.mxu0 0
      %4366 = vmatprep.subr.bf16.mxu0 0
      %4367 = vmatpush1.bf16.msra.mxu0 0
      %4368 = vmatprep.subr.bf16.mxu0 0
      %4369 = vmatpush1.bf16.msra.mxu0 0
      %4370 = vmatprep.subr.bf16.mxu0 0
      %4371 = vmatpush1.bf16.msra.mxu0 0
      %4372 = vmatprep.subr.bf16.mxu0 0
      %4373 = vmatpush1.bf16.msra.mxu0 0
      %4374 = vmatprep.mubr.bf16.mxu0 0
      %4375 = vmatmul.mubr.bf16.gmra.mrb[0].mxu0 %v4331
      %v4376 = vpop.f32.mrb[0].mxu0
      %v4377 = vadd.f32 0.0, %v4376
      %v4378 = vpop.f32.mrb[0].mxu0
      %v4379 = vadd.f32 0.0, %v4378
      %v4380 = vpop.f32.mrb[0].mxu0
      %v4381 = vadd.f32 0.0, %v4380
      %v4382 = vpop.f32.mrb[0].mxu0
      %v4383 = vadd.f32 0.0, %v4382
      %4384 = vmatprep.mubr.bf16.mxu0 0
      %4385 = vmatmul.mubr.bf16.gmra.mrb[0].mxu0 %v4334
      %v4386 = vpop.f32.mrb[0].mxu0
      %v4387 = vadd.f32 0.0, %v4386
      %v4388 = vpop.f32.mrb[0].mxu0
      %v4389 = vadd.f32 0.0, %v4388
      %v4390 = vpop.f32.mrb[0].mxu0
      %v4391 = vpop.f32.mrb[0].mxu0
      %4392 = vdwg.mxu0
      %s4393 = scalar_lea.vmem %s1, 5
      %v4394 = vld [vmem:[%s4393] ss:$8 sm:$0x3]
      %v4396 = vlaneseq
      %v4397 = vshrl.u32 %v4396, 7
      %v4398 = vsub.s32 0, %v4397
      %v4399 = vrot.slane %v4394, %v4398
      %v4400 = vlaneseq
      %v4401 = vshrl.u32 %v4400, 7
      %v4402 = vsub.s32 1, %v4401
      %v4403 = vrot.slane %v4394, %v4402
      %v4406 = vmul.f32 %v4377, %v4399
      %v4407 = vmul.f32 %v4379, %v4403
      %v4408 = vmul.f32 %v4381, %v4399
      %v4409 = vmul.f32 %v4383, %v4403
      %v4410 = vmul.f32 %v4387, %v4399
      %v4411 = vmul.f32 %v4389, %v4403
      %v4412 = vadd.f32 %v4293, %v4406
      %v4413 = vadd.f32 %v4294, %v4407
      %v4414 = vadd.f32 %v4295, %v4408
      %v4415 = vadd.f32 %v4296, %v4409
      %v4416 = vadd.f32 %v4297, %v4410
      %v4417 = vadd.f32 %v4298, %v4411
      %s4418 = scalar_lea.vmem %s7, 36
      %v4419 = vld [vmem:[%s4418] sm:$0xf]
      %v4420 = vld [vmem:[%s4418 + $0x4] sm:$0xf]
      %v4421 = vld [vmem:[%s4418 + $0x8] sm:$0xf]
      %v4425 = vunpack.c.l.b16 %v4419
      %v4426 = vunpack.c.l.b16 %v4420
      %v4427 = vunpack.c.l.b16 %v4421
      %v4428 = vpack.c.b16 %v4426, %v4425
      %v4429 = vpack.c.b16 %v4427, %v4427
      %4430 = vrot.lane.b32.xlu0 %v1812, 12
      %v4431 = vpop.permute.xlu0 %4430
      %4432 = vrot.lane.b32.xlu0 %v1813, 12
      %v4433 = vpop.permute.xlu0 %4432
      %4434 = vrot.lane.b32.xlu0 %v1814, 12
      %v4435 = vpop.permute.xlu0 %4434
      %4436 = vrot.lane.b32.xlu0 %v1815, 12
      %v4437 = vpop.permute.xlu0 %4436
      %4438 = vrot.lane.b32.xlu0 %v1816, 12
      %v4439 = vpop.permute.xlu0 %4438
      %4440 = vrot.lane.b32.xlu0 %v1817, 12
      %v4441 = vpop.permute.xlu0 %4440
      %vm4442 = vcmask 97280
      %v4443 = vsel %vm4442, %v4431, %v4433
      %v4444 = vsel %vm4442, %v4433, %v4435
      %v4445 = vsel %vm4442, %v4437, %v4439
      %v4446 = vsel %vm4442, %v4439, %v4441
      %v4450 = vsel %vm1706, %v4428, 0
      %v4453 = vsel %vm1706, %v4429, 0
      %v4456 = vsel %vm1713, %v4445, 0
      %v4459 = vsel %vm1713, %v4446, 0
      %4461 = vmatprep.subr.bf16.mxu0 %v4444
      %4462 = vmatpush1.bf16.msra.mxu0 %v4443
      %4463 = vmatprep.subr.bf16.mxu0 %v4459
      %4464 = vmatpush1.bf16.msra.mxu0 %v4456
      %4465 = vmatprep.subr.bf16.mxu0 0
      %4466 = vmatpush1.bf16.msra.mxu0 0
      %4467 = vmatprep.subr.bf16.mxu0 0
      %4468 = vmatpush1.bf16.msra.mxu0 0
      %4469 = vmatprep.subr.bf16.mxu0 0
      %4470 = vmatpush1.bf16.msra.mxu0 0
      %4471 = vmatprep.subr.bf16.mxu0 0
      %4472 = vmatpush1.bf16.msra.mxu0 0
      %4473 = vmatprep.subr.bf16.mxu0 0
      %4474 = vmatpush1.bf16.msra.mxu0 0
      %4475 = vmatprep.subr.bf16.mxu0 0
      %4476 = vmatpush1.bf16.msra.mxu0 0
      %4477 = vmatprep.subr.bf16.mxu0 0
      %4478 = vmatpush1.bf16.msra.mxu0 0
      %4479 = vmatprep.subr.bf16.mxu0 0
      %4480 = vmatpush1.bf16.msra.mxu0 0
      %4481 = vmatprep.subr.bf16.mxu0 0
      %4482 = vmatpush1.bf16.msra.mxu0 0
      %4483 = vmatprep.subr.bf16.mxu0 0
      %4484 = vmatpush1.bf16.msra.mxu0 0
      %4485 = vmatprep.subr.bf16.mxu0 0
      %4486 = vmatpush1.bf16.msra.mxu0 0
      %4487 = vmatprep.subr.bf16.mxu0 0
      %4488 = vmatpush1.bf16.msra.mxu0 0
      %4489 = vmatprep.subr.bf16.mxu0 0
      %4490 = vmatpush1.bf16.msra.mxu0 0
      %4491 = vmatprep.subr.bf16.mxu0 0
      %4492 = vmatpush1.bf16.msra.mxu0 0
      %4493 = vmatprep.mubr.bf16.mxu0 0
      %4494 = vmatmul.mubr.bf16.gmra.mrb[0].mxu0 %v4450
      %v4495 = vpop.f32.mrb[0].mxu0
      %v4496 = vadd.f32 0.0, %v4495
      %v4497 = vpop.f32.mrb[0].mxu0
      %v4498 = vadd.f32 0.0, %v4497
      %v4499 = vpop.f32.mrb[0].mxu0
      %v4500 = vadd.f32 0.0, %v4499
      %v4501 = vpop.f32.mrb[0].mxu0
      %v4502 = vadd.f32 0.0, %v4501
      %4503 = vmatprep.mubr.bf16.mxu0 0
      %4504 = vmatmul.mubr.bf16.gmra.mrb[0].mxu0 %v4453
      %v4505 = vpop.f32.mrb[0].mxu0
      %v4506 = vadd.f32 0.0, %v4505
      %v4507 = vpop.f32.mrb[0].mxu0
      %v4508 = vadd.f32 0.0, %v4507
      %v4509 = vpop.f32.mrb[0].mxu0
      %v4510 = vpop.f32.mrb[0].mxu0
      %4511 = vdwg.mxu0
      %v4512 = vmul.f32 %v4496, %v4187
      %v4513 = vmul.f32 %v4498, %v4191
      %v4514 = vmul.f32 %v4500, %v4187
      %v4515 = vmul.f32 %v4502, %v4191
      %v4516 = vmul.f32 %v4506, %v4187
      %v4517 = vmul.f32 %v4508, %v4191
      %v4518 = vadd.f32 %v4412, %v4512
      %v4519 = vadd.f32 %v4413, %v4513
      %v4520 = vadd.f32 %v4414, %v4514
      %v4521 = vadd.f32 %v4415, %v4515
      %v4522 = vadd.f32 %v4416, %v4516
      %v4523 = vadd.f32 %v4417, %v4517
      %s4524 = scalar_lea.vmem %s7, 48
      %v4525 = vld [vmem:[%s4524] sm:$0xf]
      %v4526 = vld [vmem:[%s4524 + $0x4] sm:$0xf]
      %v4527 = vld [vmem:[%s4524 + $0x8] sm:$0xf]
      %v4531 = vunpack.c.l.b16 %v4525
      %v4532 = vunpack.c.l.b16 %v4526
      %v4533 = vunpack.c.l.b16 %v4527
      %v4534 = vpack.c.b16 %v4532, %v4531
      %v4535 = vpack.c.b16 %v4533, %v4533
      %v4537 = vsel %vm1706, %v4534, 0
      %v4540 = vsel %vm1706, %v4535, 0
      %4542 = vmatprep.subr.bf16.mxu0 %v1673
      %4543 = vmatpush1.bf16.msra.mxu0 %v1672
      %4544 = vmatprep.subr.bf16.mxu0 %v1718
      %4545 = vmatpush1.bf16.msra.mxu0 %v1715
      %4546 = vmatprep.subr.bf16.mxu0 0
      %4547 = vmatpush1.bf16.msra.mxu0 0
      %4548 = vmatprep.subr.bf16.mxu0 0
      %4549 = vmatpush1.bf16.msra.mxu0 0
      %4550 = vmatprep.subr.bf16.mxu0 0
      %4551 = vmatpush1.bf16.msra.mxu0 0
      %4552 = vmatprep.subr.bf16.mxu0 0
      %4553 = vmatpush1.bf16.msra.mxu0 0
      %4554 = vmatprep.subr.bf16.mxu0 0
      %4555 = vmatpush1.bf16.msra.mxu0 0
      %4556 = vmatprep.subr.bf16.mxu0 0
      %4557 = vmatpush1.bf16.msra.mxu0 0
      %4558 = vmatprep.subr.bf16.mxu0 0
      %4559 = vmatpush1.bf16.msra.mxu0 0
      %4560 = vmatprep.subr.bf16.mxu0 0
      %4561 = vmatpush1.bf16.msra.mxu0 0
      %4562 = vmatprep.subr.bf16.mxu0 0
      %4563 = vmatpush1.bf16.msra.mxu0 0
      %4564 = vmatprep.subr.bf16.mxu0 0
      %4565 = vmatpush1.bf16.msra.mxu0 0
      %4566 = vmatprep.subr.bf16.mxu0 0
      %4567 = vmatpush1.bf16.msra.mxu0 0
      %4568 = vmatprep.subr.bf16.mxu0 0
      %4569 = vmatpush1.bf16.msra.mxu0 0
      %4570 = vmatprep.subr.bf16.mxu0 0
      %4571 = vmatpush1.bf16.msra.mxu0 0
      %4572 = vmatprep.subr.bf16.mxu0 0
      %4573 = vmatpush1.bf16.msra.mxu0 0
      %4574 = vmatprep.mubr.bf16.mxu0 0
      %4575 = vmatmul.mubr.bf16.gmra.mrb[0].mxu0 %v4537
      %v4576 = vpop.f32.mrb[0].mxu0
      %v4577 = vadd.f32 0.0, %v4576
      %v4578 = vpop.f32.mrb[0].mxu0
      %v4579 = vadd.f32 0.0, %v4578
      %v4580 = vpop.f32.mrb[0].mxu0
      %v4581 = vadd.f32 0.0, %v4580
      %v4582 = vpop.f32.mrb[0].mxu0
      %v4583 = vadd.f32 0.0, %v4582
      %4584 = vmatprep.mubr.bf16.mxu0 0
      %4585 = vmatmul.mubr.bf16.gmra.mrb[0].mxu0 %v4540
      %v4586 = vpop.f32.mrb[0].mxu0
      %v4587 = vadd.f32 0.0, %v4586
      %v4588 = vpop.f32.mrb[0].mxu0
      %v4589 = vadd.f32 0.0, %v4588
      %v4590 = vpop.f32.mrb[0].mxu0
      %v4591 = vpop.f32.mrb[0].mxu0
      %4592 = vdwg.mxu0
      %v4593 = vadd.f32 %v4518, %v4577
      %v4594 = vadd.f32 %v4519, %v4579
      %v4595 = vadd.f32 %v4520, %v4581
      %v4596 = vadd.f32 %v4521, %v4583
      %v4597 = vadd.f32 %v4522, %v4587
      %v4598 = vadd.f32 %v4523, %v4589
      %s4599 = scalar_lea.vmem %s7, 60
      %v4600 = vld [vmem:[%s4599] sm:$0xf]
      %v4601 = vld [vmem:[%s4599 + $0x4] sm:$0xf]
      %v4602 = vld [vmem:[%s4599 + $0x8] sm:$0xf]
      %v4606 = vunpack.c.l.b16 %v4600
      %v4607 = vunpack.c.l.b16 %v4601
      %v4608 = vunpack.c.l.b16 %v4602
      %v4609 = vpack.c.b16 %v4607, %v4606
      %v4610 = vpack.c.b16 %v4608, %v4608
      %4611 = vrot.lane.b32.xlu0 %v2351, 116
      %v4612 = vpop.permute.xlu0 %4611
      %4613 = vrot.lane.b32.xlu0 %v2352, 116
      %v4614 = vpop.permute.xlu0 %4613
      %4615 = vrot.lane.b32.xlu0 %v2353, 116
      %v4616 = vpop.permute.xlu0 %4615
      %4617 = vrot.lane.b32.xlu0 %v2354, 116
      %v4618 = vpop.permute.xlu0 %4617
      %4619 = vrot.lane.b32.xlu0 %v2355, 116
      %v4620 = vpop.permute.xlu0 %4619
      %4621 = vrot.lane.b32.xlu0 %v2356, 116
      %v4622 = vpop.permute.xlu0 %4621
      %vm4623 = vcmask 949248
      %v4624 = vsel %vm4623, %v4612, %v4614
      %v4625 = vsel %vm4623, %v4614, %v4616
      %v4626 = vsel %vm4623, %v4618, %v4620
      %v4627 = vsel %vm4623, %v4620, %v4622
      %v4631 = vsel %vm1706, %v4609, 0
      %v4634 = vsel %vm1706, %v4610, 0
      %v4637 = vsel %vm1713, %v4626, 0
      %v4640 = vsel %vm1713, %v4627, 0
      %4642 = vmatprep.subr.bf16.mxu0 %v4625
      %4643 = vmatpush1.bf16.msra.mxu0 %v4624
      %4644 = vmatprep.subr.bf16.mxu0 %v4640
      %4645 = vmatpush1.bf16.msra.mxu0 %v4637
      %4646 = vmatprep.subr.bf16.mxu0 0
      %4647 = vmatpush1.bf16.msra.mxu0 0
      %4648 = vmatprep.subr.bf16.mxu0 0
      %4649 = vmatpush1.bf16.msra.mxu0 0
      %4650 = vmatprep.subr.bf16.mxu0 0
      %4651 = vmatpush1.bf16.msra.mxu0 0
      %4652 = vmatprep.subr.bf16.mxu0 0
      %4653 = vmatpush1.bf16.msra.mxu0 0
      %4654 = vmatprep.subr.bf16.mxu0 0
      %4655 = vmatpush1.bf16.msra.mxu0 0
      %4656 = vmatprep.subr.bf16.mxu0 0
      %4657 = vmatpush1.bf16.msra.mxu0 0
      %4658 = vmatprep.subr.bf16.mxu0 0
      %4659 = vmatpush1.bf16.msra.mxu0 0
      %4660 = vmatprep.subr.bf16.mxu0 0
      %4661 = vmatpush1.bf16.msra.mxu0 0
      %4662 = vmatprep.subr.bf16.mxu0 0
      %4663 = vmatpush1.bf16.msra.mxu0 0
      %4664 = vmatprep.subr.bf16.mxu0 0
      %4665 = vmatpush1.bf16.msra.mxu0 0
      %4666 = vmatprep.subr.bf16.mxu0 0
      %4667 = vmatpush1.bf16.msra.mxu0 0
      %4668 = vmatprep.subr.bf16.mxu0 0
      %4669 = vmatpush1.bf16.msra.mxu0 0
      %4670 = vmatprep.subr.bf16.mxu0 0
      %4671 = vmatpush1.bf16.msra.mxu0 0
      %4672 = vmatprep.subr.bf16.mxu0 0
      %4673 = vmatpush1.bf16.msra.mxu0 0
      %4674 = vmatprep.mubr.bf16.mxu0 0
      %4675 = vmatmul.mubr.bf16.gmra.mrb[0].mxu0 %v4631
      %v4676 = vpop.f32.mrb[0].mxu0
      %v4677 = vadd.f32 0.0, %v4676
      %v4678 = vpop.f32.mrb[0].mxu0
      %v4679 = vadd.f32 0.0, %v4678
      %v4680 = vpop.f32.mrb[0].mxu0
      %v4681 = vadd.f32 0.0, %v4680
      %v4682 = vpop.f32.mrb[0].mxu0
      %v4683 = vadd.f32 0.0, %v4682
      %4684 = vmatprep.mubr.bf16.mxu0 0
      %4685 = vmatmul.mubr.bf16.gmra.mrb[0].mxu0 %v4634
      %v4686 = vpop.f32.mrb[0].mxu0
      %v4687 = vadd.f32 0.0, %v4686
      %v4688 = vpop.f32.mrb[0].mxu0
      %v4689 = vadd.f32 0.0, %v4688
      %v4690 = vpop.f32.mrb[0].mxu0
      %v4691 = vpop.f32.mrb[0].mxu0
      %4692 = vdwg.mxu0
      %v4693 = vmul.f32 %v4677, %v4399
      %v4694 = vmul.f32 %v4679, %v4403
      %v4695 = vmul.f32 %v4681, %v4399
      %v4696 = vmul.f32 %v4683, %v4403
      %v4697 = vmul.f32 %v4687, %v4399
      %v4698 = vmul.f32 %v4689, %v4403
      %v4699 = vadd.f32 %v4593, %v4693
      %v4700 = vadd.f32 %v4594, %v4694
      %v4701 = vadd.f32 %v4595, %v4695
      %v4702 = vadd.f32 %v4596, %v4696
      %v4703 = vadd.f32 %v4597, %v4697
      %v4704 = vadd.f32 %v4598, %v4698
      %s4705 = scalar_lea.vmem %s7, 72
      %v4706 = vld [vmem:[%s4705] sm:$0xf]
      %v4707 = vld [vmem:[%s4705 + $0x4] sm:$0xf]
      %v4708 = vld [vmem:[%s4705 + $0x8] sm:$0xf]
      %v4712 = vunpack.c.l.b16 %v4706
      %v4713 = vunpack.c.l.b16 %v4707
      %v4714 = vunpack.c.l.b16 %v4708
      %v4715 = vpack.c.b16 %v4713, %v4712
      %v4716 = vpack.c.b16 %v4714, %v4714
      %4717 = vrot.lane.b32.xlu0 %v3857, 76
      %v4718 = vpop.permute.xlu0 %4717
      %4719 = vrot.lane.b32.xlu0 %v3858, 76
      %v4720 = vpop.permute.xlu0 %4719
      %4721 = vrot.lane.b32.xlu0 %v3859, 76
      %v4722 = vpop.permute.xlu0 %4721
      %4723 = vrot.lane.b32.xlu0 %v3860, 76
      %v4724 = vpop.permute.xlu0 %4723
      %4725 = vrot.lane.b32.xlu0 %v3861, 76
      %v4726 = vpop.permute.xlu0 %4725
      %4727 = vrot.lane.b32.xlu0 %v3862, 76
      %v4728 = vpop.permute.xlu0 %4727
      %v4729 = vsel %vm4111, %v4718, %v4720
      %v4730 = vsel %vm4111, %v4720, %v4722
      %v4731 = vsel %vm4111, %v4724, %v4726
      %v4732 = vsel %vm4111, %v4726, %v4728
      %v4736 = vsel %vm1706, %v4715, 0
      %v4739 = vsel %vm1706, %v4716, 0
      %v4742 = vsel %vm1713, %v4731, 0
      %v4745 = vsel %vm1713, %v4732, 0
      %4747 = vmatprep.subr.bf16.mxu0 %v4730
      %4748 = vmatpush1.bf16.msra.mxu0 %v4729
      %4749 = vmatprep.subr.bf16.mxu0 %v4745
      %4750 = vmatpush1.bf16.msra.mxu0 %v4742
      %4751 = vmatprep.subr.bf16.mxu0 0
      %4752 = vmatpush1.bf16.msra.mxu0 0
      %4753 = vmatprep.subr.bf16.mxu0 0
      %4754 = vmatpush1.bf16.msra.mxu0 0
      %4755 = vmatprep.subr.bf16.mxu0 0
      %4756 = vmatpush1.bf16.msra.mxu0 0
      %4757 = vmatprep.subr.bf16.mxu0 0
      %4758 = vmatpush1.bf16.msra.mxu0 0
      %4759 = vmatprep.subr.bf16.mxu0 0
      %4760 = vmatpush1.bf16.msra.mxu0 0
      %4761 = vmatprep.subr.bf16.mxu0 0
      %4762 = vmatpush1.bf16.msra.mxu0 0
      %4763 = vmatprep.subr.bf16.mxu0 0
      %4764 = vmatpush1.bf16.msra.mxu0 0
      %4765 = vmatprep.subr.bf16.mxu0 0
      %4766 = vmatpush1.bf16.msra.mxu0 0
      %4767 = vmatprep.subr.bf16.mxu0 0
      %4768 = vmatpush1.bf16.msra.mxu0 0
      %4769 = vmatprep.subr.bf16.mxu0 0
      %4770 = vmatpush1.bf16.msra.mxu0 0
      %4771 = vmatprep.subr.bf16.mxu0 0
      %4772 = vmatpush1.bf16.msra.mxu0 0
      %4773 = vmatprep.subr.bf16.mxu0 0
      %4774 = vmatpush1.bf16.msra.mxu0 0
      %4775 = vmatprep.subr.bf16.mxu0 0
      %4776 = vmatpush1.bf16.msra.mxu0 0
      %4777 = vmatprep.subr.bf16.mxu0 0
      %4778 = vmatpush1.bf16.msra.mxu0 0
      %4779 = vmatprep.mubr.bf16.mxu0 0
      %4780 = vmatmul.mubr.bf16.gmra.mrb[0].mxu0 %v4736
      %v4781 = vpop.f32.mrb[0].mxu0
      %v4782 = vadd.f32 0.0, %v4781
      %v4783 = vpop.f32.mrb[0].mxu0
      %v4784 = vadd.f32 0.0, %v4783
      %v4785 = vpop.f32.mrb[0].mxu0
      %v4786 = vadd.f32 0.0, %v4785
      %v4787 = vpop.f32.mrb[0].mxu0
      %v4788 = vadd.f32 0.0, %v4787
      %4789 = vmatprep.mubr.bf16.mxu0 0
      %4790 = vmatmul.mubr.bf16.gmra.mrb[0].mxu0 %v4739
      %v4791 = vpop.f32.mrb[0].mxu0
      %v4792 = vadd.f32 0.0, %v4791
      %v4793 = vpop.f32.mrb[0].mxu0
      %v4794 = vadd.f32 0.0, %v4793
      %v4795 = vpop.f32.mrb[0].mxu0
      %v4796 = vpop.f32.mrb[0].mxu0
      %4797 = vdwg.mxu0
      %v4798 = vmul.f32 %v4782, %v4187
      %v4799 = vmul.f32 %v4784, %v4191
      %v4800 = vmul.f32 %v4786, %v4187
      %v4801 = vmul.f32 %v4788, %v4191
      %v4802 = vmul.f32 %v4792, %v4187
      %v4803 = vmul.f32 %v4794, %v4191
      %v4804 = vadd.f32 %v4699, %v4798
      %v4805 = vadd.f32 %v4700, %v4799
      %v4806 = vadd.f32 %v4701, %v4800
      %v4807 = vadd.f32 %v4702, %v4801
      %v4808 = vadd.f32 %v4703, %v4802
      %v4809 = vadd.f32 %v4704, %v4803
      %s4810 = scalar_lea.vmem %s7, 84
      %v4811 = vld [vmem:[%s4810] sm:$0xf]
      %v4812 = vld [vmem:[%s4810 + $0x4] sm:$0xf]
      %v4813 = vld [vmem:[%s4810 + $0x8] sm:$0xf]
      %v4817 = vunpack.c.l.b16 %v4811
      %v4818 = vunpack.c.l.b16 %v4812
      %v4819 = vunpack.c.l.b16 %v4813
      %v4820 = vpack.c.b16 %v4818, %v4817
      %v4821 = vpack.c.b16 %v4819, %v4819
      %4822 = vrot.lane.b32.xlu0 %v3857, 64
      %v4823 = vpop.permute.xlu0 %4822
      %4824 = vrot.lane.b32.xlu0 %v3858, 64
      %v4825 = vpop.permute.xlu0 %4824
      %4826 = vrot.lane.b32.xlu0 %v3859, 64
      %v4827 = vpop.permute.xlu0 %4826
      %4828 = vrot.lane.b32.xlu0 %v3860, 64
      %v4829 = vpop.permute.xlu0 %4828
      %4830 = vrot.lane.b32.xlu0 %v3861, 64
      %v4831 = vpop.permute.xlu0 %4830
      %4832 = vrot.lane.b32.xlu0 %v3862, 64
      %v4833 = vpop.permute.xlu0 %4832
      %v4834 = vsel %vm1942, %v4823, %v4825
      %v4835 = vsel %vm1942, %v4825, %v4827
      %v4836 = vsel %vm1942, %v4829, %v4831
      %v4837 = vsel %vm1942, %v4831, %v4833
      %v4841 = vsel %vm1706, %v4820, 0
      %v4844 = vsel %vm1706, %v4821, 0
      %v4847 = vsel %vm1713, %v4836, 0
      %v4850 = vsel %vm1713, %v4837, 0
      %4852 = vmatprep.subr.bf16.mxu0 %v4835
      %4853 = vmatpush1.bf16.msra.mxu0 %v4834
      %4854 = vmatprep.subr.bf16.mxu0 %v4850
      %4855 = vmatpush1.bf16.msra.mxu0 %v4847
      %4856 = vmatprep.subr.bf16.mxu0 0
      %4857 = vmatpush1.bf16.msra.mxu0 0
      %4858 = vmatprep.subr.bf16.mxu0 0
      %4859 = vmatpush1.bf16.msra.mxu0 0
      %4860 = vmatprep.subr.bf16.mxu0 0
      %4861 = vmatpush1.bf16.msra.mxu0 0
      %4862 = vmatprep.subr.bf16.mxu0 0
      %4863 = vmatpush1.bf16.msra.mxu0 0
      %4864 = vmatprep.subr.bf16.mxu0 0
      %4865 = vmatpush1.bf16.msra.mxu0 0
      %4866 = vmatprep.subr.bf16.mxu0 0
      %4867 = vmatpush1.bf16.msra.mxu0 0
      %4868 = vmatprep.subr.bf16.mxu0 0
      %4869 = vmatpush1.bf16.msra.mxu0 0
      %4870 = vmatprep.subr.bf16.mxu0 0
      %4871 = vmatpush1.bf16.msra.mxu0 0
      %4872 = vmatprep.subr.bf16.mxu0 0
      %4873 = vmatpush1.bf16.msra.mxu0 0
      %4874 = vmatprep.subr.bf16.mxu0 0
      %4875 = vmatpush1.bf16.msra.mxu0 0
      %4876 = vmatprep.subr.bf16.mxu0 0
      %4877 = vmatpush1.bf16.msra.mxu0 0
      %4878 = vmatprep.subr.bf16.mxu0 0
      %4879 = vmatpush1.bf16.msra.mxu0 0
      %4880 = vmatprep.subr.bf16.mxu0 0
      %4881 = vmatpush1.bf16.msra.mxu0 0
      %4882 = vmatprep.subr.bf16.mxu0 0
      %4883 = vmatpush1.bf16.msra.mxu0 0
      %4884 = vmatprep.mubr.bf16.mxu0 0
      %4885 = vmatmul.mubr.bf16.gmra.mrb[0].mxu0 %v4841
      %v4886 = vpop.f32.mrb[0].mxu0
      %v4887 = vadd.f32 0.0, %v4886
      %v4888 = vpop.f32.mrb[0].mxu0
      %v4889 = vadd.f32 0.0, %v4888
      %v4890 = vpop.f32.mrb[0].mxu0
      %v4891 = vadd.f32 0.0, %v4890
      %v4892 = vpop.f32.mrb[0].mxu0
      %v4893 = vadd.f32 0.0, %v4892
      %4894 = vmatprep.mubr.bf16.mxu0 0
      %4895 = vmatmul.mubr.bf16.gmra.mrb[0].mxu0 %v4844
      %v4896 = vpop.f32.mrb[0].mxu0
      %v4897 = vadd.f32 0.0, %v4896
      %v4898 = vpop.f32.mrb[0].mxu0
      %v4899 = vadd.f32 0.0, %v4898
      %v4900 = vpop.f32.mrb[0].mxu0
      %v4901 = vpop.f32.mrb[0].mxu0
      %4902 = vdwg.mxu0
      %v4903 = vadd.f32 %v4804, %v4887
      %v4904 = vadd.f32 %v4805, %v4889
      %v4905 = vadd.f32 %v4806, %v4891
      %v4906 = vadd.f32 %v4807, %v4893
      %v4907 = vadd.f32 %v4808, %v4897
      %v4908 = vadd.f32 %v4809, %v4899
      %s4909 = scalar_lea.vmem %s7, 96
      %v4910 = vld [vmem:[%s4909] sm:$0xf]
      %v4911 = vld [vmem:[%s4909 + $0x4] sm:$0xf]
      %v4912 = vld [vmem:[%s4909 + $0x8] sm:$0xf]
      %v4916 = vunpack.c.l.b16 %v4910
      %v4917 = vunpack.c.l.b16 %v4911
      %v4918 = vunpack.c.l.b16 %v4912
      %v4919 = vpack.c.b16 %v4917, %v4916
      %v4920 = vpack.c.b16 %v4918, %v4918
      %4921 = vrot.lane.b32.xlu0 %v3857, 52
      %v4922 = vpop.permute.xlu0 %4921
      %4923 = vrot.lane.b32.xlu0 %v3858, 52
      %v4924 = vpop.permute.xlu0 %4923
      %4925 = vrot.lane.b32.xlu0 %v3859, 52
      %v4926 = vpop.permute.xlu0 %4925
      %4927 = vrot.lane.b32.xlu0 %v3860, 52
      %v4928 = vpop.permute.xlu0 %4927
      %4929 = vrot.lane.b32.xlu0 %v3861, 52
      %v4930 = vpop.permute.xlu0 %4929
      %4931 = vrot.lane.b32.xlu0 %v3862, 52
      %v4932 = vpop.permute.xlu0 %4931
      %v4933 = vsel %vm4323, %v4922, %v4924
      %v4934 = vsel %vm4323, %v4924, %v4926
      %v4935 = vsel %vm4323, %v4928, %v4930
      %v4936 = vsel %vm4323, %v4930, %v4932
      %v4940 = vsel %vm1706, %v4919, 0
      %v4943 = vsel %vm1706, %v4920, 0
      %v4946 = vsel %vm1713, %v4935, 0
      %v4949 = vsel %vm1713, %v4936, 0
      %4951 = vmatprep.subr.bf16.mxu0 %v4934
      %4952 = vmatpush1.bf16.msra.mxu0 %v4933
      %4953 = vmatprep.subr.bf16.mxu0 %v4949
      %4954 = vmatpush1.bf16.msra.mxu0 %v4946
      %4955 = vmatprep.subr.bf16.mxu0 0
      %4956 = vmatpush1.bf16.msra.mxu0 0
      %4957 = vmatprep.subr.bf16.mxu0 0
      %4958 = vmatpush1.bf16.msra.mxu0 0
      %4959 = vmatprep.subr.bf16.mxu0 0
      %4960 = vmatpush1.bf16.msra.mxu0 0
      %4961 = vmatprep.subr.bf16.mxu0 0
      %4962 = vmatpush1.bf16.msra.mxu0 0
      %4963 = vmatprep.subr.bf16.mxu0 0
      %4964 = vmatpush1.bf16.msra.mxu0 0
      %4965 = vmatprep.subr.bf16.mxu0 0
      %4966 = vmatpush1.bf16.msra.mxu0 0
      %4967 = vmatprep.subr.bf16.mxu0 0
      %4968 = vmatpush1.bf16.msra.mxu0 0
      %4969 = vmatprep.subr.bf16.mxu0 0
      %4970 = vmatpush1.bf16.msra.mxu0 0
      %4971 = vmatprep.subr.bf16.mxu0 0
      %4972 = vmatpush1.bf16.msra.mxu0 0
      %4973 = vmatprep.subr.bf16.mxu0 0
      %4974 = vmatpush1.bf16.msra.mxu0 0
      %4975 = vmatprep.subr.bf16.mxu0 0
      %4976 = vmatpush1.bf16.msra.mxu0 0
      %4977 = vmatprep.subr.bf16.mxu0 0
      %4978 = vmatpush1.bf16.msra.mxu0 0
      %4979 = vmatprep.subr.bf16.mxu0 0
      %4980 = vmatpush1.bf16.msra.mxu0 0
      %4981 = vmatprep.subr.bf16.mxu0 0
      %4982 = vmatpush1.bf16.msra.mxu0 0
      %4983 = vmatprep.mubr.bf16.mxu0 0
      %4984 = vmatmul.mubr.bf16.gmra.mrb[0].mxu0 %v4940
      %v4985 = vpop.f32.mrb[0].mxu0
      %v4986 = vadd.f32 0.0, %v4985
      %v4987 = vpop.f32.mrb[0].mxu0
      %v4988 = vadd.f32 0.0, %v4987
      %v4989 = vpop.f32.mrb[0].mxu0
      %v4990 = vadd.f32 0.0, %v4989
      %v4991 = vpop.f32.mrb[0].mxu0
      %v4992 = vadd.f32 0.0, %v4991
      %4993 = vmatprep.mubr.bf16.mxu0 0
      %4994 = vmatmul.mubr.bf16.gmra.mrb[0].mxu0 %v4943
      %v4995 = vpop.f32.mrb[0].mxu0
      %v4996 = vadd.f32 0.0, %v4995
      %v4997 = vpop.f32.mrb[0].mxu0
      %v4998 = vadd.f32 0.0, %v4997
      %v4999 = vpop.f32.mrb[0].mxu0
      %v5000 = vpop.f32.mrb[0].mxu0
      %5001 = vdwg.mxu0
      %v5002 = vmul.f32 %v4986, %v4399
      %v5003 = vmul.f32 %v4988, %v4403
      %v5004 = vmul.f32 %v4990, %v4399
      %v5005 = vmul.f32 %v4992, %v4403
      %v5006 = vmul.f32 %v4996, %v4399
      %v5007 = vmul.f32 %v4998, %v4403
      %v5008 = vadd.f32 %v4903, %v5002
      %v5009 = vadd.f32 %v4904, %v5003
      %v5010 = vadd.f32 %v4905, %v5004
      %v5011 = vadd.f32 %v4906, %v5005
      %v5012 = vadd.f32 %v4907, %v5006
      %v5013 = vadd.f32 %v4908, %v5007
      %v5014 = vld [vmem:[%s11] sm:$0xff]
      %v5015 = vld [vmem:[%s11 + $0x8] sm:$0xff]
      %v5016 = vld [vmem:[%s11 + $0x10] sm:$0xff]
      %5018 = vset.pattern.permute.xlu0 0
      %5019 = vperm.xlu0 %5018, %v5014
      %v5020 = vpop.permute.xlu0 %5019
      %5023 = vset.pattern.permute.xlu0 0
      %5024 = vperm.xlu0 %5023, %v5015
      %v5025 = vpop.permute.xlu0 %5024
      %5028 = vset.pattern.permute.xlu0 0
      %5029 = vperm.xlu0 %5028, %v5016
      %v5030 = vpop.permute.xlu0 %5029
      %v5032 = vadd.f32 %v5008, %v5020
      %v5033 = vadd.f32 %v5009, %v5020
      %v5034 = vadd.f32 %v5010, %v5025
      %v5035 = vadd.f32 %v5011, %v5025
      %v5036 = vadd.f32 %v5012, %v5030
      %v5037 = vadd.f32 %v5013, %v5030
      %v5038 = vmax.f32 %v5032, 0.0
      %v5039 = vmax.f32 %v5033, 0.0
      %v5040 = vmax.f32 %v5034, 0.0
      %v5041 = vmax.f32 %v5035, 0.0
      %v5042 = vmax.f32 %v5036, 0.0
      %v5043 = vmax.f32 %v5037, 0.0
      %s5044 = scalar_lea.vmem %s15, 72
      %v5045 = vld [vmem:[%s5044] sm:$0xff]
      %v5046 = vld [vmem:[%s5044 + $0x8] sm:$0xff]
      %v5047 = vld [vmem:[%s5044 + $0x10] sm:$0xff]
      %v5049 = vsel %vm1706, %v5045, 0
      %v5052 = vsel %vm1706, %v5046, 0
      %v5055 = vsel %vm1706, %v5047, 0
      %5057 = vmatprep.subr.mxu0 %v5039
      %5058 = vmatpush1.msra.mxu0 %v5038
      %5059 = vmatprep.subr.mxu0 %v5041
      %5060 = vmatpush1.msra.mxu0 %v5040
      %5061 = vmatprep.subr.mxu0 %v5043
      %5062 = vmatpush1.msra.mxu0 %v5042
      %5063 = vmatprep.subr.mxu0 0.0
      %5064 = vmatpush1.msra.mxu0 0.0
      %5065 = vmatprep.subr.mxu0 0.0
      %5066 = vmatpush1.msra.mxu0 0.0
      %5067 = vmatprep.subr.mxu0 0.0
      %5068 = vmatpush1.msra.mxu0 0.0
      %5069 = vmatprep.subr.mxu0 0.0
      %5070 = vmatpush1.msra.mxu0 0.0
      %5071 = vmatprep.subr.mxu0 0.0
      %5072 = vmatpush1.msra.mxu0 0.0
      %5073 = vmatprep.subr.mxu0 0.0
      %5074 = vmatpush1.msra.mxu0 0.0
      %5075 = vmatprep.subr.mxu0 0.0
      %5076 = vmatpush1.msra.mxu0 0.0
      %5077 = vmatprep.subr.mxu0 0.0
      %5078 = vmatpush1.msra.mxu0 0.0
      %5079 = vmatprep.subr.mxu0 0.0
      %5080 = vmatpush1.msra.mxu0 0.0
      %5081 = vmatprep.subr.mxu0 0.0
      %5082 = vmatpush1.msra.mxu0 0.0
      %5083 = vmatprep.subr.mxu0 0.0
      %5084 = vmatpush1.msra.mxu0 0.0
      %5085 = vmatprep.subr.mxu0 0.0
      %5086 = vmatpush1.msra.mxu0 0.0
      %5087 = vmatprep.subr.mxu0 0.0
      %5088 = vmatpush1.msra.mxu0 0.0
      %5089 = vmatprep.subr.mxu0 0.0
      %5090 = vmatpush1.msra.mxu0 0.0
      %5091 = vmatprep.subr.mxu0 0.0
      %5092 = vmatpush1.msra.mxu0 0.0
      %5093 = vmatprep.subr.mxu0 0.0
      %5094 = vmatpush1.msra.mxu0 0.0
      %5095 = vmatprep.subr.mxu0 0.0
      %5096 = vmatpush1.msra.mxu0 0.0
      %5097 = vmatprep.subr.mxu0 0.0
      %5098 = vmatpush1.msra.mxu0 0.0
      %5099 = vmatprep.subr.mxu0 0.0
      %5100 = vmatpush1.msra.mxu0 0.0
      %5101 = vmatprep.subr.mxu0 0.0
      %5102 = vmatpush1.msra.mxu0 0.0
      %5103 = vmatprep.subr.mxu0 0.0
      %5104 = vmatpush1.msra.mxu0 0.0
      %5105 = vmatprep.subr.mxu0 0.0
      %5106 = vmatpush1.msra.mxu0 0.0
      %5107 = vmatprep.subr.mxu0 0.0
      %5108 = vmatpush1.msra.mxu0 0.0
      %5109 = vmatprep.subr.mxu0 0.0
      %5110 = vmatpush1.msra.mxu0 0.0
      %5111 = vmatprep.subr.mxu0 0.0
      %5112 = vmatpush1.msra.mxu0 0.0
      %5113 = vmatprep.subr.mxu0 0.0
      %5114 = vmatpush1.msra.mxu0 0.0
      %5115 = vmatprep.subr.mxu0 0.0
      %5116 = vmatpush1.msra.mxu0 0.0
      %5117 = vmatprep.subr.mxu0 0.0
      %5118 = vmatpush1.msra.mxu0 0.0
      %5119 = vmatprep.subr.mxu0 0.0
      %5120 = vmatpush1.msra.mxu0 0.0
      %5121 = vmatprep.mubr.f32.mxu0 0.0
      %5122 = vmatmul.mubr.f32.gmra.mrb[0].mxu0 %v5049
      %v5123 = vpop.f32.mrb[0].mxu0
      %v5124 = vadd.f32 0.0, %v5123
      %v5125 = vpop.f32.mrb[0].mxu0
      %v5126 = vadd.f32 0.0, %v5125
      %5127 = vmatprep.mubr.f32.mxu0 0.0
      %5128 = vmatmul.mubr.f32.gmra.mrb[0].mxu0 %v5052
      %v5129 = vpop.f32.mrb[0].mxu0
      %v5130 = vadd.f32 0.0, %v5129
      %v5131 = vpop.f32.mrb[0].mxu0
      %v5132 = vadd.f32 0.0, %v5131
      %5133 = vmatprep.mubr.f32.mxu0 0.0
      %5134 = vmatmul.mubr.f32.gmra.mrb[0].mxu0 %v5055
      %v5135 = vpop.f32.mrb[0].mxu0
      %v5136 = vadd.f32 0.0, %v5135
      %v5137 = vpop.f32.mrb[0].mxu0
      %v5138 = vadd.f32 0.0, %v5137
      %5139 = vdwg.mxu0
      %v5140 = vadd.f32 %v4082, %v5124
      %v5141 = vadd.f32 %v4083, %v5126
      %v5142 = vadd.f32 %v4084, %v5130
      %v5143 = vadd.f32 %v4085, %v5132
      %v5144 = vadd.f32 %v4086, %v5136
      %v5145 = vadd.f32 %v4087, %v5138
      %s5146 = scalar_lea.vmem %s8, 48
      %v5147 = vld [vmem:[%s5146] sm:$0xf]
      %v5148 = vld [vmem:[%s5146 + $0x4] sm:$0xf]
      %v5149 = vld [vmem:[%s5146 + $0x8] sm:$0xf]
      %v5150 = vld [vmem:[%s12] sm:$0xff]
      %v5151 = vld [vmem:[%s12 + $0x8] sm:$0xff]
      %v5152 = vld [vmem:[%s12 + $0x10] sm:$0xff]
      %5154 = vset.pattern.permute.xlu0 0
      %5155 = vperm.xlu0 %5154, %v5150
      %v5156 = vpop.permute.xlu0 %5155
      %5159 = vset.pattern.permute.xlu0 0
      %5160 = vperm.xlu0 %5159, %v5151
      %v5161 = vpop.permute.xlu0 %5160
      %5164 = vset.pattern.permute.xlu0 0
      %5165 = vperm.xlu0 %5164, %v5152
      %v5166 = vpop.permute.xlu0 %5165
      %v5171 = vunpack.c.l.b16 %v5147
      %v5172 = vunpack.c.l.b16 %v5148
      %v5173 = vunpack.c.l.b16 %v5149
      %v5174 = vpack.c.b16 %v5172, %v5171
      %v5175 = vpack.c.b16 %v5173, %v5173
      %v5177 = vsel %vm1706, %v5174, 0
      %v5180 = vsel %vm1706, %v5175, 0
      %5182 = vmatprep.subr.bf16.mxu0 %v1673
      %5183 = vmatpush1.bf16.msra.mxu0 %v1672
      %5184 = vmatprep.subr.bf16.mxu0 %v1718
      %5185 = vmatpush1.bf16.msra.mxu0 %v1715
      %5186 = vmatprep.subr.bf16.mxu0 0
      %5187 = vmatpush1.bf16.msra.mxu0 0
      %5188 = vmatprep.subr.bf16.mxu0 0
      %5189 = vmatpush1.bf16.msra.mxu0 0
      %5190 = vmatprep.subr.bf16.mxu0 0
      %5191 = vmatpush1.bf16.msra.mxu0 0
      %5192 = vmatprep.subr.bf16.mxu0 0
      %5193 = vmatpush1.bf16.msra.mxu0 0
      %5194 = vmatprep.subr.bf16.mxu0 0
      %5195 = vmatpush1.bf16.msra.mxu0 0
      %5196 = vmatprep.subr.bf16.mxu0 0
      %5197 = vmatpush1.bf16.msra.mxu0 0
      %5198 = vmatprep.subr.bf16.mxu0 0
      %5199 = vmatpush1.bf16.msra.mxu0 0
      %5200 = vmatprep.subr.bf16.mxu0 0
      %5201 = vmatpush1.bf16.msra.mxu0 0
      %5202 = vmatprep.subr.bf16.mxu0 0
      %5203 = vmatpush1.bf16.msra.mxu0 0
      %5204 = vmatprep.subr.bf16.mxu0 0
      %5205 = vmatpush1.bf16.msra.mxu0 0
      %5206 = vmatprep.subr.bf16.mxu0 0
      %5207 = vmatpush1.bf16.msra.mxu0 0
      %5208 = vmatprep.subr.bf16.mxu0 0
      %5209 = vmatpush1.bf16.msra.mxu0 0
      %5210 = vmatprep.subr.bf16.mxu0 0
      %5211 = vmatpush1.bf16.msra.mxu0 0
      %5212 = vmatprep.subr.bf16.mxu0 0
      %5213 = vmatpush1.bf16.msra.mxu0 0
      %5214 = vmatprep.mubr.bf16.mxu0 0
      %5215 = vmatmul.mubr.bf16.gmra.mrb[0].mxu0 %v5177
      %v5216 = vpop.f32.mrb[0].mxu0
      %v5217 = vadd.f32 %v5156, %v5216
      %v5218 = vpop.f32.mrb[0].mxu0
      %v5219 = vadd.f32 %v5156, %v5218
      %v5220 = vpop.f32.mrb[0].mxu0
      %v5221 = vadd.f32 %v5161, %v5220
      %v5222 = vpop.f32.mrb[0].mxu0
      %v5223 = vadd.f32 %v5161, %v5222
      %5224 = vmatprep.mubr.bf16.mxu0 0
      %5225 = vmatmul.mubr.bf16.gmra.mrb[0].mxu0 %v5180
      %v5226 = vpop.f32.mrb[0].mxu0
      %v5227 = vadd.f32 %v5166, %v5226
      %v5228 = vpop.f32.mrb[0].mxu0
      %v5229 = vadd.f32 %v5166, %v5228
      %v5230 = vpop.f32.mrb[0].mxu0
      %v5231 = vpop.f32.mrb[0].mxu0
      %5232 = vdwg.mxu0
      %v5233 = vmax.f32 %v5217, 0.0
      %v5234 = vmax.f32 %v5219, 0.0
      %v5235 = vmax.f32 %v5221, 0.0
      %v5236 = vmax.f32 %v5223, 0.0
      %v5237 = vmax.f32 %v5227, 0.0
      %v5238 = vmax.f32 %v5229, 0.0
      %s5239 = scalar_lea.vmem %s15, 96
      %v5240 = vld [vmem:[%s5239] sm:$0xff]
      %v5241 = vld [vmem:[%s5239 + $0x8] sm:$0xff]
      %v5242 = vld [vmem:[%s5239 + $0x10] sm:$0xff]
      %v5244 = vsel %vm1706, %v5240, 0
      %v5247 = vsel %vm1706, %v5241, 0
      %v5250 = vsel %vm1706, %v5242, 0
      %5252 = vmatprep.subr.mxu0 %v5234
      %5253 = vmatpush1.msra.mxu0 %v5233
      %5254 = vmatprep.subr.mxu0 %v5236
      %5255 = vmatpush1.msra.mxu0 %v5235
      %5256 = vmatprep.subr.mxu0 %v5238
      %5257 = vmatpush1.msra.mxu0 %v5237
      %5258 = vmatprep.subr.mxu0 0.0
      %5259 = vmatpush1.msra.mxu0 0.0
      %5260 = vmatprep.subr.mxu0 0.0
      %5261 = vmatpush1.msra.mxu0 0.0
      %5262 = vmatprep.subr.mxu0 0.0
      %5263 = vmatpush1.msra.mxu0 0.0
      %5264 = vmatprep.subr.mxu0 0.0
      %5265 = vmatpush1.msra.mxu0 0.0
      %5266 = vmatprep.subr.mxu0 0.0
      %5267 = vmatpush1.msra.mxu0 0.0
      %5268 = vmatprep.subr.mxu0 0.0
      %5269 = vmatpush1.msra.mxu0 0.0
      %5270 = vmatprep.subr.mxu0 0.0
      %5271 = vmatpush1.msra.mxu0 0.0
      %5272 = vmatprep.subr.mxu0 0.0
      %5273 = vmatpush1.msra.mxu0 0.0
      %5274 = vmatprep.subr.mxu0 0.0
      %5275 = vmatpush1.msra.mxu0 0.0
      %5276 = vmatprep.subr.mxu0 0.0
      %5277 = vmatpush1.msra.mxu0 0.0
      %5278 = vmatprep.subr.mxu0 0.0
      %5279 = vmatpush1.msra.mxu0 0.0
      %5280 = vmatprep.subr.mxu0 0.0
      %5281 = vmatpush1.msra.mxu0 0.0
      %5282 = vmatprep.subr.mxu0 0.0
      %5283 = vmatpush1.msra.mxu0 0.0
      %5284 = vmatprep.subr.mxu0 0.0
      %5285 = vmatpush1.msra.mxu0 0.0
      %5286 = vmatprep.subr.mxu0 0.0
      %5287 = vmatpush1.msra.mxu0 0.0
      %5288 = vmatprep.subr.mxu0 0.0
      %5289 = vmatpush1.msra.mxu0 0.0
      %5290 = vmatprep.subr.mxu0 0.0
      %5291 = vmatpush1.msra.mxu0 0.0
      %5292 = vmatprep.subr.mxu0 0.0
      %5293 = vmatpush1.msra.mxu0 0.0
      %5294 = vmatprep.subr.mxu0 0.0
      %5295 = vmatpush1.msra.mxu0 0.0
      %5296 = vmatprep.subr.mxu0 0.0
      %5297 = vmatpush1.msra.mxu0 0.0
      %5298 = vmatprep.subr.mxu0 0.0
      %5299 = vmatpush1.msra.mxu0 0.0
      %5300 = vmatprep.subr.mxu0 0.0
      %5301 = vmatpush1.msra.mxu0 0.0
      %5302 = vmatprep.subr.mxu0 0.0
      %5303 = vmatpush1.msra.mxu0 0.0
      %5304 = vmatprep.subr.mxu0 0.0
      %5305 = vmatpush1.msra.mxu0 0.0
      %5306 = vmatprep.subr.mxu0 0.0
      %5307 = vmatpush1.msra.mxu0 0.0
      %5308 = vmatprep.subr.mxu0 0.0
      %5309 = vmatpush1.msra.mxu0 0.0
      %5310 = vmatprep.subr.mxu0 0.0
      %5311 = vmatpush1.msra.mxu0 0.0
      %5312 = vmatprep.subr.mxu0 0.0
      %5313 = vmatpush1.msra.mxu0 0.0
      %5314 = vmatprep.subr.mxu0 0.0
      %5315 = vmatpush1.msra.mxu0 0.0
      %5316 = vmatprep.mubr.f32.mxu0 0.0
      %5317 = vmatmul.mubr.f32.gmra.mrb[0].mxu0 %v5244
      %v5318 = vpop.f32.mrb[0].mxu0
      %v5319 = vadd.f32 0.0, %v5318
      %v5320 = vpop.f32.mrb[0].mxu0
      %v5321 = vadd.f32 0.0, %v5320
      %5322 = vmatprep.mubr.f32.mxu0 0.0
      %5323 = vmatmul.mubr.f32.gmra.mrb[0].mxu0 %v5247
      %v5324 = vpop.f32.mrb[0].mxu0
      %v5325 = vadd.f32 0.0, %v5324
      %v5326 = vpop.f32.mrb[0].mxu0
      %v5327 = vadd.f32 0.0, %v5326
      %5328 = vmatprep.mubr.f32.mxu0 0.0
      %5329 = vmatmul.mubr.f32.gmra.mrb[0].mxu0 %v5250
      %v5330 = vpop.f32.mrb[0].mxu0
      %v5331 = vadd.f32 0.0, %v5330
      %v5332 = vpop.f32.mrb[0].mxu0
      %v5333 = vadd.f32 0.0, %v5332
      %5334 = vdwg.mxu0
      %v5335 = vadd.f32 %v5140, %v5319
      %v5336 = vadd.f32 %v5141, %v5321
      %v5337 = vadd.f32 %v5142, %v5325
      %v5338 = vadd.f32 %v5143, %v5327
      %v5339 = vadd.f32 %v5144, %v5331
      %v5340 = vadd.f32 %v5145, %v5333
      %v5341 = vld [vmem:[%s13] sm:$0xff]
      %v5342 = vld [vmem:[%s13 + $0x8] sm:$0xff]
      %v5343 = vld [vmem:[%s13 + $0x10] sm:$0xff]
      %v5344 = vld [vmem:[%s14] sm:$0xff]
      %v5345 = vld [vmem:[%s14 + $0x8] sm:$0xff]
      %v5346 = vld [vmem:[%s14 + $0x10] sm:$0xff]
      %v5348 = vsel %vm1706, %v5341, 0
      %v5351 = vsel %vm1706, %v5342, 0
      %v5354 = vsel %vm1706, %v5343, 0
      %5356 = vmatprep.subr.mxu0 0.0
      %5357 = vmatpush1.msra.mxu0 %v1669
      %5358 = vmatprep.subr.mxu0 0.0
      %5359 = vmatpush1.msra.mxu0 %v1670
      %5360 = vmatprep.subr.mxu0 0.0
      %5361 = vmatpush1.msra.mxu0 %v1671
      %5362 = vmatprep.subr.mxu0 0.0
      %5363 = vmatpush1.msra.mxu0 0.0
      %5364 = vmatprep.subr.mxu0 0.0
      %5365 = vmatpush1.msra.mxu0 0.0
      %5366 = vmatprep.subr.mxu0 0.0
      %5367 = vmatpush1.msra.mxu0 0.0
      %5368 = vmatprep.subr.mxu0 0.0
      %5369 = vmatpush1.msra.mxu0 0.0
      %5370 = vmatprep.subr.mxu0 0.0
      %5371 = vmatpush1.msra.mxu0 0.0
      %5372 = vmatprep.subr.mxu0 0.0
      %5373 = vmatpush1.msra.mxu0 0.0
      %5374 = vmatprep.subr.mxu0 0.0
      %5375 = vmatpush1.msra.mxu0 0.0
      %5376 = vmatprep.subr.mxu0 0.0
      %5377 = vmatpush1.msra.mxu0 0.0
      %5378 = vmatprep.subr.mxu0 0.0
      %5379 = vmatpush1.msra.mxu0 0.0
      %5380 = vmatprep.subr.mxu0 0.0
      %5381 = vmatpush1.msra.mxu0 0.0
      %5382 = vmatprep.subr.mxu0 0.0
      %5383 = vmatpush1.msra.mxu0 0.0
      %5384 = vmatprep.subr.mxu0 0.0
      %5385 = vmatpush1.msra.mxu0 0.0
      %5386 = vmatprep.subr.mxu0 0.0
      %5387 = vmatpush1.msra.mxu0 0.0
      %5388 = vmatprep.subr.mxu0 0.0
      %5389 = vmatpush1.msra.mxu0 0.0
      %5390 = vmatprep.subr.mxu0 0.0
      %5391 = vmatpush1.msra.mxu0 0.0
      %5392 = vmatprep.subr.mxu0 0.0
      %5393 = vmatpush1.msra.mxu0 0.0
      %5394 = vmatprep.subr.mxu0 0.0
      %5395 = vmatpush1.msra.mxu0 0.0
      %5396 = vmatprep.subr.mxu0 0.0
      %5397 = vmatpush1.msra.mxu0 0.0
      %5398 = vmatprep.subr.mxu0 0.0
      %5399 = vmatpush1.msra.mxu0 0.0
      %5400 = vmatprep.subr.mxu0 0.0
      %5401 = vmatpush1.msra.mxu0 0.0
      %5402 = vmatprep.subr.mxu0 0.0
      %5403 = vmatpush1.msra.mxu0 0.0
      %5404 = vmatprep.subr.mxu0 0.0
      %5405 = vmatpush1.msra.mxu0 0.0
      %5406 = vmatprep.subr.mxu0 0.0
      %5407 = vmatpush1.msra.mxu0 0.0
      %5408 = vmatprep.subr.mxu0 0.0
      %5409 = vmatpush1.msra.mxu0 0.0
      %5410 = vmatprep.subr.mxu0 0.0
      %5411 = vmatpush1.msra.mxu0 0.0
      %5412 = vmatprep.subr.mxu0 0.0
      %5413 = vmatpush1.msra.mxu0 0.0
      %5414 = vmatprep.subr.mxu0 0.0
      %5415 = vmatpush1.msra.mxu0 0.0
      %5416 = vmatprep.subr.mxu0 0.0
      %5417 = vmatpush1.msra.mxu0 0.0
      %5418 = vmatprep.subr.mxu0 0.0
      %5419 = vmatpush1.msra.mxu0 0.0
      %5420 = vmatprep.mubr.f32.mxu0 0.0
      %5421 = vmatmul.mubr.f32.gmra.mrb[0].mxu0 %v5348
      %v5422 = vpop.f32.mrb[0].mxu0
      %v5423 = vadd.f32 %v5344, %v5422
      %v5424 = vpop.f32.mrb[0].mxu0
      %5425 = vmatprep.mubr.f32.mxu0 0.0
      %5426 = vmatmul.mubr.f32.gmra.mrb[0].mxu0 %v5351
      %v5427 = vpop.f32.mrb[0].mxu0
      %v5428 = vadd.f32 %v5345, %v5427
      %v5429 = vpop.f32.mrb[0].mxu0
      %5430 = vmatprep.mubr.f32.mxu0 0.0
      %5431 = vmatmul.mubr.f32.gmra.mrb[0].mxu0 %v5354
      %v5432 = vpop.f32.mrb[0].mxu0
      %v5433 = vadd.f32 %v5346, %v5432
      %v5434 = vpop.f32.mrb[0].mxu0
      %5435 = vdwg.mxu0
      %v5436 = vmax.f32 %v5423, 0.0
      %v5437 = vmax.f32 %v5428, 0.0
      %v5438 = vmax.f32 %v5433, 0.0
      %v5439 = vld [vmem:[%s16] sm:$0xff]
      %v5440 = vld [vmem:[%s16 + $0x8] sm:$0xff]
      %v5441 = vld [vmem:[%s16 + $0x10] sm:$0xff]
      %v5443 = vsel %vm1706, %v5439, 0
      %v5446 = vsel %vm1706, %v5440, 0
      %v5449 = vsel %vm1706, %v5441, 0
      %5451 = vmatprep.subr.mxu0 0.0
      %5452 = vmatpush1.msra.mxu0 %v5436
      %5453 = vmatprep.subr.mxu0 0.0
      %5454 = vmatpush1.msra.mxu0 %v5437
      %5455 = vmatprep.subr.mxu0 0.0
      %5456 = vmatpush1.msra.mxu0 %v5438
      %5457 = vmatprep.subr.mxu0 0.0
      %5458 = vmatpush1.msra.mxu0 0.0
      %5459 = vmatprep.subr.mxu0 0.0
      %5460 = vmatpush1.msra.mxu0 0.0
      %5461 = vmatprep.subr.mxu0 0.0
      %5462 = vmatpush1.msra.mxu0 0.0
      %5463 = vmatprep.subr.mxu0 0.0
      %5464 = vmatpush1.msra.mxu0 0.0
      %5465 = vmatprep.subr.mxu0 0.0
      %5466 = vmatpush1.msra.mxu0 0.0
      %5467 = vmatprep.subr.mxu0 0.0
      %5468 = vmatpush1.msra.mxu0 0.0
      %5469 = vmatprep.subr.mxu0 0.0
      %5470 = vmatpush1.msra.mxu0 0.0
      %5471 = vmatprep.subr.mxu0 0.0
      %5472 = vmatpush1.msra.mxu0 0.0
      %5473 = vmatprep.subr.mxu0 0.0
      %5474 = vmatpush1.msra.mxu0 0.0
      %5475 = vmatprep.subr.mxu0 0.0
      %5476 = vmatpush1.msra.mxu0 0.0
      %5477 = vmatprep.subr.mxu0 0.0
      %5478 = vmatpush1.msra.mxu0 0.0
      %5479 = vmatprep.subr.mxu0 0.0
      %5480 = vmatpush1.msra.mxu0 0.0
      %5481 = vmatprep.subr.mxu0 0.0
      %5482 = vmatpush1.msra.mxu0 0.0
      %5483 = vmatprep.subr.mxu0 0.0
      %5484 = vmatpush1.msra.mxu0 0.0
      %5485 = vmatprep.subr.mxu0 0.0
      %5486 = vmatpush1.msra.mxu0 0.0
      %5487 = vmatprep.subr.mxu0 0.0
      %5488 = vmatpush1.msra.mxu0 0.0
      %5489 = vmatprep.subr.mxu0 0.0
      %5490 = vmatpush1.msra.mxu0 0.0
      %5491 = vmatprep.subr.mxu0 0.0
      %5492 = vmatpush1.msra.mxu0 0.0
      %5493 = vmatprep.subr.mxu0 0.0
      %5494 = vmatpush1.msra.mxu0 0.0
      %5495 = vmatprep.subr.mxu0 0.0
      %5496 = vmatpush1.msra.mxu0 0.0
      %5497 = vmatprep.subr.mxu0 0.0
      %5498 = vmatpush1.msra.mxu0 0.0
      %5499 = vmatprep.subr.mxu0 0.0
      %5500 = vmatpush1.msra.mxu0 0.0
      %5501 = vmatprep.subr.mxu0 0.0
      %5502 = vmatpush1.msra.mxu0 0.0
      %5503 = vmatprep.subr.mxu0 0.0
      %5504 = vmatpush1.msra.mxu0 0.0
      %5505 = vmatprep.subr.mxu0 0.0
      %5506 = vmatpush1.msra.mxu0 0.0
      %5507 = vmatprep.subr.mxu0 0.0
      %5508 = vmatpush1.msra.mxu0 0.0
      %5509 = vmatprep.subr.mxu0 0.0
      %5510 = vmatpush1.msra.mxu0 0.0
      %5511 = vmatprep.subr.mxu0 0.0
      %5512 = vmatpush1.msra.mxu0 0.0
      %5513 = vmatprep.subr.mxu0 0.0
      %5514 = vmatpush1.msra.mxu0 0.0
      %5515 = vmatprep.mubr.f32.mxu0 0.0
      %5516 = vmatmul.mubr.f32.gmra.mrb[0].mxu0 %v5443
      %v5517 = vpop.f32.mrb[0].mxu0
      %v5518 = vadd.f32 0.0, %v5517
      %v5519 = vpop.f32.mrb[0].mxu0
      %5520 = vmatprep.mubr.f32.mxu0 0.0
      %5521 = vmatmul.mubr.f32.gmra.mrb[0].mxu0 %v5446
      %v5522 = vpop.f32.mrb[0].mxu0
      %v5523 = vadd.f32 0.0, %v5522
      %v5524 = vpop.f32.mrb[0].mxu0
      %5525 = vmatprep.mubr.f32.mxu0 0.0
      %5526 = vmatmul.mubr.f32.gmra.mrb[0].mxu0 %v5449
      %v5527 = vpop.f32.mrb[0].mxu0
      %v5528 = vadd.f32 0.0, %v5527
      %v5529 = vpop.f32.mrb[0].mxu0
      %5530 = vdwg.mxu0
      %5532 = vset.pattern.permute.xlu0 0
      %5533 = vperm.xlu0 %5532, %v5518
      %v5534 = vpop.permute.xlu0 %5533
      %5537 = vset.pattern.permute.xlu0 0
      %5538 = vperm.xlu0 %5537, %v5523
      %v5539 = vpop.permute.xlu0 %5538
      %5542 = vset.pattern.permute.xlu0 0
      %5543 = vperm.xlu0 %5542, %v5528
      %v5544 = vpop.permute.xlu0 %5543
      %v5546 = vadd.f32 %v5335, %v5534
      %v5547 = vadd.f32 %v5336, %v5534
      %v5548 = vadd.f32 %v5337, %v5539
      %v5549 = vadd.f32 %v5338, %v5539
      %v5550 = vadd.f32 %v5339, %v5544
      %v5551 = vadd.f32 %v5340, %v5544
      %v5552 = vld [vmem:[%s17] sm:$0xff]
      %v5553 = vld [vmem:[%s17 + $0x8] sm:$0xff]
      %v5554 = vld [vmem:[%s17 + $0x10] sm:$0xff]
      %5556 = vset.pattern.permute.xlu0 0
      %5557 = vperm.xlu0 %5556, %v5552
      %v5558 = vpop.permute.xlu0 %5557
      %5561 = vset.pattern.permute.xlu0 0
      %5562 = vperm.xlu0 %5561, %v5553
      %v5563 = vpop.permute.xlu0 %5562
      %5566 = vset.pattern.permute.xlu0 0
      %5567 = vperm.xlu0 %5566, %v5554
      %v5568 = vpop.permute.xlu0 %5567
      %v5570 = vadd.f32 %v5546, %v5558
      %v5571 = vadd.f32 %v5547, %v5558
      %v5572 = vadd.f32 %v5548, %v5563
      %v5573 = vadd.f32 %v5549, %v5563
      %v5574 = vadd.f32 %v5550, %v5568
      %v5575 = vadd.f32 %v5551, %v5568
      %v5576 = vmax.f32 %v5570, 0.0
      %v5577 = vmax.f32 %v5571, 0.0
      %v5578 = vmax.f32 %v5572, 0.0
      %v5579 = vmax.f32 %v5573, 0.0
      %v5580 = vmax.f32 %v5574, 0.0
      %v5581 = vmax.f32 %v5575, 0.0
      %5582 = vst [vmem:[%s575] sm:$0xff] %v5576
      %5583 = vst [vmem:[%s575 + $0x8] sm:$0xff] %v5577
      %5584 = vst [vmem:[%s575 + $0x10] sm:$0xff] %v5578
      %5585 = vst [vmem:[%s575 + $0x18] sm:$0xff] %v5579
      %5586 = vst [vmem:[%s575 + $0x20] sm:$0xff] %v5580
      %5587 = vst [vmem:[%s575 + $0x28] sm:$0xff] %v5581
      %p5588 = scmp.lt.s32.totalorder %s29, 1
      %s5589 = scalar_select %p5588, %s29, 1
      %s5590 = smul.addr %s5589, 6
      %s5591 = smul.addr %s5590, 8
      %s5592 = scalar_lea.vmem %s18, %s5591
      // Predicated region
      $region93: #{aspp_pallas.1} parent=91 // pred_check
        %p5593 = pneg %p430
      $region94: #{aspp_pallas.1} parent=91 // pred_check_branch
        %5595 = sbr.rel (%p5593) target = $region96
      $region95: #{aspp_pallas.1} parent=91 // pred_region
        _
      $region96: #{aspp_pallas.1} parent=91 // pred_fallthru
        _
    $region92: #{aspp_pallas.1} parent=5 // pred_fallthru
      _
    %p5596 = scmp.le.s32.totalorder 2, %s24
    // Predicated region
    $region97: #{aspp_pallas.1} parent=5 // pred_check
      %p5597 = pneg %p5596
    $region98: #{aspp_pallas.1} parent=5 // pred_check_branch
      %5599 = sbr.rel (%p5597) target = $region100
    $region99: #{aspp_pallas.1} parent=5 // pred_region
      %s5600 = ssub.s32 %s24, 2
      // Predicated region
      $region101: #{aspp_pallas.1} parent=99 // pred_check
        %p5601 = pneg %p436
      $region102: #{aspp_pallas.1} parent=99 // pred_check_branch
        %5603 = sbr.rel (%p5601) target = $region104
      $region103: #{aspp_pallas.1} parent=99 // pred_region
        %p5604 = scmp.lt.s32.totalorder %s30, 1
        %s5605 = scalar_select %p5604, %s30, 1
        %s5606 = smul.addr %s5605, 6
        %s5607 = smul.addr %s5606, 8
        %s5608 = scalar_lea.vmem %s18, %s5607
      $region104: #{aspp_pallas.1} parent=99 // pred_fallthru
        _
    $region100: #{aspp_pallas.1} parent=5 // pred_fallthru
      _
  $region6: #{aspp_pallas.1} parent=0 // loop_footer
    %s28 = sadd.s32 1, %s24
  $region7: #{aspp_pallas.1} parent=0 // loop_footer_branch
    %23 = sbr.rel target = $region3
  $region8: #{aspp_pallas.1} parent=0 // loop_exit
    _

</llo_original>
